<compile_context>
chip_gen: v5e
topology: v5e:2x2
jax: 0.10.0
libtpu: 0.0.40
codegen_flags: <defaults>
</compile_context>

<pallas_src>
import jax
import jax.numpy as jnp
from jax.experimental import pallas as pl
from jax.experimental.pallas import tpu as pltpu

INPUT_DIM = 128
LATENT_DIM = 128
H1 = 512
H2 = 256
LN_EPS = 1e-5
MAX_BATCH_TILE = 256  # multiple of 256 (v6e/v7x MXU) and of 128 (v5e MXU)

# Rows of the packed (26, 512) f32 bias / LayerNorm parameter array.
(ENC_IN_B, ENC_N1_G, ENC_N1_B,
 ENC_R1_B, ENC_R1_G, ENC_R1_BETA,
 ENC_HID_B, ENC_N2_G, ENC_N2_B,
 ENC_R2_B, ENC_R2_G, ENC_R2_BETA,
 ENC_OUT_B,
 DEC_IN_B, DEC_N1_G, DEC_N1_B,
 DEC_R1_B, DEC_R1_G, DEC_R1_BETA,
 DEC_HID_B, DEC_N2_G, DEC_N2_B,
 DEC_R2_B, DEC_R2_G, DEC_R2_BETA,
 DEC_OUT_B) = range(26)
NUM_VEC_ROWS = 26
_LN_GAMMA_ROWS = (ENC_N1_G, ENC_R1_G, ENC_N2_G, ENC_R2_G,
                  DEC_N1_G, DEC_R1_G, DEC_N2_G, DEC_R2_G)


def _round_up(x, m):
    return ((x + m - 1) // m) * m


# -----------------------------------------------------------------------------
# Shared forward math.  `weights` entries and `vec` may be Pallas Refs (kernel)
# or jnp arrays (reference): `w[...]` / `vec[a:b, :w]` work identically on both,
# and in the kernel they keep every VMEM load right next to its single use
# (no big up-front loads -> no vreg pressure).
# -----------------------------------------------------------------------------
def _vae_math(x, eps, t, weights, vec, sigmoid):
    f32 = jnp.float32

    def vrow(row, width):
        return vec[row:row + 1, :width]          # (1, width), static, lane-aligned slice

    def silu(h):
        return h * sigmoid(h)

    def linear(h, w, b_row, width):
        # bf16 operands on the MXU, f32 accumulation; bias add stays f32.
        return jnp.dot(h.astype(jnp.bfloat16), w[...],
                       preferred_element_type=f32) + vrow(b_row, width)

    def layernorm(h, g_row, b_row, width):
        mean = jnp.mean(h, axis=-1, keepdims=True)
        centered = h - mean                      # computed once, reused (VALU saving)
        var = jnp.mean(centered * centered, axis=-1, keepdims=True)
        return (centered * jax.lax.rsqrt(var + LN_EPS) * vrow(g_row, width)
                + vrow(b_row, width))

    def lin_ln_silu(h, w, b_row, g_row, beta_row, width):
        return silu(layernorm(linear(h, w, b_row, width), g_row, beta_row, width))

    def res_block(h, w, b_row, g_row, beta_row, width):
        # x + SiLU(LayerNorm(Linear(x)))
        return h + lin_ln_silu(h, w, b_row, g_row, beta_row, width)

    (w_enc_in, w_enc_r1, w_enc_hid, w_enc_r2, w_enc_out,
     w_dec_in, w_dec_r1, w_dec_hid, w_dec_r2, w_dec_out) = weights

    # ------------------------------- encoder -------------------------------
    h = lin_ln_silu(x, w_enc_in, ENC_IN_B, ENC_N1_G, ENC_N1_B, H1)
    h = res_block(h, w_enc_r1, ENC_R1_B, ENC_R1_G, ENC_R1_BETA, H1)
    h = lin_ln_silu(h, w_enc_hid, ENC_HID_B, ENC_N2_G, ENC_N2_B, H2)
    h = res_block(h, w_enc_r2, ENC_R2_B, ENC_R2_G, ENC_R2_BETA, H2)
    stats = linear(h, w_enc_out, ENC_OUT_B, 2 * LATENT_DIM)   # [B, 256] = mu || logvar
    mu = stats[:, :LATENT_DIM]
    logvar = stats[:, LATENT_DIM:]

    # ------------- reparameterize (training path, eps supplied) -------------
    std = jnp.exp(0.5 * logvar)
    z = mu + eps.astype(f32) * std * t

    # ------------------------------- decoder -------------------------------
    h = lin_ln_silu(z, w_dec_in, DEC_IN_B, DEC_N1_G, DEC_N1_B, H2)
    h = res_block(h, w_dec_r1, DEC_R1_B, DEC_R1_G, DEC_R1_BETA, H2)
    h = lin_ln_silu(h, w_dec_hid, DEC_HID_B, DEC_N2_G, DEC_N2_B, H1)
    h = res_block(h, w_dec_r2, DEC_R2_B, DEC_R2_G, DEC_R2_BETA, H1)
    recon = sigmoid(linear(h, w_dec_out, DEC_OUT_B, INPUT_DIM))
    return recon, stats


def _eup_sigmoid(v):
    # sigmoid(v) == 0.5 * tanh(0.5 * v) + 0.5 : tanh runs on the EUP, no VALU divide.
    return 0.5 * jnp.tanh(0.5 * v) + 0.5


# -----------------------------------------------------------------------------
# Kernel: 14 inputs (temperature, x, eps, packed vectors, 10 weights), 2 outputs.
# -----------------------------------------------------------------------------
def _vae_kernel(temp_ref, x_ref, eps_ref, vec_ref, *refs):
    w_refs = refs[:10]
    recon_ref, stats_ref = refs[10], refs[11]
    recon, stats = _vae_math(
        x_ref[...], eps_ref[...], temp_ref[0, 0], w_refs, vec_ref, _eup_sigmoid)
    recon_ref[...] = recon
    stats_ref[...] = stats


# -----------------------------------------------------------------------------
# Parameter init: kaiming-normal bf16 [in, out] Linear weights (mirrors the
# PyTorch _init_weights), zero biases, unit-gamma / zero-beta LayerNorms,
# with all (1, feat) vectors packed into one (26, 512) f32 array.
# -----------------------------------------------------------------------------
def init_params(key):
    layer_dims = (
        (INPUT_DIM, H1),          # encoder_input
        (H1, H1),                 # encoder_res1.linear
        (H1, H2),                 # encoder_hidden
        (H2, H2),                 # encoder_res2.linear
        (H2, 2 * LATENT_DIM),     # encoder_output (mu || logvar head)
        (LATENT_DIM, H2),         # decoder_input
        (H2, H2),                 # decoder_res1.linear
        (H2, H1),                 # decoder_hidden
        (H1, H1),                 # decoder_res2.linear
        (H1, INPUT_DIM),          # decoder_output
    )
    keys = jax.random.split(key, len(layer_dims))
    weights = [
        (jax.random.normal(k, dims, jnp.float32) * jnp.sqrt(2.0 / dims[0])
         ).astype(jnp.bfloat16)
        for k, dims in zip(keys, layer_dims)
    ]
    vec = jnp.zeros((NUM_VEC_ROWS, H1), jnp.float32)
    vec = vec.at[jnp.asarray(_LN_GAMMA_ROWS), :].set(1.0)   # LayerNorm gammas
    return {"weights": weights, "vec": vec}


# -----------------------------------------------------------------------------
# Wrapper: padding-aware batch tiling, resident weights, SMEM temperature scalar.
# -----------------------------------------------------------------------------
def _choose_tiling(batch):
    """>=2 balanced tiles whenever there is enough work (v7x has two TensorCores);
    tile = round_up(ceil(batch / n_tiles), 8) so padded rows are minimal."""
    if batch <= 16:
        n_tiles = 1
    else:
        n_tiles = max(2, pl.cdiv(batch, MAX_BATCH_TILE))
        if n_tiles % 2:
            n_tiles += 1          # keep the tile count even so both v7x cores stay busy
    tile = _round_up(pl.cdiv(batch, n_tiles), 8)
    return tile, n_tiles


@jax.jit
def vae_forward(x, eps, params, temperature=1.0):
    """recon_x, mu, logvar = VAEModel.forward(x, temperature), training-mode
    reparameterization with the noise `eps` supplied (stand-in for torch.randn_like)."""
    batch = x.shape[0]
    tb, n_tiles = _choose_tiling(batch)
    padded = tb * n_tiles

    # x / eps are consumed in bf16 (MXU operand / noise) -> half the per-tile input DMA.
    x_bf = x.astype(jnp.bfloat16)
    eps_bf = eps.astype(jnp.bfloat16)
    if padded != batch:
        pad = padded - batch
        x_bf = jnp.pad(x_bf, ((0, pad), (0, 0)))
        eps_bf = jnp.pad(eps_bf, ((0, pad), (0, 0)))

    temp = jnp.asarray(temperature, jnp.float32).reshape(1, 1)
    weights = params["weights"]
    vec = params["vec"]

    def tile_spec(feat):
        return pl.BlockSpec((tb, feat), lambda i: (i, 0))

    def resident_spec(arr):
        # Whole array, same block every grid step -> DMA'd once, stays VMEM-resident.
        return pl.BlockSpec(arr.shape, lambda i: (0, 0))

    in_specs = (
        [pl.BlockSpec(memory_space=pltpu.MemorySpace.SMEM)]     # temperature scalar
        + [tile_spec(INPUT_DIM), tile_spec(LATENT_DIM)]         # x, eps (pipelined tiles)
        + [resident_spec(vec)]                                  # packed bias / LN vectors
        + [resident_spec(w) for w in weights]                   # 10 bf16 weight matrices
    )
    out_specs = (
        tile_spec(INPUT_DIM),                                   # recon
        tile_spec(2 * LATENT_DIM),                              # mu || logvar
    )
    out_shapes = (
        jax.ShapeDtypeStruct((padded, INPUT_DIM), jnp.float32),
        jax.ShapeDtypeStruct((padded, 2 * LATENT_DIM), jnp.float32),
    )

    recon, stats = pl.pallas_call(
        _vae_kernel,
        out_shape=out_shapes,
        grid=(n_tiles,),
        in_specs=in_specs,
        out_specs=out_specs,
        compiler_params=pltpu.CompilerParams(
            dimension_semantics=("parallel",),     # shard batch tiles across TCs on v7x
            vmem_limit_bytes=48 * 1024 * 1024,
        ),
    )(temp, x_bf, eps_bf, vec, *weights)

    recon = recon[:batch]
    mu = stats[:batch, :LATENT_DIM]
    logvar = stats[:batch, LATENT_DIM:]
    return recon, mu, logvar


# -----------------------------------------------------------------------------
# Pure-JAX reference with the kernel's precision policy (bf16 matmul inputs,
# f32 accumulation / LayerNorm / exp / sigmoid).
# -----------------------------------------------------------------------------
@jax.jit
def vae_reference(x, eps, params, temperature=1.0):
    recon, stats = _vae_math(
        x.astype(jnp.bfloat16), eps.astype(jnp.bfloat16),
        jnp.float32(temperature), params["weights"], params["vec"], jax.nn.sigmoid)
    return recon, stats[:, :LATENT_DIM], stats[:, LATENT_DIM:]


if __name__ == "__main__":
    key = jax.random.PRNGKey(0)
    k_param, k_x, k_eps = jax.random.split(key, 3)
    params = init_params(k_param)

    TOL = dict(atol=2e-2, rtol=2e-2)   # matched-precision ref; bf16/transcendental slack

    # --- small batch (single 8-row tile) ---
    batch = 4
    x = jax.random.normal(k_x, (batch, INPUT_DIM), jnp.float32)
    eps = jax.random.normal(k_eps, (batch, LATENT_DIM), jnp.float32)
    recon, mu, logvar = vae_forward(x, eps, params, 1.0)
    jax.block_until_ready((recon, mu, logvar))
    r_ref, mu_ref, lv_ref = vae_reference(x, eps, params, 1.0)
    assert recon.shape == (batch, INPUT_DIM)
    assert mu.shape == (batch, LATENT_DIM) and logvar.shape == (batch, LATENT_DIM)
    assert jnp.allclose(recon, r_ref, **TOL)
    assert jnp.allclose(mu, mu_ref, **TOL)
    assert jnp.allclose(logvar, lv_ref, **TOL)

    # --- multi-tile grid + padding path (batch 40 -> 2 tiles of 24 rows), temperature 0.8 ---
    batch2 = 40
    x2 = jax.random.normal(jax.random.fold_in(k_x, 1), (batch2, INPUT_DIM), jnp.float32)
    eps2 = jax.random.normal(jax.random.fold_in(k_eps, 1), (batch2, LATENT_DIM), jnp.float32)
    r2, m2, lv2 = vae_forward(x2, eps2, params, 0.8)
    jax.block_until_ready((r2, m2, lv2))
    r2_ref, m2_ref, lv2_ref = vae_reference(x2, eps2, params, 0.8)
    assert r2.shape == (batch2, INPUT_DIM)
    assert jnp.allclose(r2, r2_ref, **TOL)
    assert jnp.allclose(m2, m2_ref, **TOL)
    assert jnp.allclose(lv2, lv2_ref, **TOL)

    print("KERNEL_OK")
</pallas_src>

<mosaic_0001>
module attributes {stable_mosaic.version = 11 : i64} {
  func.func @_vae_kernel(%arg0: i32, %arg1: memref<1x1xf32, #tpu.memory_space<smem>>, %arg2: memref<8x128xbf16, #tpu.memory_space<vmem>>, %arg3: memref<8x128xbf16, #tpu.memory_space<vmem>>, %arg4: memref<26x512xf32, #tpu.memory_space<vmem>>, %arg5: memref<128x512xbf16, #tpu.memory_space<vmem>>, %arg6: memref<512x512xbf16, #tpu.memory_space<vmem>>, %arg7: memref<512x256xbf16, #tpu.memory_space<vmem>>, %arg8: memref<256x256xbf16, #tpu.memory_space<vmem>>, %arg9: memref<256x256xbf16, #tpu.memory_space<vmem>>, %arg10: memref<128x256xbf16, #tpu.memory_space<vmem>>, %arg11: memref<256x256xbf16, #tpu.memory_space<vmem>>, %arg12: memref<256x512xbf16, #tpu.memory_space<vmem>>, %arg13: memref<512x512xbf16, #tpu.memory_space<vmem>>, %arg14: memref<512x128xbf16, #tpu.memory_space<vmem>>, %arg15: memref<8x128xf32, #tpu.memory_space<vmem>>, %arg16: memref<8x256xf32, #tpu.memory_space<vmem>>) attributes {dimension_semantics = [#tpu.dimension_semantics<parallel>], iteration_bounds = array<i64: 1>, scalar_prefetch = 0 : i64, scratch_operands = 0 : i64, tpu.core_type = #tpu.core_type<tc>, window_params = [{transform_indices = @transform_0, window_bounds = array<i64: 1, 1>}, {transform_indices = @transform_1, window_bounds = array<i64: 8, 128>}, {transform_indices = @transform_2, window_bounds = array<i64: 8, 128>}, {pipeline_mode = #tpu.pipeline_mode<synchronous>, transform_indices = @transform_3, window_bounds = array<i64: 26, 512>}, {pipeline_mode = #tpu.pipeline_mode<synchronous>, transform_indices = @transform_4, window_bounds = array<i64: 128, 512>}, {pipeline_mode = #tpu.pipeline_mode<synchronous>, transform_indices = @transform_5, window_bounds = array<i64: 512, 512>}, {pipeline_mode = #tpu.pipeline_mode<synchronous>, transform_indices = @transform_6, window_bounds = array<i64: 512, 256>}, {pipeline_mode = #tpu.pipeline_mode<synchronous>, transform_indices = @transform_7, window_bounds = array<i64: 256, 256>}, {pipeline_mode = #tpu.pipeline_mode<synchronous>, transform_indices = @transform_8, window_bounds = array<i64: 256, 256>}, {pipeline_mode = #tpu.pipeline_mode<synchronous>, transform_indices = @transform_9, window_bounds = array<i64: 128, 256>}, {pipeline_mode = #tpu.pipeline_mode<synchronous>, transform_indices = @transform_10, window_bounds = array<i64: 256, 256>}, {pipeline_mode = #tpu.pipeline_mode<synchronous>, transform_indices = @transform_11, window_bounds = array<i64: 256, 512>}, {pipeline_mode = #tpu.pipeline_mode<synchronous>, transform_indices = @transform_12, window_bounds = array<i64: 512, 512>}, {pipeline_mode = #tpu.pipeline_mode<synchronous>, transform_indices = @transform_13, window_bounds = array<i64: 512, 128>}, {transform_indices = @transform_14, window_bounds = array<i64: 8, 128>}, {transform_indices = @transform_15, window_bounds = array<i64: 8, 256>}]} {
    %c0 = arith.constant 0 : index
    %c0_0 = arith.constant 0 : index
    %0 = vector.load %arg2[%c0, %c0_0] : memref<8x128xbf16, #tpu.memory_space<vmem>>, vector<8x128xbf16>
    %c0_1 = arith.constant 0 : index
    %c0_2 = arith.constant 0 : index
    %1 = vector.load %arg3[%c0_1, %c0_2] : memref<8x128xbf16, #tpu.memory_space<vmem>>, vector<8x128xbf16>
    %c0_3 = arith.constant 0 : index
    %c0_4 = arith.constant 0 : index
    %2 = memref.load %arg1[%c0_3, %c0_4] : memref<1x1xf32, #tpu.memory_space<smem>>
    %c0_5 = arith.constant 0 : index
    %c0_6 = arith.constant 0 : index
    %3 = vector.load %arg5[%c0_5, %c0_6] : memref<128x512xbf16, #tpu.memory_space<vmem>>, vector<128x512xbf16>
    %cst = arith.constant dense<0.000000e+00> : vector<8x512xf32>
    %4 = tpu.matmul %0, %3, %cst {dimension_numbers = #tpu.dot_dimension_numbers<[1], [0], [0], [1], [0, 0, 1, 1], [], []>} : vector<8x128xbf16>, vector<128x512xbf16>, vector<8x512xf32> -> vector<8x512xf32>
    %c0_7 = arith.constant 0 : index
    %c0_8 = arith.constant 0 : index
    %5 = vector.load %arg4[%c0_7, %c0_8] : memref<26x512xf32, #tpu.memory_space<vmem>>, vector<1x512xf32>
    %6 = vector.broadcast %5 : vector<1x512xf32> to vector<8x512xf32>
    %7 = arith.addf %4, %6 : vector<8x512xf32>
    %cst_9 = arith.constant dense<0.000000e+00> : vector<8xf32>
    %8 = vector.multi_reduction <add>, %7, %cst_9 [1] : vector<8x512xf32> to vector<8xf32>
    %9 = vector.shape_cast %8 : vector<8xf32> to vector<8x1xf32>
    %cst_10 = arith.constant 5.120000e+02 : f32
    %10 = vector.broadcast %cst_10 : f32 to vector<8x1xf32>
    %11 = arith.divf %9, %10 : vector<8x1xf32>
    %12 = vector.broadcast %11 : vector<8x1xf32> to vector<8x512xf32>
    %13 = arith.subf %7, %12 : vector<8x512xf32>
    %14 = arith.mulf %13, %13 : vector<8x512xf32>
    %cst_11 = arith.constant dense<0.000000e+00> : vector<8xf32>
    %15 = vector.multi_reduction <add>, %14, %cst_11 [1] : vector<8x512xf32> to vector<8xf32>
    %16 = vector.shape_cast %15 : vector<8xf32> to vector<8x1xf32>
    %cst_12 = arith.constant 5.120000e+02 : f32
    %17 = vector.broadcast %cst_12 : f32 to vector<8x1xf32>
    %18 = arith.divf %16, %17 : vector<8x1xf32>
    %cst_13 = arith.constant 9.99999974E-6 : f32
    %19 = vector.broadcast %cst_13 : f32 to vector<8x1xf32>
    %20 = arith.addf %18, %19 : vector<8x1xf32>
    %21 = math.rsqrt %20 : vector<8x1xf32>
    %22 = vector.broadcast %21 : vector<8x1xf32> to vector<8x512xf32>
    %23 = arith.mulf %13, %22 : vector<8x512xf32>
    %c1 = arith.constant 1 : index
    %c0_14 = arith.constant 0 : index
    %24 = vector.load %arg4[%c1, %c0_14] : memref<26x512xf32, #tpu.memory_space<vmem>>, vector<1x512xf32>
    %25 = vector.broadcast %24 : vector<1x512xf32> to vector<8x512xf32>
    %26 = arith.mulf %23, %25 : vector<8x512xf32>
    %c2 = arith.constant 2 : index
    %c0_15 = arith.constant 0 : index
    %27 = vector.load %arg4[%c2, %c0_15] : memref<26x512xf32, #tpu.memory_space<vmem>>, vector<1x512xf32>
    %28 = vector.broadcast %27 : vector<1x512xf32> to vector<8x512xf32>
    %29 = arith.addf %26, %28 : vector<8x512xf32>
    %cst_16 = arith.constant 5.000000e-01 : f32
    %30 = vector.broadcast %cst_16 : f32 to vector<8x512xf32>
    %31 = arith.mulf %30, %29 : vector<8x512xf32>
    %32 = math.tanh %31 : vector<8x512xf32>
    %cst_17 = arith.constant 5.000000e-01 : f32
    %33 = vector.broadcast %cst_17 : f32 to vector<8x512xf32>
    %34 = arith.mulf %33, %32 : vector<8x512xf32>
    %cst_18 = arith.constant 5.000000e-01 : f32
    %35 = vector.broadcast %cst_18 : f32 to vector<8x512xf32>
    %36 = arith.addf %34, %35 : vector<8x512xf32>
    %37 = arith.mulf %29, %36 : vector<8x512xf32>
    %38 = arith.truncf %37 : vector<8x512xf32> to vector<8x512xbf16>
    %c0_19 = arith.constant 0 : index
    %c0_20 = arith.constant 0 : index
    %39 = vector.load %arg6[%c0_19, %c0_20] : memref<512x512xbf16, #tpu.memory_space<vmem>>, vector<512x512xbf16>
    %cst_21 = arith.constant dense<0.000000e+00> : vector<8x512xf32>
    %40 = tpu.matmul %38, %39, %cst_21 {dimension_numbers = #tpu.dot_dimension_numbers<[1], [0], [0], [1], [0, 0, 1, 1], [], []>} : vector<8x512xbf16>, vector<512x512xbf16>, vector<8x512xf32> -> vector<8x512xf32>
    %c3 = arith.constant 3 : index
    %c0_22 = arith.constant 0 : index
    %41 = vector.load %arg4[%c3, %c0_22] : memref<26x512xf32, #tpu.memory_space<vmem>>, vector<1x512xf32>
    %42 = vector.broadcast %41 : vector<1x512xf32> to vector<8x512xf32>
    %43 = arith.addf %40, %42 : vector<8x512xf32>
    %cst_23 = arith.constant dense<0.000000e+00> : vector<8xf32>
    %44 = vector.multi_reduction <add>, %43, %cst_23 [1] : vector<8x512xf32> to vector<8xf32>
    %45 = vector.shape_cast %44 : vector<8xf32> to vector<8x1xf32>
    %cst_24 = arith.constant 5.120000e+02 : f32
    %46 = vector.broadcast %cst_24 : f32 to vector<8x1xf32>
    %47 = arith.divf %45, %46 : vector<8x1xf32>
    %48 = vector.broadcast %47 : vector<8x1xf32> to vector<8x512xf32>
    %49 = arith.subf %43, %48 : vector<8x512xf32>
    %50 = arith.mulf %49, %49 : vector<8x512xf32>
    %cst_25 = arith.constant dense<0.000000e+00> : vector<8xf32>
    %51 = vector.multi_reduction <add>, %50, %cst_25 [1] : vector<8x512xf32> to vector<8xf32>
    %52 = vector.shape_cast %51 : vector<8xf32> to vector<8x1xf32>
    %cst_26 = arith.constant 5.120000e+02 : f32
    %53 = vector.broadcast %cst_26 : f32 to vector<8x1xf32>
    %54 = arith.divf %52, %53 : vector<8x1xf32>
    %cst_27 = arith.constant 9.99999974E-6 : f32
    %55 = vector.broadcast %cst_27 : f32 to vector<8x1xf32>
    %56 = arith.addf %54, %55 : vector<8x1xf32>
    %57 = math.rsqrt %56 : vector<8x1xf32>
    %58 = vector.broadcast %57 : vector<8x1xf32> to vector<8x512xf32>
    %59 = arith.mulf %49, %58 : vector<8x512xf32>
    %c4 = arith.constant 4 : index
    %c0_28 = arith.constant 0 : index
    %60 = vector.load %arg4[%c4, %c0_28] : memref<26x512xf32, #tpu.memory_space<vmem>>, vector<1x512xf32>
    %61 = vector.broadcast %60 : vector<1x512xf32> to vector<8x512xf32>
    %62 = arith.mulf %59, %61 : vector<8x512xf32>
    %c5 = arith.constant 5 : index
    %c0_29 = arith.constant 0 : index
    %63 = vector.load %arg4[%c5, %c0_29] : memref<26x512xf32, #tpu.memory_space<vmem>>, vector<1x512xf32>
    %64 = vector.broadcast %63 : vector<1x512xf32> to vector<8x512xf32>
    %65 = arith.addf %62, %64 : vector<8x512xf32>
    %cst_30 = arith.constant 5.000000e-01 : f32
    %66 = vector.broadcast %cst_30 : f32 to vector<8x512xf32>
    %67 = arith.mulf %66, %65 : vector<8x512xf32>
    %68 = math.tanh %67 : vector<8x512xf32>
    %cst_31 = arith.constant 5.000000e-01 : f32
    %69 = vector.broadcast %cst_31 : f32 to vector<8x512xf32>
    %70 = arith.mulf %69, %68 : vector<8x512xf32>
    %cst_32 = arith.constant 5.000000e-01 : f32
    %71 = vector.broadcast %cst_32 : f32 to vector<8x512xf32>
    %72 = arith.addf %70, %71 : vector<8x512xf32>
    %73 = arith.mulf %65, %72 : vector<8x512xf32>
    %74 = arith.addf %37, %73 : vector<8x512xf32>
    %75 = arith.truncf %74 : vector<8x512xf32> to vector<8x512xbf16>
    %c0_33 = arith.constant 0 : index
    %c0_34 = arith.constant 0 : index
    %76 = vector.load %arg7[%c0_33, %c0_34] : memref<512x256xbf16, #tpu.memory_space<vmem>>, vector<512x256xbf16>
    %cst_35 = arith.constant dense<0.000000e+00> : vector<8x256xf32>
    %77 = tpu.matmul %75, %76, %cst_35 {dimension_numbers = #tpu.dot_dimension_numbers<[1], [0], [0], [1], [0, 0, 1, 1], [], []>} : vector<8x512xbf16>, vector<512x256xbf16>, vector<8x256xf32> -> vector<8x256xf32>
    %c6 = arith.constant 6 : index
    %c0_36 = arith.constant 0 : index
    %78 = vector.load %arg4[%c6, %c0_36] : memref<26x512xf32, #tpu.memory_space<vmem>>, vector<1x256xf32>
    %79 = vector.broadcast %78 : vector<1x256xf32> to vector<8x256xf32>
    %80 = arith.addf %77, %79 : vector<8x256xf32>
    %cst_37 = arith.constant dense<0.000000e+00> : vector<8xf32>
    %81 = vector.multi_reduction <add>, %80, %cst_37 [1] : vector<8x256xf32> to vector<8xf32>
    %82 = vector.shape_cast %81 : vector<8xf32> to vector<8x1xf32>
    %cst_38 = arith.constant 2.560000e+02 : f32
    %83 = vector.broadcast %cst_38 : f32 to vector<8x1xf32>
    %84 = arith.divf %82, %83 : vector<8x1xf32>
    %85 = vector.broadcast %84 : vector<8x1xf32> to vector<8x256xf32>
    %86 = arith.subf %80, %85 : vector<8x256xf32>
    %87 = arith.mulf %86, %86 : vector<8x256xf32>
    %cst_39 = arith.constant dense<0.000000e+00> : vector<8xf32>
    %88 = vector.multi_reduction <add>, %87, %cst_39 [1] : vector<8x256xf32> to vector<8xf32>
    %89 = vector.shape_cast %88 : vector<8xf32> to vector<8x1xf32>
    %cst_40 = arith.constant 2.560000e+02 : f32
    %90 = vector.broadcast %cst_40 : f32 to vector<8x1xf32>
    %91 = arith.divf %89, %90 : vector<8x1xf32>
    %cst_41 = arith.constant 9.99999974E-6 : f32
    %92 = vector.broadcast %cst_41 : f32 to vector<8x1xf32>
    %93 = arith.addf %91, %92 : vector<8x1xf32>
    %94 = math.rsqrt %93 : vector<8x1xf32>
    %95 = vector.broadcast %94 : vector<8x1xf32> to vector<8x256xf32>
    %96 = arith.mulf %86, %95 : vector<8x256xf32>
    %c7 = arith.constant 7 : index
    %c0_42 = arith.constant 0 : index
    %97 = vector.load %arg4[%c7, %c0_42] : memref<26x512xf32, #tpu.memory_space<vmem>>, vector<1x256xf32>
    %98 = vector.broadcast %97 : vector<1x256xf32> to vector<8x256xf32>
    %99 = arith.mulf %96, %98 : vector<8x256xf32>
    %c8 = arith.constant 8 : index
    %c0_43 = arith.constant 0 : index
    %100 = vector.load %arg4[%c8, %c0_43] : memref<26x512xf32, #tpu.memory_space<vmem>>, vector<1x256xf32>
    %101 = vector.broadcast %100 : vector<1x256xf32> to vector<8x256xf32>
    %102 = arith.addf %99, %101 : vector<8x256xf32>
    %cst_44 = arith.constant 5.000000e-01 : f32
    %103 = vector.broadcast %cst_44 : f32 to vector<8x256xf32>
    %104 = arith.mulf %103, %102 : vector<8x256xf32>
    %105 = math.tanh %104 : vector<8x256xf32>
    %cst_45 = arith.constant 5.000000e-01 : f32
    %106 = vector.broadcast %cst_45 : f32 to vector<8x256xf32>
    %107 = arith.mulf %106, %105 : vector<8x256xf32>
    %cst_46 = arith.constant 5.000000e-01 : f32
    %108 = vector.broadcast %cst_46 : f32 to vector<8x256xf32>
    %109 = arith.addf %107, %108 : vector<8x256xf32>
    %110 = arith.mulf %102, %109 : vector<8x256xf32>
    %111 = arith.truncf %110 : vector<8x256xf32> to vector<8x256xbf16>
    %c0_47 = arith.constant 0 : index
    %c0_48 = arith.constant 0 : index
    %112 = vector.load %arg8[%c0_47, %c0_48] : memref<256x256xbf16, #tpu.memory_space<vmem>>, vector<256x256xbf16>
    %cst_49 = arith.constant dense<0.000000e+00> : vector<8x256xf32>
    %113 = tpu.matmul %111, %112, %cst_49 {dimension_numbers = #tpu.dot_dimension_numbers<[1], [0], [0], [1], [0, 0, 1, 1], [], []>} : vector<8x256xbf16>, vector<256x256xbf16>, vector<8x256xf32> -> vector<8x256xf32>
    %c9 = arith.constant 9 : index
    %c0_50 = arith.constant 0 : index
    %114 = vector.load %arg4[%c9, %c0_50] : memref<26x512xf32, #tpu.memory_space<vmem>>, vector<1x256xf32>
    %115 = vector.broadcast %114 : vector<1x256xf32> to vector<8x256xf32>
    %116 = arith.addf %113, %115 : vector<8x256xf32>
    %cst_51 = arith.constant dense<0.000000e+00> : vector<8xf32>
    %117 = vector.multi_reduction <add>, %116, %cst_51 [1] : vector<8x256xf32> to vector<8xf32>
    %118 = vector.shape_cast %117 : vector<8xf32> to vector<8x1xf32>
    %cst_52 = arith.constant 2.560000e+02 : f32
    %119 = vector.broadcast %cst_52 : f32 to vector<8x1xf32>
    %120 = arith.divf %118, %119 : vector<8x1xf32>
    %121 = vector.broadcast %120 : vector<8x1xf32> to vector<8x256xf32>
    %122 = arith.subf %116, %121 : vector<8x256xf32>
    %123 = arith.mulf %122, %122 : vector<8x256xf32>
    %cst_53 = arith.constant dense<0.000000e+00> : vector<8xf32>
    %124 = vector.multi_reduction <add>, %123, %cst_53 [1] : vector<8x256xf32> to vector<8xf32>
    %125 = vector.shape_cast %124 : vector<8xf32> to vector<8x1xf32>
    %cst_54 = arith.constant 2.560000e+02 : f32
    %126 = vector.broadcast %cst_54 : f32 to vector<8x1xf32>
    %127 = arith.divf %125, %126 : vector<8x1xf32>
    %cst_55 = arith.constant 9.99999974E-6 : f32
    %128 = vector.broadcast %cst_55 : f32 to vector<8x1xf32>
    %129 = arith.addf %127, %128 : vector<8x1xf32>
    %130 = math.rsqrt %129 : vector<8x1xf32>
    %131 = vector.broadcast %130 : vector<8x1xf32> to vector<8x256xf32>
    %132 = arith.mulf %122, %131 : vector<8x256xf32>
    %c10 = arith.constant 10 : index
    %c0_56 = arith.constant 0 : index
    %133 = vector.load %arg4[%c10, %c0_56] : memref<26x512xf32, #tpu.memory_space<vmem>>, vector<1x256xf32>
    %134 = vector.broadcast %133 : vector<1x256xf32> to vector<8x256xf32>
    %135 = arith.mulf %132, %134 : vector<8x256xf32>
    %c11 = arith.constant 11 : index
    %c0_57 = arith.constant 0 : index
    %136 = vector.load %arg4[%c11, %c0_57] : memref<26x512xf32, #tpu.memory_space<vmem>>, vector<1x256xf32>
    %137 = vector.broadcast %136 : vector<1x256xf32> to vector<8x256xf32>
    %138 = arith.addf %135, %137 : vector<8x256xf32>
    %cst_58 = arith.constant 5.000000e-01 : f32
    %139 = vector.broadcast %cst_58 : f32 to vector<8x256xf32>
    %140 = arith.mulf %139, %138 : vector<8x256xf32>
    %141 = math.tanh %140 : vector<8x256xf32>
    %cst_59 = arith.constant 5.000000e-01 : f32
    %142 = vector.broadcast %cst_59 : f32 to vector<8x256xf32>
    %143 = arith.mulf %142, %141 : vector<8x256xf32>
    %cst_60 = arith.constant 5.000000e-01 : f32
    %144 = vector.broadcast %cst_60 : f32 to vector<8x256xf32>
    %145 = arith.addf %143, %144 : vector<8x256xf32>
    %146 = arith.mulf %138, %145 : vector<8x256xf32>
    %147 = arith.addf %110, %146 : vector<8x256xf32>
    %148 = arith.truncf %147 : vector<8x256xf32> to vector<8x256xbf16>
    %c0_61 = arith.constant 0 : index
    %c0_62 = arith.constant 0 : index
    %149 = vector.load %arg9[%c0_61, %c0_62] : memref<256x256xbf16, #tpu.memory_space<vmem>>, vector<256x256xbf16>
    %cst_63 = arith.constant dense<0.000000e+00> : vector<8x256xf32>
    %150 = tpu.matmul %148, %149, %cst_63 {dimension_numbers = #tpu.dot_dimension_numbers<[1], [0], [0], [1], [0, 0, 1, 1], [], []>} : vector<8x256xbf16>, vector<256x256xbf16>, vector<8x256xf32> -> vector<8x256xf32>
    %c12 = arith.constant 12 : index
    %c0_64 = arith.constant 0 : index
    %151 = vector.load %arg4[%c12, %c0_64] : memref<26x512xf32, #tpu.memory_space<vmem>>, vector<1x256xf32>
    %152 = vector.broadcast %151 : vector<1x256xf32> to vector<8x256xf32>
    %153 = arith.addf %150, %152 : vector<8x256xf32>
    %154 = vector.extract_strided_slice %153 {offsets = [0, 0], sizes = [8, 128], strides = [1, 1]} : vector<8x256xf32> to vector<8x128xf32>
    %155 = vector.extract_strided_slice %153 {offsets = [0, 128], sizes = [8, 128], strides = [1, 1]} : vector<8x256xf32> to vector<8x128xf32>
    %cst_65 = arith.constant 5.000000e-01 : f32
    %156 = vector.broadcast %cst_65 : f32 to vector<8x128xf32>
    %157 = arith.mulf %156, %155 : vector<8x128xf32>
    %158 = math.exp %157 : vector<8x128xf32>
    %159 = arith.extf %1 : vector<8x128xbf16> to vector<8x128xf32>
    %160 = arith.mulf %159, %158 : vector<8x128xf32>
    %161 = vector.broadcast %2 : f32 to vector<8x128xf32>
    %162 = arith.mulf %160, %161 : vector<8x128xf32>
    %163 = arith.addf %154, %162 : vector<8x128xf32>
    %164 = arith.truncf %163 : vector<8x128xf32> to vector<8x128xbf16>
    %c0_66 = arith.constant 0 : index
    %c0_67 = arith.constant 0 : index
    %165 = vector.load %arg10[%c0_66, %c0_67] : memref<128x256xbf16, #tpu.memory_space<vmem>>, vector<128x256xbf16>
    %cst_68 = arith.constant dense<0.000000e+00> : vector<8x256xf32>
    %166 = tpu.matmul %164, %165, %cst_68 {dimension_numbers = #tpu.dot_dimension_numbers<[1], [0], [0], [1], [0, 0, 1, 1], [], []>} : vector<8x128xbf16>, vector<128x256xbf16>, vector<8x256xf32> -> vector<8x256xf32>
    %c13 = arith.constant 13 : index
    %c0_69 = arith.constant 0 : index
    %167 = vector.load %arg4[%c13, %c0_69] : memref<26x512xf32, #tpu.memory_space<vmem>>, vector<1x256xf32>
    %168 = vector.broadcast %167 : vector<1x256xf32> to vector<8x256xf32>
    %169 = arith.addf %166, %168 : vector<8x256xf32>
    %cst_70 = arith.constant dense<0.000000e+00> : vector<8xf32>
    %170 = vector.multi_reduction <add>, %169, %cst_70 [1] : vector<8x256xf32> to vector<8xf32>
    %171 = vector.shape_cast %170 : vector<8xf32> to vector<8x1xf32>
    %cst_71 = arith.constant 2.560000e+02 : f32
    %172 = vector.broadcast %cst_71 : f32 to vector<8x1xf32>
    %173 = arith.divf %171, %172 : vector<8x1xf32>
    %174 = vector.broadcast %173 : vector<8x1xf32> to vector<8x256xf32>
    %175 = arith.subf %169, %174 : vector<8x256xf32>
    %176 = arith.mulf %175, %175 : vector<8x256xf32>
    %cst_72 = arith.constant dense<0.000000e+00> : vector<8xf32>
    %177 = vector.multi_reduction <add>, %176, %cst_72 [1] : vector<8x256xf32> to vector<8xf32>
    %178 = vector.shape_cast %177 : vector<8xf32> to vector<8x1xf32>
    %cst_73 = arith.constant 2.560000e+02 : f32
    %179 = vector.broadcast %cst_73 : f32 to vector<8x1xf32>
    %180 = arith.divf %178, %179 : vector<8x1xf32>
    %cst_74 = arith.constant 9.99999974E-6 : f32
    %181 = vector.broadcast %cst_74 : f32 to vector<8x1xf32>
    %182 = arith.addf %180, %181 : vector<8x1xf32>
    %183 = math.rsqrt %182 : vector<8x1xf32>
    %184 = vector.broadcast %183 : vector<8x1xf32> to vector<8x256xf32>
    %185 = arith.mulf %175, %184 : vector<8x256xf32>
    %c14 = arith.constant 14 : index
    %c0_75 = arith.constant 0 : index
    %186 = vector.load %arg4[%c14, %c0_75] : memref<26x512xf32, #tpu.memory_space<vmem>>, vector<1x256xf32>
    %187 = vector.broadcast %186 : vector<1x256xf32> to vector<8x256xf32>
    %188 = arith.mulf %185, %187 : vector<8x256xf32>
    %c15 = arith.constant 15 : index
    %c0_76 = arith.constant 0 : index
    %189 = vector.load %arg4[%c15, %c0_76] : memref<26x512xf32, #tpu.memory_space<vmem>>, vector<1x256xf32>
    %190 = vector.broadcast %189 : vector<1x256xf32> to vector<8x256xf32>
    %191 = arith.addf %188, %190 : vector<8x256xf32>
    %cst_77 = arith.constant 5.000000e-01 : f32
    %192 = vector.broadcast %cst_77 : f32 to vector<8x256xf32>
    %193 = arith.mulf %192, %191 : vector<8x256xf32>
    %194 = math.tanh %193 : vector<8x256xf32>
    %cst_78 = arith.constant 5.000000e-01 : f32
    %195 = vector.broadcast %cst_78 : f32 to vector<8x256xf32>
    %196 = arith.mulf %195, %194 : vector<8x256xf32>
    %cst_79 = arith.constant 5.000000e-01 : f32
    %197 = vector.broadcast %cst_79 : f32 to vector<8x256xf32>
    %198 = arith.addf %196, %197 : vector<8x256xf32>
    %199 = arith.mulf %191, %198 : vector<8x256xf32>
    %200 = arith.truncf %199 : vector<8x256xf32> to vector<8x256xbf16>
    %c0_80 = arith.constant 0 : index
    %c0_81 = arith.constant 0 : index
    %201 = vector.load %arg11[%c0_80, %c0_81] : memref<256x256xbf16, #tpu.memory_space<vmem>>, vector<256x256xbf16>
    %cst_82 = arith.constant dense<0.000000e+00> : vector<8x256xf32>
    %202 = tpu.matmul %200, %201, %cst_82 {dimension_numbers = #tpu.dot_dimension_numbers<[1], [0], [0], [1], [0, 0, 1, 1], [], []>} : vector<8x256xbf16>, vector<256x256xbf16>, vector<8x256xf32> -> vector<8x256xf32>
    %c16 = arith.constant 16 : index
    %c0_83 = arith.constant 0 : index
    %203 = vector.load %arg4[%c16, %c0_83] : memref<26x512xf32, #tpu.memory_space<vmem>>, vector<1x256xf32>
    %204 = vector.broadcast %203 : vector<1x256xf32> to vector<8x256xf32>
    %205 = arith.addf %202, %204 : vector<8x256xf32>
    %cst_84 = arith.constant dense<0.000000e+00> : vector<8xf32>
    %206 = vector.multi_reduction <add>, %205, %cst_84 [1] : vector<8x256xf32> to vector<8xf32>
    %207 = vector.shape_cast %206 : vector<8xf32> to vector<8x1xf32>
    %cst_85 = arith.constant 2.560000e+02 : f32
    %208 = vector.broadcast %cst_85 : f32 to vector<8x1xf32>
    %209 = arith.divf %207, %208 : vector<8x1xf32>
    %210 = vector.broadcast %209 : vector<8x1xf32> to vector<8x256xf32>
    %211 = arith.subf %205, %210 : vector<8x256xf32>
    %212 = arith.mulf %211, %211 : vector<8x256xf32>
    %cst_86 = arith.constant dense<0.000000e+00> : vector<8xf32>
    %213 = vector.multi_reduction <add>, %212, %cst_86 [1] : vector<8x256xf32> to vector<8xf32>
    %214 = vector.shape_cast %213 : vector<8xf32> to vector<8x1xf32>
    %cst_87 = arith.constant 2.560000e+02 : f32
    %215 = vector.broadcast %cst_87 : f32 to vector<8x1xf32>
    %216 = arith.divf %214, %215 : vector<8x1xf32>
    %cst_88 = arith.constant 9.99999974E-6 : f32
    %217 = vector.broadcast %cst_88 : f32 to vector<8x1xf32>
    %218 = arith.addf %216, %217 : vector<8x1xf32>
    %219 = math.rsqrt %218 : vector<8x1xf32>
    %220 = vector.broadcast %219 : vector<8x1xf32> to vector<8x256xf32>
    %221 = arith.mulf %211, %220 : vector<8x256xf32>
    %c17 = arith.constant 17 : index
    %c0_89 = arith.constant 0 : index
    %222 = vector.load %arg4[%c17, %c0_89] : memref<26x512xf32, #tpu.memory_space<vmem>>, vector<1x256xf32>
    %223 = vector.broadcast %222 : vector<1x256xf32> to vector<8x256xf32>
    %224 = arith.mulf %221, %223 : vector<8x256xf32>
    %c18 = arith.constant 18 : index
    %c0_90 = arith.constant 0 : index
    %225 = vector.load %arg4[%c18, %c0_90] : memref<26x512xf32, #tpu.memory_space<vmem>>, vector<1x256xf32>
    %226 = vector.broadcast %225 : vector<1x256xf32> to vector<8x256xf32>
    %227 = arith.addf %224, %226 : vector<8x256xf32>
    %cst_91 = arith.constant 5.000000e-01 : f32
    %228 = vector.broadcast %cst_91 : f32 to vector<8x256xf32>
    %229 = arith.mulf %228, %227 : vector<8x256xf32>
    %230 = math.tanh %229 : vector<8x256xf32>
    %cst_92 = arith.constant 5.000000e-01 : f32
    %231 = vector.broadcast %cst_92 : f32 to vector<8x256xf32>
    %232 = arith.mulf %231, %230 : vector<8x256xf32>
    %cst_93 = arith.constant 5.000000e-01 : f32
    %233 = vector.broadcast %cst_93 : f32 to vector<8x256xf32>
    %234 = arith.addf %232, %233 : vector<8x256xf32>
    %235 = arith.mulf %227, %234 : vector<8x256xf32>
    %236 = arith.addf %199, %235 : vector<8x256xf32>
    %237 = arith.truncf %236 : vector<8x256xf32> to vector<8x256xbf16>
    %c0_94 = arith.constant 0 : index
    %c0_95 = arith.constant 0 : index
    %238 = vector.load %arg12[%c0_94, %c0_95] : memref<256x512xbf16, #tpu.memory_space<vmem>>, vector<256x512xbf16>
    %cst_96 = arith.constant dense<0.000000e+00> : vector<8x512xf32>
    %239 = tpu.matmul %237, %238, %cst_96 {dimension_numbers = #tpu.dot_dimension_numbers<[1], [0], [0], [1], [0, 0, 1, 1], [], []>} : vector<8x256xbf16>, vector<256x512xbf16>, vector<8x512xf32> -> vector<8x512xf32>
    %c19 = arith.constant 19 : index
    %c0_97 = arith.constant 0 : index
    %240 = vector.load %arg4[%c19, %c0_97] : memref<26x512xf32, #tpu.memory_space<vmem>>, vector<1x512xf32>
    %241 = vector.broadcast %240 : vector<1x512xf32> to vector<8x512xf32>
    %242 = arith.addf %239, %241 : vector<8x512xf32>
    %cst_98 = arith.constant dense<0.000000e+00> : vector<8xf32>
    %243 = vector.multi_reduction <add>, %242, %cst_98 [1] : vector<8x512xf32> to vector<8xf32>
    %244 = vector.shape_cast %243 : vector<8xf32> to vector<8x1xf32>
    %cst_99 = arith.constant 5.120000e+02 : f32
    %245 = vector.broadcast %cst_99 : f32 to vector<8x1xf32>
    %246 = arith.divf %244, %245 : vector<8x1xf32>
    %247 = vector.broadcast %246 : vector<8x1xf32> to vector<8x512xf32>
    %248 = arith.subf %242, %247 : vector<8x512xf32>
    %249 = arith.mulf %248, %248 : vector<8x512xf32>
    %cst_100 = arith.constant dense<0.000000e+00> : vector<8xf32>
    %250 = vector.multi_reduction <add>, %249, %cst_100 [1] : vector<8x512xf32> to vector<8xf32>
    %251 = vector.shape_cast %250 : vector<8xf32> to vector<8x1xf32>
    %cst_101 = arith.constant 5.120000e+02 : f32
    %252 = vector.broadcast %cst_101 : f32 to vector<8x1xf32>
    %253 = arith.divf %251, %252 : vector<8x1xf32>
    %cst_102 = arith.constant 9.99999974E-6 : f32
    %254 = vector.broadcast %cst_102 : f32 to vector<8x1xf32>
    %255 = arith.addf %253, %254 : vector<8x1xf32>
    %256 = math.rsqrt %255 : vector<8x1xf32>
    %257 = vector.broadcast %256 : vector<8x1xf32> to vector<8x512xf32>
    %258 = arith.mulf %248, %257 : vector<8x512xf32>
    %c20 = arith.constant 20 : index
    %c0_103 = arith.constant 0 : index
    %259 = vector.load %arg4[%c20, %c0_103] : memref<26x512xf32, #tpu.memory_space<vmem>>, vector<1x512xf32>
    %260 = vector.broadcast %259 : vector<1x512xf32> to vector<8x512xf32>
    %261 = arith.mulf %258, %260 : vector<8x512xf32>
    %c21 = arith.constant 21 : index
    %c0_104 = arith.constant 0 : index
    %262 = vector.load %arg4[%c21, %c0_104] : memref<26x512xf32, #tpu.memory_space<vmem>>, vector<1x512xf32>
    %263 = vector.broadcast %262 : vector<1x512xf32> to vector<8x512xf32>
    %264 = arith.addf %261, %263 : vector<8x512xf32>
    %cst_105 = arith.constant 5.000000e-01 : f32
    %265 = vector.broadcast %cst_105 : f32 to vector<8x512xf32>
    %266 = arith.mulf %265, %264 : vector<8x512xf32>
    %267 = math.tanh %266 : vector<8x512xf32>
    %cst_106 = arith.constant 5.000000e-01 : f32
    %268 = vector.broadcast %cst_106 : f32 to vector<8x512xf32>
    %269 = arith.mulf %268, %267 : vector<8x512xf32>
    %cst_107 = arith.constant 5.000000e-01 : f32
    %270 = vector.broadcast %cst_107 : f32 to vector<8x512xf32>
    %271 = arith.addf %269, %270 : vector<8x512xf32>
    %272 = arith.mulf %264, %271 : vector<8x512xf32>
    %273 = arith.truncf %272 : vector<8x512xf32> to vector<8x512xbf16>
    %c0_108 = arith.constant 0 : index
    %c0_109 = arith.constant 0 : index
    %274 = vector.load %arg13[%c0_108, %c0_109] : memref<512x512xbf16, #tpu.memory_space<vmem>>, vector<512x512xbf16>
    %cst_110 = arith.constant dense<0.000000e+00> : vector<8x512xf32>
    %275 = tpu.matmul %273, %274, %cst_110 {dimension_numbers = #tpu.dot_dimension_numbers<[1], [0], [0], [1], [0, 0, 1, 1], [], []>} : vector<8x512xbf16>, vector<512x512xbf16>, vector<8x512xf32> -> vector<8x512xf32>
    %c22 = arith.constant 22 : index
    %c0_111 = arith.constant 0 : index
    %276 = vector.load %arg4[%c22, %c0_111] : memref<26x512xf32, #tpu.memory_space<vmem>>, vector<1x512xf32>
    %277 = vector.broadcast %276 : vector<1x512xf32> to vector<8x512xf32>
    %278 = arith.addf %275, %277 : vector<8x512xf32>
    %cst_112 = arith.constant dense<0.000000e+00> : vector<8xf32>
    %279 = vector.multi_reduction <add>, %278, %cst_112 [1] : vector<8x512xf32> to vector<8xf32>
    %280 = vector.shape_cast %279 : vector<8xf32> to vector<8x1xf32>
    %cst_113 = arith.constant 5.120000e+02 : f32
    %281 = vector.broadcast %cst_113 : f32 to vector<8x1xf32>
    %282 = arith.divf %280, %281 : vector<8x1xf32>
    %283 = vector.broadcast %282 : vector<8x1xf32> to vector<8x512xf32>
    %284 = arith.subf %278, %283 : vector<8x512xf32>
    %285 = arith.mulf %284, %284 : vector<8x512xf32>
    %cst_114 = arith.constant dense<0.000000e+00> : vector<8xf32>
    %286 = vector.multi_reduction <add>, %285, %cst_114 [1] : vector<8x512xf32> to vector<8xf32>
    %287 = vector.shape_cast %286 : vector<8xf32> to vector<8x1xf32>
    %cst_115 = arith.constant 5.120000e+02 : f32
    %288 = vector.broadcast %cst_115 : f32 to vector<8x1xf32>
    %289 = arith.divf %287, %288 : vector<8x1xf32>
    %cst_116 = arith.constant 9.99999974E-6 : f32
    %290 = vector.broadcast %cst_116 : f32 to vector<8x1xf32>
    %291 = arith.addf %289, %290 : vector<8x1xf32>
    %292 = math.rsqrt %291 : vector<8x1xf32>
    %293 = vector.broadcast %292 : vector<8x1xf32> to vector<8x512xf32>
    %294 = arith.mulf %284, %293 : vector<8x512xf32>
    %c23 = arith.constant 23 : index
    %c0_117 = arith.constant 0 : index
    %295 = vector.load %arg4[%c23, %c0_117] : memref<26x512xf32, #tpu.memory_space<vmem>>, vector<1x512xf32>
    %296 = vector.broadcast %295 : vector<1x512xf32> to vector<8x512xf32>
    %297 = arith.mulf %294, %296 : vector<8x512xf32>
    %c24 = arith.constant 24 : index
    %c0_118 = arith.constant 0 : index
    %298 = vector.load %arg4[%c24, %c0_118] : memref<26x512xf32, #tpu.memory_space<vmem>>, vector<1x512xf32>
    %299 = vector.broadcast %298 : vector<1x512xf32> to vector<8x512xf32>
    %300 = arith.addf %297, %299 : vector<8x512xf32>
    %cst_119 = arith.constant 5.000000e-01 : f32
    %301 = vector.broadcast %cst_119 : f32 to vector<8x512xf32>
    %302 = arith.mulf %301, %300 : vector<8x512xf32>
    %303 = math.tanh %302 : vector<8x512xf32>
    %cst_120 = arith.constant 5.000000e-01 : f32
    %304 = vector.broadcast %cst_120 : f32 to vector<8x512xf32>
    %305 = arith.mulf %304, %303 : vector<8x512xf32>
    %cst_121 = arith.constant 5.000000e-01 : f32
    %306 = vector.broadcast %cst_121 : f32 to vector<8x512xf32>
    %307 = arith.addf %305, %306 : vector<8x512xf32>
    %308 = arith.mulf %300, %307 : vector<8x512xf32>
    %309 = arith.addf %272, %308 : vector<8x512xf32>
    %310 = arith.truncf %309 : vector<8x512xf32> to vector<8x512xbf16>
    %c0_122 = arith.constant 0 : index
    %c0_123 = arith.constant 0 : index
    %311 = vector.load %arg14[%c0_122, %c0_123] : memref<512x128xbf16, #tpu.memory_space<vmem>>, vector<512x128xbf16>
    %cst_124 = arith.constant dense<0.000000e+00> : vector<8x128xf32>
    %312 = tpu.matmul %310, %311, %cst_124 {dimension_numbers = #tpu.dot_dimension_numbers<[1], [0], [0], [1], [0, 0, 1, 1], [], []>} : vector<8x512xbf16>, vector<512x128xbf16>, vector<8x128xf32> -> vector<8x128xf32>
    %c25 = arith.constant 25 : index
    %c0_125 = arith.constant 0 : index
    %313 = vector.load %arg4[%c25, %c0_125] : memref<26x512xf32, #tpu.memory_space<vmem>>, vector<1x128xf32>
    %314 = vector.broadcast %313 : vector<1x128xf32> to vector<8x128xf32>
    %315 = arith.addf %312, %314 : vector<8x128xf32>
    %cst_126 = arith.constant 5.000000e-01 : f32
    %316 = vector.broadcast %cst_126 : f32 to vector<8x128xf32>
    %317 = arith.mulf %316, %315 : vector<8x128xf32>
    %318 = math.tanh %317 : vector<8x128xf32>
    %cst_127 = arith.constant 5.000000e-01 : f32
    %319 = vector.broadcast %cst_127 : f32 to vector<8x128xf32>
    %320 = arith.mulf %319, %318 : vector<8x128xf32>
    %cst_128 = arith.constant 5.000000e-01 : f32
    %321 = vector.broadcast %cst_128 : f32 to vector<8x128xf32>
    %322 = arith.addf %320, %321 : vector<8x128xf32>
    %c0_129 = arith.constant 0 : index
    %c0_130 = arith.constant 0 : index
    %323 = vector.load %arg15[%c0_129, %c0_130] : memref<8x128xf32, #tpu.memory_space<vmem>>, vector<8x128xf32>
    tpu.vector_store %arg15[%c0_129, %c0_130], %322 {strides = array<i32>} : memref<8x128xf32, #tpu.memory_space<vmem>>, vector<8x128xf32>,
    %c0_131 = arith.constant 0 : index
    %c0_132 = arith.constant 0 : index
    %324 = vector.load %arg16[%c0_131, %c0_132] : memref<8x256xf32, #tpu.memory_space<vmem>>, vector<8x256xf32>
    tpu.vector_store %arg16[%c0_131, %c0_132], %153 {strides = array<i32>} : memref<8x256xf32, #tpu.memory_space<vmem>>, vector<8x256xf32>,
    return
  }
  func.func @transform_0(%arg0: i32) -> (i32, i32) {
    %c0_i32 = arith.constant 0 : i32
    %c0_i32_0 = arith.constant 0 : i32
    %c0_i32_1 = arith.constant 0 : i32
    return %c0_i32, %c0_i32_0 : i32, i32
  }
  func.func @transform_1(%arg0: i32) -> (i32, i32) {
    %c0_i32 = arith.constant 0 : i32
    %c0_i32_0 = arith.constant 0 : i32
    return %arg0, %c0_i32 : i32, i32
  }
  func.func @transform_2(%arg0: i32) -> (i32, i32) {
    %c0_i32 = arith.constant 0 : i32
    %c0_i32_0 = arith.constant 0 : i32
    return %arg0, %c0_i32 : i32, i32
  }
  func.func @transform_3(%arg0: i32) -> (i32, i32) {
    %c0_i32 = arith.constant 0 : i32
    %c0_i32_0 = arith.constant 0 : i32
    %c0_i32_1 = arith.constant 0 : i32
    return %c0_i32, %c0_i32_0 : i32, i32
  }
  func.func @transform_4(%arg0: i32) -> (i32, i32) {
    %c0_i32 = arith.constant 0 : i32
    %c0_i32_0 = arith.constant 0 : i32
    %c0_i32_1 = arith.constant 0 : i32
    return %c0_i32, %c0_i32_0 : i32, i32
  }
  func.func @transform_5(%arg0: i32) -> (i32, i32) {
    %c0_i32 = arith.constant 0 : i32
    %c0_i32_0 = arith.constant 0 : i32
    %c0_i32_1 = arith.constant 0 : i32
    return %c0_i32, %c0_i32_0 : i32, i32
  }
  func.func @transform_6(%arg0: i32) -> (i32, i32) {
    %c0_i32 = arith.constant 0 : i32
    %c0_i32_0 = arith.constant 0 : i32
    %c0_i32_1 = arith.constant 0 : i32
    return %c0_i32, %c0_i32_0 : i32, i32
  }
  func.func @transform_7(%arg0: i32) -> (i32, i32) {
    %c0_i32 = arith.constant 0 : i32
    %c0_i32_0 = arith.constant 0 : i32
    %c0_i32_1 = arith.constant 0 : i32
    return %c0_i32, %c0_i32_0 : i32, i32
  }
  func.func @transform_8(%arg0: i32) -> (i32, i32) {
    %c0_i32 = arith.constant 0 : i32
    %c0_i32_0 = arith.constant 0 : i32
    %c0_i32_1 = arith.constant 0 : i32
    return %c0_i32, %c0_i32_0 : i32, i32
  }
  func.func @transform_9(%arg0: i32) -> (i32, i32) {
    %c0_i32 = arith.constant 0 : i32
    %c0_i32_0 = arith.constant 0 : i32
    %c0_i32_1 = arith.constant 0 : i32
    return %c0_i32, %c0_i32_0 : i32, i32
  }
  func.func @transform_10(%arg0: i32) -> (i32, i32) {
    %c0_i32 = arith.constant 0 : i32
    %c0_i32_0 = arith.constant 0 : i32
    %c0_i32_1 = arith.constant 0 : i32
    return %c0_i32, %c0_i32_0 : i32, i32
  }
  func.func @transform_11(%arg0: i32) -> (i32, i32) {
    %c0_i32 = arith.constant 0 : i32
    %c0_i32_0 = arith.constant 0 : i32
    %c0_i32_1 = arith.constant 0 : i32
    return %c0_i32, %c0_i32_0 : i32, i32
  }
  func.func @transform_12(%arg0: i32) -> (i32, i32) {
    %c0_i32 = arith.constant 0 : i32
    %c0_i32_0 = arith.constant 0 : i32
    %c0_i32_1 = arith.constant 0 : i32
    return %c0_i32, %c0_i32_0 : i32, i32
  }
  func.func @transform_13(%arg0: i32) -> (i32, i32) {
    %c0_i32 = arith.constant 0 : i32
    %c0_i32_0 = arith.constant 0 : i32
    %c0_i32_1 = arith.constant 0 : i32
    return %c0_i32, %c0_i32_0 : i32, i32
  }
  func.func @transform_14(%arg0: i32) -> (i32, i32) {
    %c0_i32 = arith.constant 0 : i32
    %c0_i32_0 = arith.constant 0 : i32
    return %arg0, %c0_i32 : i32, i32
  }
  func.func @transform_15(%arg0: i32) -> (i32, i32) {
    %c0_i32 = arith.constant 0 : i32
    %c0_i32_0 = arith.constant 0 : i32
    return %arg0, %c0_i32 : i32, i32
  }
}

</mosaic_0001>

<llo_original>
// kernel: vae_forward.1
$region0: #{vae_forward.1}
  #allocation0 [shape = 'u32[]', space=smem, size = 0x4, offset = 0x4, fixed_abs, tag = 'smem constant byte address 0x4 - core index']
  #allocation1 [shape = 'u32[72,128]{1,0:T(1,128)}', space=vmem, size = 0x9000, scoped, tag = 'internal scratch']
  #allocation2 [shape = 'f32[1,1]{1,0:T(1,128)S(6)}', space=smem, size = 0x200, scoped, tag = 'scoped memory for vae_forward.1']
  %s0 = inlined_call_operand.<no memory space> [shape: f32[1,1], index: 0, kind: input, shape index: {}]
  %s1 = inlined_call_operand.vmem [shape: bf16[8,128], index: 1, kind: input, shape index: {}]
  %s2 = inlined_call_operand.vmem [shape: bf16[8,128], index: 2, kind: input, shape index: {}]
  %s3 = inlined_call_operand.hbm [shape: f32[26,512], index: 3, kind: input, shape index: {}]
  %s4 = inlined_call_operand.hbm [shape: bf16[128,512], index: 4, kind: input, shape index: {}]
  %s5 = inlined_call_operand.hbm [shape: bf16[512,512], index: 5, kind: input, shape index: {}]
  %s6 = inlined_call_operand.hbm [shape: bf16[512,256], index: 6, kind: input, shape index: {}]
  %s7 = inlined_call_operand.hbm [shape: bf16[256,256], index: 7, kind: input, shape index: {}]
  %s8 = inlined_call_operand.hbm [shape: bf16[256,256], index: 8, kind: input, shape index: {}]
  %s9 = inlined_call_operand.hbm [shape: bf16[128,256], index: 9, kind: input, shape index: {}]
  %s10 = inlined_call_operand.hbm [shape: bf16[256,256], index: 10, kind: input, shape index: {}]
  %s11 = inlined_call_operand.hbm [shape: bf16[256,512], index: 11, kind: input, shape index: {}]
  %s12 = inlined_call_operand.hbm [shape: bf16[512,512], index: 12, kind: input, shape index: {}]
  %s13 = inlined_call_operand.hbm [shape: bf16[512,128], index: 13, kind: input, shape index: {}]
  %s14 = inlined_call_operand.vmem [shape: f32[8,128], index: 14, kind: output, shape index: {0}]
  %s15 = inlined_call_operand.vmem [shape: f32[8,256], index: 15, kind: output, shape index: {1}]
  %16 = xla_tuple %s14, %s15
  %s17 = sld [smem:[#allocation0]]
  $region118: #{vae_forward.1} parent=0
    _
  %s19 = ssub.s32 1, %s17
  %s20 = scalar_select 0, %s19, %s17
  %21 = sst [smem:[#allocation2]] %s0
  $region1: #{vae_forward.1} parent=0
    #allocation3 [shape = 'u8[65536]{0}', space=vmem, size = 0x10000, scoped, tag = 'input window, operand 3, single buffered']
    #allocation4 [shape = 's32[1]{0}', space=sflag, size = 0x4, scoped, tag = 'scoped memory for vae_forward.1']
    #allocation5 [shape = 'u8[131072]{0}', space=vmem, size = 0x20000, scoped, tag = 'input window, operand 4, single buffered']
    #allocation6 [shape = 's32[1]{0}', space=sflag, size = 0x4, scoped, tag = 'scoped memory for vae_forward.1']
    #allocation7 [shape = 'u8[524288]{0}', space=vmem, size = 0x80000, scoped, tag = 'input window, operand 5, single buffered']
    #allocation8 [shape = 'u8[262144]{0}', space=vmem, size = 0x40000, scoped, tag = 'input window, operand 6, single buffered']
    #allocation9 [shape = 's32[1]{0}', space=sflag, size = 0x4, scoped, tag = 'scoped memory for vae_forward.1']
    #allocation10 [shape = 'u8[131072]{0}', space=vmem, size = 0x20000, scoped, tag = 'input window, operand 7, single buffered']
    #allocation11 [shape = 'u8[131072]{0}', space=vmem, size = 0x20000, scoped, tag = 'input window, operand 8, single buffered']
    #allocation12 [shape = 's32[1]{0}', space=sflag, size = 0x4, scoped, tag = 'scoped memory for vae_forward.1']
    #allocation13 [shape = 'u8[65536]{0}', space=vmem, size = 0x10000, scoped, tag = 'input window, operand 9, single buffered']
    #allocation14 [shape = 'u8[131072]{0}', space=vmem, size = 0x20000, scoped, tag = 'input window, operand 10, single buffered']
    #allocation15 [shape = 's32[1]{0}', space=sflag, size = 0x4, scoped, tag = 'scoped memory for vae_forward.1']
    #allocation16 [shape = 'u8[262144]{0}', space=vmem, size = 0x40000, scoped, tag = 'input window, operand 11, single buffered']
    #allocation17 [shape = 'u8[524288]{0}', space=vmem, size = 0x80000, scoped, tag = 'input window, operand 12, single buffered']
    #allocation18 [shape = 's32[1]{0}', space=sflag, size = 0x4, scoped, tag = 'scoped memory for vae_forward.1']
    #allocation19 [shape = 'u8[131072]{0}', space=vmem, size = 0x20000, scoped, tag = 'input window, operand 13, single buffered']
    %22 = vsyncpa [#allocation4], 0
    %23 = vsyncpa [#allocation6], 0
    %24 = vsyncpa [#allocation9], 0
    %25 = vsyncpa [#allocation12], 0
    %26 = vsyncpa [#allocation15], 0
    %27 = vsyncpa [#allocation18], 0
    // Predicated region
    $region2: #{vae_forward.1} parent=1 // pred_check
      _
    $region3: #{vae_forward.1} parent=1 // pred_check_branch
      %29 = sbr.rel (0) target = $region5
    $region4: #{vae_forward.1} parent=1 // pred_region
      _
    $region5: #{vae_forward.1} parent=1 // pred_fallthru
      _
    // Predicated region
    $region6: #{vae_forward.1} parent=1 // pred_check
      _
    $region7: #{vae_forward.1} parent=1 // pred_check_branch
      %31 = sbr.rel (0) target = $region9
    $region8: #{vae_forward.1} parent=1 // pred_region
      _
    $region9: #{vae_forward.1} parent=1 // pred_fallthru
      _
    // Predicated region
    $region10: #{vae_forward.1} parent=1 // pred_check
      _
    $region11: #{vae_forward.1} parent=1 // pred_check_branch
      %33 = sbr.rel (0) target = $region13
    $region12: #{vae_forward.1} parent=1 // pred_region
      _
    $region13: #{vae_forward.1} parent=1 // pred_fallthru
      _
    // Predicated region
    $region14: #{vae_forward.1} parent=1 // pred_check
      _
    $region15: #{vae_forward.1} parent=1 // pred_check_branch
      %35 = sbr.rel (0) target = $region17
    $region16: #{vae_forward.1} parent=1 // pred_region
      %37 = vsyncadd [#allocation4], 0
      %s38 = sshll.u32 %s3, 4
      %s39 = int_to_ptr.hbm [resolvable:$true] %s38
      %s40 = sshll.u32 [#allocation3], 4
      %s41 = int_to_ptr.vmem [resolvable:$true] %s40
      %46 = dma.hbm_to_vmem [thread:$0]  %s39, 2048, %s41, [#allocation4], 512, 512, 32
    $region17: #{vae_forward.1} parent=1 // pred_fallthru
      _
    // Predicated region
    $region18: #{vae_forward.1} parent=1 // pred_check
      _
    $region19: #{vae_forward.1} parent=1 // pred_check_branch
      %48 = sbr.rel (0) target = $region21
    $region20: #{vae_forward.1} parent=1 // pred_region
      %50 = vsyncadd [#allocation6], 0
      %s51 = sshll.u32 %s4, 4
      %s52 = int_to_ptr.hbm [resolvable:$true] %s51
      %s53 = sshll.u32 [#allocation5], 4
      %s54 = int_to_ptr.vmem [resolvable:$true] %s53
      %59 = dma.hbm_to_vmem [thread:$0]  %s52, 4096, %s54, [#allocation6], 256, 256, 16
    $region21: #{vae_forward.1} parent=1 // pred_fallthru
      _
    // Predicated region
    $region22: #{vae_forward.1} parent=1 // pred_check
      _
    $region23: #{vae_forward.1} parent=1 // pred_check_branch
      %61 = sbr.rel (0) target = $region25
    $region24: #{vae_forward.1} parent=1 // pred_region
      %63 = vsyncadd [#allocation6], 0
      %s64 = sshll.u32 %s5, 4
      %s65 = int_to_ptr.hbm [resolvable:$true] %s64
      %s66 = sshll.u32 [#allocation7], 4
      %s67 = int_to_ptr.vmem [resolvable:$true] %s66
      %72 = dma.hbm_to_vmem [thread:$0]  %s65, 16384, %s67, [#allocation6], 256, 256, 16
    $region25: #{vae_forward.1} parent=1 // pred_fallthru
      _
    // Predicated region
    $region26: #{vae_forward.1} parent=1 // pred_check
      _
    $region27: #{vae_forward.1} parent=1 // pred_check_branch
      %74 = sbr.rel (0) target = $region29
    $region28: #{vae_forward.1} parent=1 // pred_region
      %76 = vsyncadd [#allocation9], 0
      %s77 = sshll.u32 %s6, 4
      %s78 = int_to_ptr.hbm [resolvable:$true] %s77
      %s79 = sshll.u32 [#allocation8], 4
      %s80 = int_to_ptr.vmem [resolvable:$true] %s79
      %85 = dma.hbm_to_vmem [thread:$0]  %s78, 8192, %s80, [#allocation9], 128, 128, 8
    $region29: #{vae_forward.1} parent=1 // pred_fallthru
      _
    // Predicated region
    $region30: #{vae_forward.1} parent=1 // pred_check
      _
    $region31: #{vae_forward.1} parent=1 // pred_check_branch
      %87 = sbr.rel (0) target = $region33
    $region32: #{vae_forward.1} parent=1 // pred_region
      %89 = vsyncadd [#allocation9], 0
      %s90 = sshll.u32 %s7, 4
      %s91 = int_to_ptr.hbm [resolvable:$true] %s90
      %s92 = sshll.u32 [#allocation10], 4
      %s93 = int_to_ptr.vmem [resolvable:$true] %s92
      %98 = dma.hbm_to_vmem [thread:$0]  %s91, 4096, %s93, [#allocation9], 128, 128, 8
    $region33: #{vae_forward.1} parent=1 // pred_fallthru
      _
    // Predicated region
    $region34: #{vae_forward.1} parent=1 // pred_check
      _
    $region35: #{vae_forward.1} parent=1 // pred_check_branch
      %100 = sbr.rel (0) target = $region37
    $region36: #{vae_forward.1} parent=1 // pred_region
      %102 = vsyncadd [#allocation12], 0
      %s103 = sshll.u32 %s8, 4
      %s104 = int_to_ptr.hbm [resolvable:$true] %s103
      %s105 = sshll.u32 [#allocation11], 4
      %s106 = int_to_ptr.vmem [resolvable:$true] %s105
      %111 = dma.hbm_to_vmem [thread:$0]  %s104, 4096, %s106, [#allocation12], 128, 128, 8
    $region37: #{vae_forward.1} parent=1 // pred_fallthru
      _
    // Predicated region
    $region38: #{vae_forward.1} parent=1 // pred_check
      _
    $region39: #{vae_forward.1} parent=1 // pred_check_branch
      %113 = sbr.rel (0) target = $region41
    $region40: #{vae_forward.1} parent=1 // pred_region
      %115 = vsyncadd [#allocation12], 0
      %s116 = sshll.u32 %s9, 4
      %s117 = int_to_ptr.hbm [resolvable:$true] %s116
      %s118 = sshll.u32 [#allocation13], 4
      %s119 = int_to_ptr.vmem [resolvable:$true] %s118
      %124 = dma.hbm_to_vmem [thread:$0]  %s117, 2048, %s119, [#allocation12], 128, 128, 8
    $region41: #{vae_forward.1} parent=1 // pred_fallthru
      _
    // Predicated region
    $region42: #{vae_forward.1} parent=1 // pred_check
      _
    $region43: #{vae_forward.1} parent=1 // pred_check_branch
      %126 = sbr.rel (0) target = $region45
    $region44: #{vae_forward.1} parent=1 // pred_region
      %128 = vsyncadd [#allocation15], 0
      %s129 = sshll.u32 %s10, 4
      %s130 = int_to_ptr.hbm [resolvable:$true] %s129
      %s131 = sshll.u32 [#allocation14], 4
      %s132 = int_to_ptr.vmem [resolvable:$true] %s131
      %137 = dma.hbm_to_vmem [thread:$0]  %s130, 4096, %s132, [#allocation15], 128, 128, 8
    $region45: #{vae_forward.1} parent=1 // pred_fallthru
      _
    // Predicated region
    $region46: #{vae_forward.1} parent=1 // pred_check
      _
    $region47: #{vae_forward.1} parent=1 // pred_check_branch
      %139 = sbr.rel (0) target = $region49
    $region48: #{vae_forward.1} parent=1 // pred_region
      %141 = vsyncadd [#allocation15], 0
      %s142 = sshll.u32 %s11, 4
      %s143 = int_to_ptr.hbm [resolvable:$true] %s142
      %s144 = sshll.u32 [#allocation16], 4
      %s145 = int_to_ptr.vmem [resolvable:$true] %s144
      %150 = dma.hbm_to_vmem [thread:$0]  %s143, 8192, %s145, [#allocation15], 256, 256, 16
    $region49: #{vae_forward.1} parent=1 // pred_fallthru
      _
    // Predicated region
    $region50: #{vae_forward.1} parent=1 // pred_check
      _
    $region51: #{vae_forward.1} parent=1 // pred_check_branch
      %152 = sbr.rel (0) target = $region53
    $region52: #{vae_forward.1} parent=1 // pred_region
      %154 = vsyncadd [#allocation18], 0
      %s155 = sshll.u32 %s12, 4
      %s156 = int_to_ptr.hbm [resolvable:$true] %s155
      %s157 = sshll.u32 [#allocation17], 4
      %s158 = int_to_ptr.vmem [resolvable:$true] %s157
      %163 = dma.hbm_to_vmem [thread:$0]  %s156, 16384, %s158, [#allocation18], 256, 256, 16
    $region53: #{vae_forward.1} parent=1 // pred_fallthru
      _
    // Predicated region
    $region54: #{vae_forward.1} parent=1 // pred_check
      _
    $region55: #{vae_forward.1} parent=1 // pred_check_branch
      %165 = sbr.rel (0) target = $region57
    $region56: #{vae_forward.1} parent=1 // pred_region
      %167 = vsyncadd [#allocation18], 0
      %s168 = sshll.u32 %s13, 4
      %s169 = int_to_ptr.hbm [resolvable:$true] %s168
      %s170 = sshll.u32 [#allocation19], 4
      %s171 = int_to_ptr.vmem [resolvable:$true] %s170
      %176 = dma.hbm_to_vmem [thread:$0]  %s169, 4096, %s171, [#allocation18], 64, 64, 4
    $region57: #{vae_forward.1} parent=1 // pred_fallthru
      _
    // Predicated region
    $region58: #{vae_forward.1} parent=1 // pred_check
      _
    $region59: #{vae_forward.1} parent=1 // pred_check_branch
      %178 = sbr.rel (0) target = $region61
    $region60: #{vae_forward.1} parent=1 // pred_region
      %180 = dma.done [#allocation4], 2048
    $region61: #{vae_forward.1} parent=1 // pred_fallthru
      _
    // Predicated region
    $region62: #{vae_forward.1} parent=1 // pred_check
      _
    $region63: #{vae_forward.1} parent=1 // pred_check_branch
      %182 = sbr.rel (0) target = $region65
    $region64: #{vae_forward.1} parent=1 // pred_region
      %184 = dma.done [#allocation6], 4096
    $region65: #{vae_forward.1} parent=1 // pred_fallthru
      _
    // Predicated region
    $region66: #{vae_forward.1} parent=1 // pred_check
      _
    $region67: #{vae_forward.1} parent=1 // pred_check_branch
      %186 = sbr.rel (0) target = $region69
    $region68: #{vae_forward.1} parent=1 // pred_region
      %188 = dma.done [#allocation6], 16384
    $region69: #{vae_forward.1} parent=1 // pred_fallthru
      _
    // Predicated region
    $region70: #{vae_forward.1} parent=1 // pred_check
      _
    $region71: #{vae_forward.1} parent=1 // pred_check_branch
      %190 = sbr.rel (0) target = $region73
    $region72: #{vae_forward.1} parent=1 // pred_region
      %192 = dma.done [#allocation9], 8192
    $region73: #{vae_forward.1} parent=1 // pred_fallthru
      _
    // Predicated region
    $region74: #{vae_forward.1} parent=1 // pred_check
      _
    $region75: #{vae_forward.1} parent=1 // pred_check_branch
      %194 = sbr.rel (0) target = $region77
    $region76: #{vae_forward.1} parent=1 // pred_region
      %196 = dma.done [#allocation9], 4096
    $region77: #{vae_forward.1} parent=1 // pred_fallthru
      _
    // Predicated region
    $region78: #{vae_forward.1} parent=1 // pred_check
      _
    $region79: #{vae_forward.1} parent=1 // pred_check_branch
      %198 = sbr.rel (0) target = $region81
    $region80: #{vae_forward.1} parent=1 // pred_region
      %200 = dma.done [#allocation12], 4096
    $region81: #{vae_forward.1} parent=1 // pred_fallthru
      _
    // Predicated region
    $region82: #{vae_forward.1} parent=1 // pred_check
      _
    $region83: #{vae_forward.1} parent=1 // pred_check_branch
      %202 = sbr.rel (0) target = $region85
    $region84: #{vae_forward.1} parent=1 // pred_region
      %204 = dma.done [#allocation12], 2048
    $region85: #{vae_forward.1} parent=1 // pred_fallthru
      _
    // Predicated region
    $region86: #{vae_forward.1} parent=1 // pred_check
      _
    $region87: #{vae_forward.1} parent=1 // pred_check_branch
      %206 = sbr.rel (0) target = $region89
    $region88: #{vae_forward.1} parent=1 // pred_region
      %208 = dma.done [#allocation15], 4096
    $region89: #{vae_forward.1} parent=1 // pred_fallthru
      _
    // Predicated region
    $region90: #{vae_forward.1} parent=1 // pred_check
      _
    $region91: #{vae_forward.1} parent=1 // pred_check_branch
      %210 = sbr.rel (0) target = $region93
    $region92: #{vae_forward.1} parent=1 // pred_region
      %212 = dma.done [#allocation15], 8192
    $region93: #{vae_forward.1} parent=1 // pred_fallthru
      _
    // Predicated region
    $region94: #{vae_forward.1} parent=1 // pred_check
      _
    $region95: #{vae_forward.1} parent=1 // pred_check_branch
      %214 = sbr.rel (0) target = $region97
    $region96: #{vae_forward.1} parent=1 // pred_region
      %216 = dma.done [#allocation18], 16384
    $region97: #{vae_forward.1} parent=1 // pred_fallthru
      _
    // Predicated region
    $region98: #{vae_forward.1} parent=1 // pred_check
      _
    $region99: #{vae_forward.1} parent=1 // pred_check_branch
      %218 = sbr.rel (0) target = $region101
    $region100: #{vae_forward.1} parent=1 // pred_region
      %220 = dma.done [#allocation18], 4096
    $region101: #{vae_forward.1} parent=1 // pred_fallthru
      _
    %v221 = vld [vmem:[%s1] sm:$0xf]
    %v222 = vld [vmem:[%s2] sm:$0xf]
    %s223 = sld [smem:[#allocation2]]
    %v224 = vld [vmem:[#allocation5] sm:$0xff]
    %v225 = vld [vmem:[#allocation5 + $0x8] sm:$0xff]
    %v226 = vld [vmem:[#allocation5 + $0x10] sm:$0xff]
    %v227 = vld [vmem:[#allocation5 + $0x18] sm:$0xff]
    %v228 = vld [vmem:[#allocation5 + $0x20] sm:$0xff]
    %v229 = vld [vmem:[#allocation5 + $0x28] sm:$0xff]
    %v230 = vld [vmem:[#allocation5 + $0x30] sm:$0xff]
    %v231 = vld [vmem:[#allocation5 + $0x38] sm:$0xff]
    %v232 = vld [vmem:[#allocation5 + $0x40] sm:$0xff]
    %v233 = vld [vmem:[#allocation5 + $0x48] sm:$0xff]
    %v234 = vld [vmem:[#allocation5 + $0x50] sm:$0xff]
    %v235 = vld [vmem:[#allocation5 + $0x58] sm:$0xff]
    %v236 = vld [vmem:[#allocation5 + $0x60] sm:$0xff]
    %v237 = vld [vmem:[#allocation5 + $0x68] sm:$0xff]
    %v238 = vld [vmem:[#allocation5 + $0x70] sm:$0xff]
    %v239 = vld [vmem:[#allocation5 + $0x78] sm:$0xff]
    %v240 = vld [vmem:[#allocation5 + $0x80] sm:$0xff]
    %v241 = vld [vmem:[#allocation5 + $0x88] sm:$0xff]
    %v242 = vld [vmem:[#allocation5 + $0x90] sm:$0xff]
    %v243 = vld [vmem:[#allocation5 + $0x98] sm:$0xff]
    %v244 = vld [vmem:[#allocation5 + $0xa0] sm:$0xff]
    %v245 = vld [vmem:[#allocation5 + $0xa8] sm:$0xff]
    %v246 = vld [vmem:[#allocation5 + $0xb0] sm:$0xff]
    %v247 = vld [vmem:[#allocation5 + $0xb8] sm:$0xff]
    %v248 = vld [vmem:[#allocation5 + $0xc0] sm:$0xff]
    %v249 = vld [vmem:[#allocation5 + $0xc8] sm:$0xff]
    %v250 = vld [vmem:[#allocation5 + $0xd0] sm:$0xff]
    %v251 = vld [vmem:[#allocation5 + $0xd8] sm:$0xff]
    %v252 = vld [vmem:[#allocation5 + $0xe0] sm:$0xff]
    %v253 = vld [vmem:[#allocation5 + $0xe8] sm:$0xff]
    %v254 = vld [vmem:[#allocation5 + $0xf0] sm:$0xff]
    %v255 = vld [vmem:[#allocation5 + $0xf8] sm:$0xff]
    %v256 = vld [vmem:[#allocation3] ss:$8 sm:$0xf]
    %v258 = vperm.slane %v256, 0
    %v259 = vperm.slane %v256, 1
    %v260 = vperm.slane %v256, 2
    %v261 = vperm.slane %v256, 3
    %v298 = vunpack.c.l.b16 %v224
    %v299 = vunpack.c.h.b16 %v224
    %v300 = vunpack.c.l.b16 %v225
    %v301 = vunpack.c.h.b16 %v225
    %v302 = vunpack.c.l.b16 %v226
    %v303 = vunpack.c.h.b16 %v226
    %v304 = vunpack.c.l.b16 %v227
    %v305 = vunpack.c.h.b16 %v227
    %v306 = vunpack.c.l.b16 %v228
    %v307 = vunpack.c.h.b16 %v228
    %v308 = vunpack.c.l.b16 %v229
    %v309 = vunpack.c.h.b16 %v229
    %v310 = vunpack.c.l.b16 %v230
    %v311 = vunpack.c.h.b16 %v230
    %v312 = vunpack.c.l.b16 %v231
    %v313 = vunpack.c.h.b16 %v231
    %v314 = vunpack.c.l.b16 %v232
    %v315 = vunpack.c.h.b16 %v232
    %v316 = vunpack.c.l.b16 %v233
    %v317 = vunpack.c.h.b16 %v233
    %v318 = vunpack.c.l.b16 %v234
    %v319 = vunpack.c.h.b16 %v234
    %v320 = vunpack.c.l.b16 %v235
    %v321 = vunpack.c.h.b16 %v235
    %v322 = vunpack.c.l.b16 %v236
    %v323 = vunpack.c.h.b16 %v236
    %v324 = vunpack.c.l.b16 %v237
    %v325 = vunpack.c.h.b16 %v237
    %v326 = vunpack.c.l.b16 %v238
    %v327 = vunpack.c.h.b16 %v238
    %v328 = vunpack.c.l.b16 %v239
    %v329 = vunpack.c.h.b16 %v239
    %v330 = vunpack.c.l.b16 %v240
    %v331 = vunpack.c.h.b16 %v240
    %v332 = vunpack.c.l.b16 %v241
    %v333 = vunpack.c.h.b16 %v241
    %v334 = vunpack.c.l.b16 %v242
    %v335 = vunpack.c.h.b16 %v242
    %v336 = vunpack.c.l.b16 %v243
    %v337 = vunpack.c.h.b16 %v243
    %v338 = vunpack.c.l.b16 %v244
    %v339 = vunpack.c.h.b16 %v244
    %v340 = vunpack.c.l.b16 %v245
    %v341 = vunpack.c.h.b16 %v245
    %v342 = vunpack.c.l.b16 %v246
    %v343 = vunpack.c.h.b16 %v246
    %v344 = vunpack.c.l.b16 %v247
    %v345 = vunpack.c.h.b16 %v247
    %v346 = vunpack.c.l.b16 %v248
    %v347 = vunpack.c.h.b16 %v248
    %v348 = vunpack.c.l.b16 %v249
    %v349 = vunpack.c.h.b16 %v249
    %v350 = vunpack.c.l.b16 %v250
    %v351 = vunpack.c.h.b16 %v250
    %v352 = vunpack.c.l.b16 %v251
    %v353 = vunpack.c.h.b16 %v251
    %v354 = vunpack.c.l.b16 %v252
    %v355 = vunpack.c.h.b16 %v252
    %v356 = vunpack.c.l.b16 %v253
    %v357 = vunpack.c.h.b16 %v253
    %v358 = vunpack.c.l.b16 %v254
    %v359 = vunpack.c.h.b16 %v254
    %v360 = vunpack.c.l.b16 %v255
    %v361 = vunpack.c.h.b16 %v255
    %v362 = vpack.c.b16 %v302, %v298
    %v363 = vpack.c.b16 %v303, %v299
    %v364 = vpack.c.b16 %v304, %v300
    %v365 = vpack.c.b16 %v305, %v301
    %v366 = vpack.c.b16 %v310, %v306
    %v367 = vpack.c.b16 %v311, %v307
    %v368 = vpack.c.b16 %v312, %v308
    %v369 = vpack.c.b16 %v313, %v309
    %v370 = vpack.c.b16 %v318, %v314
    %v371 = vpack.c.b16 %v319, %v315
    %v372 = vpack.c.b16 %v320, %v316
    %v373 = vpack.c.b16 %v321, %v317
    %v374 = vpack.c.b16 %v326, %v322
    %v375 = vpack.c.b16 %v327, %v323
    %v376 = vpack.c.b16 %v328, %v324
    %v377 = vpack.c.b16 %v329, %v325
    %v378 = vpack.c.b16 %v334, %v330
    %v379 = vpack.c.b16 %v335, %v331
    %v380 = vpack.c.b16 %v336, %v332
    %v381 = vpack.c.b16 %v337, %v333
    %v382 = vpack.c.b16 %v342, %v338
    %v383 = vpack.c.b16 %v343, %v339
    %v384 = vpack.c.b16 %v344, %v340
    %v385 = vpack.c.b16 %v345, %v341
    %v386 = vpack.c.b16 %v350, %v346
    %v387 = vpack.c.b16 %v351, %v347
    %v388 = vpack.c.b16 %v352, %v348
    %v389 = vpack.c.b16 %v353, %v349
    %v390 = vpack.c.b16 %v358, %v354
    %v391 = vpack.c.b16 %v359, %v355
    %v392 = vpack.c.b16 %v360, %v356
    %v393 = vpack.c.b16 %v361, %v357
    %426 = vmatpush.bf16.msra.mxu0 %v390
    %427 = vmatpush.bf16.msra.mxu0 %v386
    %428 = vmatpush.bf16.msra.mxu0 %v382
    %429 = vmatpush.bf16.msra.mxu0 %v378
    %430 = vmatpush.bf16.msra.mxu0 %v374
    %431 = vmatpush.bf16.msra.mxu0 %v370
    %432 = vmatpush.bf16.msra.mxu0 %v366
    %433 = vmatpush.bf16.msra.mxu0 %v362
    %434 = vmatmul.bf16.gmra.mxu0 %v221
    %v435 = vpop.f32.mrf.mxu0
    %v436 = vadd.f32 %v258, %v435
    %v437 = vpop.f32.mrf.mxu0
    %438 = vdwg.mxu0
    %439 = vmatpush.bf16.msra.mxu0 %v391
    %440 = vmatpush.bf16.msra.mxu0 %v387
    %441 = vmatpush.bf16.msra.mxu0 %v383
    %442 = vmatpush.bf16.msra.mxu0 %v379
    %443 = vmatpush.bf16.msra.mxu0 %v375
    %444 = vmatpush.bf16.msra.mxu0 %v371
    %445 = vmatpush.bf16.msra.mxu0 %v367
    %446 = vmatpush.bf16.msra.mxu0 %v363
    %447 = vmatmul.bf16.gmra.mxu0 %v221
    %v448 = vpop.f32.mrf.mxu0
    %v449 = vadd.f32 %v259, %v448
    %v450 = vpop.f32.mrf.mxu0
    %451 = vdwg.mxu0
    %452 = vmatpush.bf16.msra.mxu0 %v392
    %453 = vmatpush.bf16.msra.mxu0 %v388
    %454 = vmatpush.bf16.msra.mxu0 %v384
    %455 = vmatpush.bf16.msra.mxu0 %v380
    %456 = vmatpush.bf16.msra.mxu0 %v376
    %457 = vmatpush.bf16.msra.mxu0 %v372
    %458 = vmatpush.bf16.msra.mxu0 %v368
    %459 = vmatpush.bf16.msra.mxu0 %v364
    %460 = vmatmul.bf16.gmra.mxu0 %v221
    %v461 = vpop.f32.mrf.mxu0
    %v462 = vadd.f32 %v260, %v461
    %v463 = vpop.f32.mrf.mxu0
    %464 = vdwg.mxu0
    %465 = vmatpush.bf16.msra.mxu0 %v393
    %466 = vmatpush.bf16.msra.mxu0 %v389
    %467 = vmatpush.bf16.msra.mxu0 %v385
    %468 = vmatpush.bf16.msra.mxu0 %v381
    %469 = vmatpush.bf16.msra.mxu0 %v377
    %470 = vmatpush.bf16.msra.mxu0 %v373
    %471 = vmatpush.bf16.msra.mxu0 %v369
    %472 = vmatpush.bf16.msra.mxu0 %v365
    %473 = vmatmul.bf16.gmra.mxu0 %v221
    %v474 = vpop.f32.mrf.mxu0
    %v475 = vadd.f32 %v261, %v474
    %v476 = vpop.f32.mrf.mxu0
    %477 = vdwg.mxu0
    %v478 = vadd.f32 %v436, %v449
    %v479 = vadd.f32 %v478, %v462
    %v480 = vadd.f32 %v479, %v475
    %481 = vadd.xlane.f32.xlu0 %v480
    %v482 = vpop.xlane.xlu0 %481
    %v483 = vrcp.pop 512.0
    %v484 = vmul.f32 512.0, %v483
    %v485 = vsub.f32 1.0, %v484
    %v486 = vmul.f32 %v483, %v485
    %v487 = vadd.f32 %v483, %v486
    %vm488 = vweird.f32 %v483
    %v489 = vsel %vm488, %v483, %v487
    %v490 = vmul.f32 %v482, %v489
    %v491 = vsub.f32 %v436, %v490
    %v492 = vsub.f32 %v449, %v490
    %v493 = vsub.f32 %v462, %v490
    %v494 = vsub.f32 %v475, %v490
    %v495 = vmul.f32 %v491, %v491
    %v496 = vmul.f32 %v492, %v492
    %v497 = vmul.f32 %v493, %v493
    %v498 = vmul.f32 %v494, %v494
    %v499 = vadd.f32 %v495, %v496
    %v500 = vadd.f32 %v499, %v497
    %v501 = vadd.f32 %v500, %v498
    %502 = vadd.xlane.f32.xlu0 %v501
    %v503 = vpop.xlane.xlu0 %502
    %v504 = vmul.f32 %v503, %v489
    %v505 = vadd.f32 %v504, 1e-05
    %v506 = vrsqrt.pop %v505
    %v507 = vmul.f32 %v506, %v505
    %v508 = vmul.f32 %v507, %v506
    %v509 = vmul.f32 0.5, %v508
    %v510 = vsub.f32 1.5, %v509
    %v511 = vmul.f32 %v506, %v510
    %vm512 = vweird.f32 %v505
    %vm513 = vweird.f32 %v506
    %vm514 = vmor %vm512, %vm513
    %v515 = vsel %vm514, %v506, %v511
    %v516 = vmul.f32 %v491, %v515
    %v517 = vmul.f32 %v492, %v515
    %v518 = vmul.f32 %v493, %v515
    %v519 = vmul.f32 %v494, %v515
    %s520 = scalar_lea.vmem [#allocation3], 1
    %v521 = vld [vmem:[%s520] ss:$8 sm:$0xf]
    %v523 = vperm.slane %v521, 0
    %v524 = vperm.slane %v521, 1
    %v525 = vperm.slane %v521, 2
    %v526 = vperm.slane %v521, 3
    %v531 = vmul.f32 %v516, %v523
    %v532 = vmul.f32 %v517, %v524
    %v533 = vmul.f32 %v518, %v525
    %v534 = vmul.f32 %v519, %v526
    %s535 = scalar_lea.vmem [#allocation3], 2
    %v536 = vld [vmem:[%s535] ss:$8 sm:$0xf]
    %v538 = vperm.slane %v536, 0
    %v539 = vperm.slane %v536, 1
    %v540 = vperm.slane %v536, 2
    %v541 = vperm.slane %v536, 3
    %v546 = vadd.f32 %v531, %v538
    %v547 = vadd.f32 %v532, %v539
    %v548 = vadd.f32 %v533, %v540
    %v549 = vadd.f32 %v534, %v541
    %v550 = vmul.f32 %v546, 0.5
    %v551 = vmul.f32 %v547, 0.5
    %v552 = vmul.f32 %v548, 0.5
    %v553 = vmul.f32 %v549, 0.5
    %v554 = vtanh.pop %v550
    %v555 = vtanh.pop %v551
    %v556 = vtanh.pop %v552
    %v557 = vtanh.pop %v553
    %v558 = vmul.f32 %v554, 0.5
    %v559 = vmul.f32 %v555, 0.5
    %v560 = vmul.f32 %v556, 0.5
    %v561 = vmul.f32 %v557, 0.5
    %v562 = vadd.f32 %v558, 0.5
    %v563 = vadd.f32 %v559, 0.5
    %v564 = vadd.f32 %v560, 0.5
    %v565 = vadd.f32 %v561, 0.5
    %v566 = vmul.f32 %v546, %v562
    %v567 = vmul.f32 %v547, %v563
    %v568 = vmul.f32 %v548, %v564
    %v569 = vmul.f32 %v549, %v565
    %v570 = vpack.c.bf16 %v566, %v566
    %v571 = vpack.c.bf16 %v567, %v567
    %v572 = vpack.c.bf16 %v568, %v568
    %v573 = vpack.c.bf16 %v569, %v569
    %v574 = vld [vmem:[#allocation7] sm:$0xff]
    %v575 = vld [vmem:[#allocation7 + $0x8] sm:$0xff]
    %v576 = vld [vmem:[#allocation7 + $0x10] sm:$0xff]
    %v577 = vld [vmem:[#allocation7 + $0x18] sm:$0xff]
    %v578 = vld [vmem:[#allocation7 + $0x20] sm:$0xff]
    %v579 = vld [vmem:[#allocation7 + $0x28] sm:$0xff]
    %v580 = vld [vmem:[#allocation7 + $0x30] sm:$0xff]
    %v581 = vld [vmem:[#allocation7 + $0x38] sm:$0xff]
    %v582 = vld [vmem:[#allocation7 + $0x40] sm:$0xff]
    %v583 = vld [vmem:[#allocation7 + $0x48] sm:$0xff]
    %v584 = vld [vmem:[#allocation7 + $0x50] sm:$0xff]
    %v585 = vld [vmem:[#allocation7 + $0x58] sm:$0xff]
    %v586 = vld [vmem:[#allocation7 + $0x60] sm:$0xff]
    %v587 = vld [vmem:[#allocation7 + $0x68] sm:$0xff]
    %v588 = vld [vmem:[#allocation7 + $0x70] sm:$0xff]
    %v589 = vld [vmem:[#allocation7 + $0x78] sm:$0xff]
    %v590 = vld [vmem:[#allocation7 + $0x80] sm:$0xff]
    %v591 = vld [vmem:[#allocation7 + $0x88] sm:$0xff]
    %v592 = vld [vmem:[#allocation7 + $0x90] sm:$0xff]
    %v593 = vld [vmem:[#allocation7 + $0x98] sm:$0xff]
    %v594 = vld [vmem:[#allocation7 + $0xa0] sm:$0xff]
    %v595 = vld [vmem:[#allocation7 + $0xa8] sm:$0xff]
    %v596 = vld [vmem:[#allocation7 + $0xb0] sm:$0xff]
    %v597 = vld [vmem:[#allocation7 + $0xb8] sm:$0xff]
    %v598 = vld [vmem:[#allocation7 + $0xc0] sm:$0xff]
    %v599 = vld [vmem:[#allocation7 + $0xc8] sm:$0xff]
    %v600 = vld [vmem:[#allocation7 + $0xd0] sm:$0xff]
    %v601 = vld [vmem:[#allocation7 + $0xd8] sm:$0xff]
    %v602 = vld [vmem:[#allocation7 + $0xe0] sm:$0xff]
    %v603 = vld [vmem:[#allocation7 + $0xe8] sm:$0xff]
    %v604 = vld [vmem:[#allocation7 + $0xf0] sm:$0xff]
    %v605 = vld [vmem:[#allocation7 + $0xf8] sm:$0xff]
    %v606 = vld [vmem:[#allocation7 + $0x100] sm:$0xff]
    %v607 = vld [vmem:[#allocation7 + $0x108] sm:$0xff]
    %v608 = vld [vmem:[#allocation7 + $0x110] sm:$0xff]
    %v609 = vld [vmem:[#allocation7 + $0x118] sm:$0xff]
    %v610 = vld [vmem:[#allocation7 + $0x120] sm:$0xff]
    %v611 = vld [vmem:[#allocation7 + $0x128] sm:$0xff]
    %v612 = vld [vmem:[#allocation7 + $0x130] sm:$0xff]
    %v613 = vld [vmem:[#allocation7 + $0x138] sm:$0xff]
    %v614 = vld [vmem:[#allocation7 + $0x140] sm:$0xff]
    %v615 = vld [vmem:[#allocation7 + $0x148] sm:$0xff]
    %v616 = vld [vmem:[#allocation7 + $0x150] sm:$0xff]
    %v617 = vld [vmem:[#allocation7 + $0x158] sm:$0xff]
    %v618 = vld [vmem:[#allocation7 + $0x160] sm:$0xff]
    %v619 = vld [vmem:[#allocation7 + $0x168] sm:$0xff]
    %v620 = vld [vmem:[#allocation7 + $0x170] sm:$0xff]
    %v621 = vld [vmem:[#allocation7 + $0x178] sm:$0xff]
    %v622 = vld [vmem:[#allocation7 + $0x180] sm:$0xff]
    %v623 = vld [vmem:[#allocation7 + $0x188] sm:$0xff]
    %v624 = vld [vmem:[#allocation7 + $0x190] sm:$0xff]
    %v625 = vld [vmem:[#allocation7 + $0x198] sm:$0xff]
    %v626 = vld [vmem:[#allocation7 + $0x1a0] sm:$0xff]
    %v627 = vld [vmem:[#allocation7 + $0x1a8] sm:$0xff]
    %v628 = vld [vmem:[#allocation7 + $0x1b0] sm:$0xff]
    %v629 = vld [vmem:[#allocation7 + $0x1b8] sm:$0xff]
    %v630 = vld [vmem:[#allocation7 + $0x1c0] sm:$0xff]
    %v631 = vld [vmem:[#allocation7 + $0x1c8] sm:$0xff]
    %v632 = vld [vmem:[#allocation7 + $0x1d0] sm:$0xff]
    %v633 = vld [vmem:[#allocation7 + $0x1d8] sm:$0xff]
    %v634 = vld [vmem:[#allocation7 + $0x1e0] sm:$0xff]
    %v635 = vld [vmem:[#allocation7 + $0x1e8] sm:$0xff]
    %v636 = vld [vmem:[#allocation7 + $0x1f0] sm:$0xff]
    %v637 = vld [vmem:[#allocation7 + $0x1f8] sm:$0xff]
    %v638 = vld [vmem:[#allocation7 + $0x200] sm:$0xff]
    %v639 = vld [vmem:[#allocation7 + $0x208] sm:$0xff]
    %v640 = vld [vmem:[#allocation7 + $0x210] sm:$0xff]
    %v641 = vld [vmem:[#allocation7 + $0x218] sm:$0xff]
    %v642 = vld [vmem:[#allocation7 + $0x220] sm:$0xff]
    %v643 = vld [vmem:[#allocation7 + $0x228] sm:$0xff]
    %v644 = vld [vmem:[#allocation7 + $0x230] sm:$0xff]
    %v645 = vld [vmem:[#allocation7 + $0x238] sm:$0xff]
    %v646 = vld [vmem:[#allocation7 + $0x240] sm:$0xff]
    %v647 = vld [vmem:[#allocation7 + $0x248] sm:$0xff]
    %v648 = vld [vmem:[#allocation7 + $0x250] sm:$0xff]
    %v649 = vld [vmem:[#allocation7 + $0x258] sm:$0xff]
    %v650 = vld [vmem:[#allocation7 + $0x260] sm:$0xff]
    %v651 = vld [vmem:[#allocation7 + $0x268] sm:$0xff]
    %v652 = vld [vmem:[#allocation7 + $0x270] sm:$0xff]
    %v653 = vld [vmem:[#allocation7 + $0x278] sm:$0xff]
    %v654 = vld [vmem:[#allocation7 + $0x280] sm:$0xff]
    %v655 = vld [vmem:[#allocation7 + $0x288] sm:$0xff]
    %v656 = vld [vmem:[#allocation7 + $0x290] sm:$0xff]
    %v657 = vld [vmem:[#allocation7 + $0x298] sm:$0xff]
    %v658 = vld [vmem:[#allocation7 + $0x2a0] sm:$0xff]
    %v659 = vld [vmem:[#allocation7 + $0x2a8] sm:$0xff]
    %v660 = vld [vmem:[#allocation7 + $0x2b0] sm:$0xff]
    %v661 = vld [vmem:[#allocation7 + $0x2b8] sm:$0xff]
    %v662 = vld [vmem:[#allocation7 + $0x2c0] sm:$0xff]
    %v663 = vld [vmem:[#allocation7 + $0x2c8] sm:$0xff]
    %v664 = vld [vmem:[#allocation7 + $0x2d0] sm:$0xff]
    %v665 = vld [vmem:[#allocation7 + $0x2d8] sm:$0xff]
    %v666 = vld [vmem:[#allocation7 + $0x2e0] sm:$0xff]
    %v667 = vld [vmem:[#allocation7 + $0x2e8] sm:$0xff]
    %v668 = vld [vmem:[#allocation7 + $0x2f0] sm:$0xff]
    %v669 = vld [vmem:[#allocation7 + $0x2f8] sm:$0xff]
    %v670 = vld [vmem:[#allocation7 + $0x300] sm:$0xff]
    %v671 = vld [vmem:[#allocation7 + $0x308] sm:$0xff]
    %v672 = vld [vmem:[#allocation7 + $0x310] sm:$0xff]
    %v673 = vld [vmem:[#allocation7 + $0x318] sm:$0xff]
    %v674 = vld [vmem:[#allocation7 + $0x320] sm:$0xff]
    %v675 = vld [vmem:[#allocation7 + $0x328] sm:$0xff]
    %v676 = vld [vmem:[#allocation7 + $0x330] sm:$0xff]
    %v677 = vld [vmem:[#allocation7 + $0x338] sm:$0xff]
    %v678 = vld [vmem:[#allocation7 + $0x340] sm:$0xff]
    %v679 = vld [vmem:[#allocation7 + $0x348] sm:$0xff]
    %v680 = vld [vmem:[#allocation7 + $0x350] sm:$0xff]
    %v681 = vld [vmem:[#allocation7 + $0x358] sm:$0xff]
    %v682 = vld [vmem:[#allocation7 + $0x360] sm:$0xff]
    %v683 = vld [vmem:[#allocation7 + $0x368] sm:$0xff]
    %v684 = vld [vmem:[#allocation7 + $0x370] sm:$0xff]
    %v685 = vld [vmem:[#allocation7 + $0x378] sm:$0xff]
    %v686 = vld [vmem:[#allocation7 + $0x380] sm:$0xff]
    %v687 = vld [vmem:[#allocation7 + $0x388] sm:$0xff]
    %v688 = vld [vmem:[#allocation7 + $0x390] sm:$0xff]
    %v689 = vld [vmem:[#allocation7 + $0x398] sm:$0xff]
    %v690 = vld [vmem:[#allocation7 + $0x3a0] sm:$0xff]
    %v691 = vld [vmem:[#allocation7 + $0x3a8] sm:$0xff]
    %v692 = vld [vmem:[#allocation7 + $0x3b0] sm:$0xff]
    %v693 = vld [vmem:[#allocation7 + $0x3b8] sm:$0xff]
    %v694 = vld [vmem:[#allocation7 + $0x3c0] sm:$0xff]
    %v695 = vld [vmem:[#allocation7 + $0x3c8] sm:$0xff]
    %v696 = vld [vmem:[#allocation7 + $0x3d0] sm:$0xff]
    %v697 = vld [vmem:[#allocation7 + $0x3d8] sm:$0xff]
    %v698 = vld [vmem:[#allocation7 + $0x3e0] sm:$0xff]
    %v699 = vld [vmem:[#allocation7 + $0x3e8] sm:$0xff]
    %v700 = vld [vmem:[#allocation7 + $0x3f0] sm:$0xff]
    %v701 = vld [vmem:[#allocation7 + $0x3f8] sm:$0xff]
    %s702 = scalar_lea.vmem [#allocation3], 3
    %v703 = vld [vmem:[%s702] ss:$8 sm:$0xf]
    %v705 = vperm.slane %v703, 0
    %v706 = vperm.slane %v703, 1
    %v707 = vperm.slane %v703, 2
    %v708 = vperm.slane %v703, 3
    %v841 = vunpack.c.l.b16 %v574
    %v842 = vunpack.c.h.b16 %v574
    %v843 = vunpack.c.l.b16 %v575
    %v844 = vunpack.c.h.b16 %v575
    %v845 = vunpack.c.l.b16 %v576
    %v846 = vunpack.c.h.b16 %v576
    %v847 = vunpack.c.l.b16 %v577
    %v848 = vunpack.c.h.b16 %v577
    %v849 = vunpack.c.l.b16 %v578
    %v850 = vunpack.c.h.b16 %v578
    %v851 = vunpack.c.l.b16 %v579
    %v852 = vunpack.c.h.b16 %v579
    %v853 = vunpack.c.l.b16 %v580
    %v854 = vunpack.c.h.b16 %v580
    %v855 = vunpack.c.l.b16 %v581
    %v856 = vunpack.c.h.b16 %v581
    %v857 = vunpack.c.l.b16 %v582
    %v858 = vunpack.c.h.b16 %v582
    %v859 = vunpack.c.l.b16 %v583
    %v860 = vunpack.c.h.b16 %v583
    %v861 = vunpack.c.l.b16 %v584
    %v862 = vunpack.c.h.b16 %v584
    %v863 = vunpack.c.l.b16 %v585
    %v864 = vunpack.c.h.b16 %v585
    %v865 = vunpack.c.l.b16 %v586
    %v866 = vunpack.c.h.b16 %v586
    %v867 = vunpack.c.l.b16 %v587
    %v868 = vunpack.c.h.b16 %v587
    %v869 = vunpack.c.l.b16 %v588
    %v870 = vunpack.c.h.b16 %v588
    %v871 = vunpack.c.l.b16 %v589
    %v872 = vunpack.c.h.b16 %v589
    %v873 = vunpack.c.l.b16 %v590
    %v874 = vunpack.c.h.b16 %v590
    %v875 = vunpack.c.l.b16 %v591
    %v876 = vunpack.c.h.b16 %v591
    %v877 = vunpack.c.l.b16 %v592
    %v878 = vunpack.c.h.b16 %v592
    %v879 = vunpack.c.l.b16 %v593
    %v880 = vunpack.c.h.b16 %v593
    %v881 = vunpack.c.l.b16 %v594
    %v882 = vunpack.c.h.b16 %v594
    %v883 = vunpack.c.l.b16 %v595
    %v884 = vunpack.c.h.b16 %v595
    %v885 = vunpack.c.l.b16 %v596
    %v886 = vunpack.c.h.b16 %v596
    %v887 = vunpack.c.l.b16 %v597
    %v888 = vunpack.c.h.b16 %v597
    %v889 = vunpack.c.l.b16 %v598
    %v890 = vunpack.c.h.b16 %v598
    %v891 = vunpack.c.l.b16 %v599
    %v892 = vunpack.c.h.b16 %v599
    %v893 = vunpack.c.l.b16 %v600
    %v894 = vunpack.c.h.b16 %v600
    %v895 = vunpack.c.l.b16 %v601
    %v896 = vunpack.c.h.b16 %v601
    %v897 = vunpack.c.l.b16 %v602
    %v898 = vunpack.c.h.b16 %v602
    %v899 = vunpack.c.l.b16 %v603
    %v900 = vunpack.c.h.b16 %v603
    %v901 = vunpack.c.l.b16 %v604
    %v902 = vunpack.c.h.b16 %v604
    %v903 = vunpack.c.l.b16 %v605
    %v904 = vunpack.c.h.b16 %v605
    %v905 = vunpack.c.l.b16 %v606
    %v906 = vunpack.c.h.b16 %v606
    %v907 = vunpack.c.l.b16 %v607
    %v908 = vunpack.c.h.b16 %v607
    %v909 = vunpack.c.l.b16 %v608
    %v910 = vunpack.c.h.b16 %v608
    %v911 = vunpack.c.l.b16 %v609
    %v912 = vunpack.c.h.b16 %v609
    %v913 = vunpack.c.l.b16 %v610
    %v914 = vunpack.c.h.b16 %v610
    %v915 = vunpack.c.l.b16 %v611
    %v916 = vunpack.c.h.b16 %v611
    %v917 = vunpack.c.l.b16 %v612
    %v918 = vunpack.c.h.b16 %v612
    %v919 = vunpack.c.l.b16 %v613
    %v920 = vunpack.c.h.b16 %v613
    %v921 = vunpack.c.l.b16 %v614
    %v922 = vunpack.c.h.b16 %v614
    %v923 = vunpack.c.l.b16 %v615
    %v924 = vunpack.c.h.b16 %v615
    %v925 = vunpack.c.l.b16 %v616
    %v926 = vunpack.c.h.b16 %v616
    %v927 = vunpack.c.l.b16 %v617
    %v928 = vunpack.c.h.b16 %v617
    %v929 = vunpack.c.l.b16 %v618
    %v930 = vunpack.c.h.b16 %v618
    %v931 = vunpack.c.l.b16 %v619
    %v932 = vunpack.c.h.b16 %v619
    %v933 = vunpack.c.l.b16 %v620
    %v934 = vunpack.c.h.b16 %v620
    %v935 = vunpack.c.l.b16 %v621
    %v936 = vunpack.c.h.b16 %v621
    %v937 = vunpack.c.l.b16 %v622
    %v938 = vunpack.c.h.b16 %v622
    %v939 = vunpack.c.l.b16 %v623
    %v940 = vunpack.c.h.b16 %v623
    %v941 = vunpack.c.l.b16 %v624
    %v942 = vunpack.c.h.b16 %v624
    %v943 = vunpack.c.l.b16 %v625
    %v944 = vunpack.c.h.b16 %v625
    %v945 = vunpack.c.l.b16 %v626
    %v946 = vunpack.c.h.b16 %v626
    %v947 = vunpack.c.l.b16 %v627
    %v948 = vunpack.c.h.b16 %v627
    %v949 = vunpack.c.l.b16 %v628
    %v950 = vunpack.c.h.b16 %v628
    %v951 = vunpack.c.l.b16 %v629
    %v952 = vunpack.c.h.b16 %v629
    %v953 = vunpack.c.l.b16 %v630
    %v954 = vunpack.c.h.b16 %v630
    %v955 = vunpack.c.l.b16 %v631
    %v956 = vunpack.c.h.b16 %v631
    %v957 = vunpack.c.l.b16 %v632
    %v958 = vunpack.c.h.b16 %v632
    %v959 = vunpack.c.l.b16 %v633
    %v960 = vunpack.c.h.b16 %v633
    %v961 = vunpack.c.l.b16 %v634
    %v962 = vunpack.c.h.b16 %v634
    %v963 = vunpack.c.l.b16 %v635
    %v964 = vunpack.c.h.b16 %v635
    %v965 = vunpack.c.l.b16 %v636
    %v966 = vunpack.c.h.b16 %v636
    %v967 = vunpack.c.l.b16 %v637
    %v968 = vunpack.c.h.b16 %v637
    %v969 = vunpack.c.l.b16 %v638
    %v970 = vunpack.c.h.b16 %v638
    %v971 = vunpack.c.l.b16 %v639
    %v972 = vunpack.c.h.b16 %v639
    %v973 = vunpack.c.l.b16 %v640
    %v974 = vunpack.c.h.b16 %v640
    %v975 = vunpack.c.l.b16 %v641
    %v976 = vunpack.c.h.b16 %v641
    %v977 = vunpack.c.l.b16 %v642
    %v978 = vunpack.c.h.b16 %v642
    %v979 = vunpack.c.l.b16 %v643
    %v980 = vunpack.c.h.b16 %v643
    %v981 = vunpack.c.l.b16 %v644
    %v982 = vunpack.c.h.b16 %v644
    %v983 = vunpack.c.l.b16 %v645
    %v984 = vunpack.c.h.b16 %v645
    %v985 = vunpack.c.l.b16 %v646
    %v986 = vunpack.c.h.b16 %v646
    %v987 = vunpack.c.l.b16 %v647
    %v988 = vunpack.c.h.b16 %v647
    %v989 = vunpack.c.l.b16 %v648
    %v990 = vunpack.c.h.b16 %v648
    %v991 = vunpack.c.l.b16 %v649
    %v992 = vunpack.c.h.b16 %v649
    %v993 = vunpack.c.l.b16 %v650
    %v994 = vunpack.c.h.b16 %v650
    %v995 = vunpack.c.l.b16 %v651
    %v996 = vunpack.c.h.b16 %v651
    %v997 = vunpack.c.l.b16 %v652
    %v998 = vunpack.c.h.b16 %v652
    %v999 = vunpack.c.l.b16 %v653
    %v1000 = vunpack.c.h.b16 %v653
    %v1001 = vunpack.c.l.b16 %v654
    %v1002 = vunpack.c.h.b16 %v654
    %v1003 = vunpack.c.l.b16 %v655
    %v1004 = vunpack.c.h.b16 %v655
    %v1005 = vunpack.c.l.b16 %v656
    %v1006 = vunpack.c.h.b16 %v656
    %v1007 = vunpack.c.l.b16 %v657
    %v1008 = vunpack.c.h.b16 %v657
    %v1009 = vunpack.c.l.b16 %v658
    %v1010 = vunpack.c.h.b16 %v658
    %v1011 = vunpack.c.l.b16 %v659
    %v1012 = vunpack.c.h.b16 %v659
    %v1013 = vunpack.c.l.b16 %v660
    %v1014 = vunpack.c.h.b16 %v660
    %v1015 = vunpack.c.l.b16 %v661
    %v1016 = vunpack.c.h.b16 %v661
    %v1017 = vunpack.c.l.b16 %v662
    %v1018 = vunpack.c.h.b16 %v662
    %v1019 = vunpack.c.l.b16 %v663
    %v1020 = vunpack.c.h.b16 %v663
    %v1021 = vunpack.c.l.b16 %v664
    %v1022 = vunpack.c.h.b16 %v664
    %v1023 = vunpack.c.l.b16 %v665
    %v1024 = vunpack.c.h.b16 %v665
    %v1025 = vunpack.c.l.b16 %v666
    %v1026 = vunpack.c.h.b16 %v666
    %v1027 = vunpack.c.l.b16 %v667
    %v1028 = vunpack.c.h.b16 %v667
    %v1029 = vunpack.c.l.b16 %v668
    %v1030 = vunpack.c.h.b16 %v668
    %v1031 = vunpack.c.l.b16 %v669
    %v1032 = vunpack.c.h.b16 %v669
    %v1033 = vunpack.c.l.b16 %v670
    %v1034 = vunpack.c.h.b16 %v670
    %v1035 = vunpack.c.l.b16 %v671
    %v1036 = vunpack.c.h.b16 %v671
    %v1037 = vunpack.c.l.b16 %v672
    %v1038 = vunpack.c.h.b16 %v672
    %v1039 = vunpack.c.l.b16 %v673
    %v1040 = vunpack.c.h.b16 %v673
    %v1041 = vunpack.c.l.b16 %v674
    %v1042 = vunpack.c.h.b16 %v674
    %v1043 = vunpack.c.l.b16 %v675
    %v1044 = vunpack.c.h.b16 %v675
    %v1045 = vunpack.c.l.b16 %v676
    %v1046 = vunpack.c.h.b16 %v676
    %v1047 = vunpack.c.l.b16 %v677
    %v1048 = vunpack.c.h.b16 %v677
    %v1049 = vunpack.c.l.b16 %v678
    %v1050 = vunpack.c.h.b16 %v678
    %v1051 = vunpack.c.l.b16 %v679
    %v1052 = vunpack.c.h.b16 %v679
    %v1053 = vunpack.c.l.b16 %v680
    %v1054 = vunpack.c.h.b16 %v680
    %v1055 = vunpack.c.l.b16 %v681
    %v1056 = vunpack.c.h.b16 %v681
    %v1057 = vunpack.c.l.b16 %v682
    %v1058 = vunpack.c.h.b16 %v682
    %v1059 = vunpack.c.l.b16 %v683
    %v1060 = vunpack.c.h.b16 %v683
    %v1061 = vunpack.c.l.b16 %v684
    %v1062 = vunpack.c.h.b16 %v684
    %v1063 = vunpack.c.l.b16 %v685
    %v1064 = vunpack.c.h.b16 %v685
    %v1065 = vunpack.c.l.b16 %v686
    %v1066 = vunpack.c.h.b16 %v686
    %v1067 = vunpack.c.l.b16 %v687
    %v1068 = vunpack.c.h.b16 %v687
    %v1069 = vunpack.c.l.b16 %v688
    %v1070 = vunpack.c.h.b16 %v688
    %v1071 = vunpack.c.l.b16 %v689
    %v1072 = vunpack.c.h.b16 %v689
    %v1073 = vunpack.c.l.b16 %v690
    %v1074 = vunpack.c.h.b16 %v690
    %v1075 = vunpack.c.l.b16 %v691
    %v1076 = vunpack.c.h.b16 %v691
    %v1077 = vunpack.c.l.b16 %v692
    %v1078 = vunpack.c.h.b16 %v692
    %v1079 = vunpack.c.l.b16 %v693
    %v1080 = vunpack.c.h.b16 %v693
    %v1081 = vunpack.c.l.b16 %v694
    %v1082 = vunpack.c.h.b16 %v694
    %v1083 = vunpack.c.l.b16 %v695
    %v1084 = vunpack.c.h.b16 %v695
    %v1085 = vunpack.c.l.b16 %v696
    %v1086 = vunpack.c.h.b16 %v696
    %v1087 = vunpack.c.l.b16 %v697
    %v1088 = vunpack.c.h.b16 %v697
    %v1089 = vunpack.c.l.b16 %v698
    %v1090 = vunpack.c.h.b16 %v698
    %v1091 = vunpack.c.l.b16 %v699
    %v1092 = vunpack.c.h.b16 %v699
    %v1093 = vunpack.c.l.b16 %v700
    %v1094 = vunpack.c.h.b16 %v700
    %v1095 = vunpack.c.l.b16 %v701
    %v1096 = vunpack.c.h.b16 %v701
    %v1097 = vpack.c.b16 %v845, %v841
    %v1098 = vpack.c.b16 %v846, %v842
    %v1099 = vpack.c.b16 %v847, %v843
    %v1100 = vpack.c.b16 %v848, %v844
    %v1101 = vpack.c.b16 %v853, %v849
    %v1102 = vpack.c.b16 %v854, %v850
    %v1103 = vpack.c.b16 %v855, %v851
    %v1104 = vpack.c.b16 %v856, %v852
    %v1105 = vpack.c.b16 %v861, %v857
    %v1106 = vpack.c.b16 %v862, %v858
    %v1107 = vpack.c.b16 %v863, %v859
    %v1108 = vpack.c.b16 %v864, %v860
    %v1109 = vpack.c.b16 %v869, %v865
    %v1110 = vpack.c.b16 %v870, %v866
    %v1111 = vpack.c.b16 %v871, %v867
    %v1112 = vpack.c.b16 %v872, %v868
    %v1113 = vpack.c.b16 %v877, %v873
    %v1114 = vpack.c.b16 %v878, %v874
    %v1115 = vpack.c.b16 %v879, %v875
    %v1116 = vpack.c.b16 %v880, %v876
    %v1117 = vpack.c.b16 %v885, %v881
    %v1118 = vpack.c.b16 %v886, %v882
    %v1119 = vpack.c.b16 %v887, %v883
    %v1120 = vpack.c.b16 %v888, %v884
    %v1121 = vpack.c.b16 %v893, %v889
    %v1122 = vpack.c.b16 %v894, %v890
    %v1123 = vpack.c.b16 %v895, %v891
    %v1124 = vpack.c.b16 %v896, %v892
    %v1125 = vpack.c.b16 %v901, %v897
    %v1126 = vpack.c.b16 %v902, %v898
    %v1127 = vpack.c.b16 %v903, %v899
    %v1128 = vpack.c.b16 %v904, %v900
    %v1129 = vpack.c.b16 %v909, %v905
    %v1130 = vpack.c.b16 %v910, %v906
    %v1131 = vpack.c.b16 %v911, %v907
    %v1132 = vpack.c.b16 %v912, %v908
    %v1133 = vpack.c.b16 %v917, %v913
    %v1134 = vpack.c.b16 %v918, %v914
    %v1135 = vpack.c.b16 %v919, %v915
    %v1136 = vpack.c.b16 %v920, %v916
    %v1137 = vpack.c.b16 %v925, %v921
    %v1138 = vpack.c.b16 %v926, %v922
    %v1139 = vpack.c.b16 %v927, %v923
    %v1140 = vpack.c.b16 %v928, %v924
    %v1141 = vpack.c.b16 %v933, %v929
    %v1142 = vpack.c.b16 %v934, %v930
    %v1143 = vpack.c.b16 %v935, %v931
    %v1144 = vpack.c.b16 %v936, %v932
    %v1145 = vpack.c.b16 %v941, %v937
    %v1146 = vpack.c.b16 %v942, %v938
    %v1147 = vpack.c.b16 %v943, %v939
    %v1148 = vpack.c.b16 %v944, %v940
    %v1149 = vpack.c.b16 %v949, %v945
    %v1150 = vpack.c.b16 %v950, %v946
    %v1151 = vpack.c.b16 %v951, %v947
    %v1152 = vpack.c.b16 %v952, %v948
    %v1153 = vpack.c.b16 %v957, %v953
    %v1154 = vpack.c.b16 %v958, %v954
    %v1155 = vpack.c.b16 %v959, %v955
    %v1156 = vpack.c.b16 %v960, %v956
    %v1157 = vpack.c.b16 %v965, %v961
    %v1158 = vpack.c.b16 %v966, %v962
    %v1159 = vpack.c.b16 %v967, %v963
    %v1160 = vpack.c.b16 %v968, %v964
    %v1161 = vpack.c.b16 %v973, %v969
    %v1162 = vpack.c.b16 %v974, %v970
    %v1163 = vpack.c.b16 %v975, %v971
    %v1164 = vpack.c.b16 %v976, %v972
    %v1165 = vpack.c.b16 %v981, %v977
    %v1166 = vpack.c.b16 %v982, %v978
    %v1167 = vpack.c.b16 %v983, %v979
    %v1168 = vpack.c.b16 %v984, %v980
    %v1169 = vpack.c.b16 %v989, %v985
    %v1170 = vpack.c.b16 %v990, %v986
    %v1171 = vpack.c.b16 %v991, %v987
    %v1172 = vpack.c.b16 %v992, %v988
    %v1173 = vpack.c.b16 %v997, %v993
    %v1174 = vpack.c.b16 %v998, %v994
    %v1175 = vpack.c.b16 %v999, %v995
    %v1176 = vpack.c.b16 %v1000, %v996
    %v1177 = vpack.c.b16 %v1005, %v1001
    %v1178 = vpack.c.b16 %v1006, %v1002
    %v1179 = vpack.c.b16 %v1007, %v1003
    %v1180 = vpack.c.b16 %v1008, %v1004
    %v1181 = vpack.c.b16 %v1013, %v1009
    %v1182 = vpack.c.b16 %v1014, %v1010
    %v1183 = vpack.c.b16 %v1015, %v1011
    %v1184 = vpack.c.b16 %v1016, %v1012
    %v1185 = vpack.c.b16 %v1021, %v1017
    %v1186 = vpack.c.b16 %v1022, %v1018
    %v1187 = vpack.c.b16 %v1023, %v1019
    %v1188 = vpack.c.b16 %v1024, %v1020
    %v1189 = vpack.c.b16 %v1029, %v1025
    %v1190 = vpack.c.b16 %v1030, %v1026
    %v1191 = vpack.c.b16 %v1031, %v1027
    %v1192 = vpack.c.b16 %v1032, %v1028
    %v1193 = vpack.c.b16 %v1037, %v1033
    %v1194 = vpack.c.b16 %v1038, %v1034
    %v1195 = vpack.c.b16 %v1039, %v1035
    %v1196 = vpack.c.b16 %v1040, %v1036
    %v1197 = vpack.c.b16 %v1045, %v1041
    %v1198 = vpack.c.b16 %v1046, %v1042
    %v1199 = vpack.c.b16 %v1047, %v1043
    %v1200 = vpack.c.b16 %v1048, %v1044
    %v1201 = vpack.c.b16 %v1053, %v1049
    %v1202 = vpack.c.b16 %v1054, %v1050
    %v1203 = vpack.c.b16 %v1055, %v1051
    %v1204 = vpack.c.b16 %v1056, %v1052
    %v1205 = vpack.c.b16 %v1061, %v1057
    %v1206 = vpack.c.b16 %v1062, %v1058
    %v1207 = vpack.c.b16 %v1063, %v1059
    %v1208 = vpack.c.b16 %v1064, %v1060
    %v1209 = vpack.c.b16 %v1069, %v1065
    %v1210 = vpack.c.b16 %v1070, %v1066
    %v1211 = vpack.c.b16 %v1071, %v1067
    %v1212 = vpack.c.b16 %v1072, %v1068
    %v1213 = vpack.c.b16 %v1077, %v1073
    %v1214 = vpack.c.b16 %v1078, %v1074
    %v1215 = vpack.c.b16 %v1079, %v1075
    %v1216 = vpack.c.b16 %v1080, %v1076
    %v1217 = vpack.c.b16 %v1085, %v1081
    %v1218 = vpack.c.b16 %v1086, %v1082
    %v1219 = vpack.c.b16 %v1087, %v1083
    %v1220 = vpack.c.b16 %v1088, %v1084
    %v1221 = vpack.c.b16 %v1093, %v1089
    %v1222 = vpack.c.b16 %v1094, %v1090
    %v1223 = vpack.c.b16 %v1095, %v1091
    %v1224 = vpack.c.b16 %v1096, %v1092
    %1353 = vmatpush.bf16.msra.mxu0 %v1125
    %1354 = vmatpush.bf16.msra.mxu0 %v1121
    %1355 = vmatpush.bf16.msra.mxu0 %v1117
    %1356 = vmatpush.bf16.msra.mxu0 %v1113
    %1357 = vmatpush.bf16.msra.mxu0 %v1109
    %1358 = vmatpush.bf16.msra.mxu0 %v1105
    %1359 = vmatpush.bf16.msra.mxu0 %v1101
    %1360 = vmatpush.bf16.msra.mxu0 %v1097
    %1361 = vmatmul.bf16.gmra.mxu0 %v570
    %v1362 = vpop.f32.mrf.mxu0
    %v1363 = vadd.f32 %v705, %v1362
    %v1364 = vpop.f32.mrf.mxu0
    %1365 = vdwg.mxu0
    %1366 = vmatpush.bf16.msra.mxu0 %v1157
    %1367 = vmatpush.bf16.msra.mxu0 %v1153
    %1368 = vmatpush.bf16.msra.mxu0 %v1149
    %1369 = vmatpush.bf16.msra.mxu0 %v1145
    %1370 = vmatpush.bf16.msra.mxu0 %v1141
    %1371 = vmatpush.bf16.msra.mxu0 %v1137
    %1372 = vmatpush.bf16.msra.mxu0 %v1133
    %1373 = vmatpush.bf16.msra.mxu0 %v1129
    %1374 = vmatmul.bf16.gmra.mxu0 %v571
    %v1375 = vpop.f32.mrf.mxu0
    %v1376 = vadd.f32 %v1363, %v1375
    %v1377 = vpop.f32.mrf.mxu0
    %1378 = vdwg.mxu0
    %1379 = vmatpush.bf16.msra.mxu0 %v1189
    %1380 = vmatpush.bf16.msra.mxu0 %v1185
    %1381 = vmatpush.bf16.msra.mxu0 %v1181
    %1382 = vmatpush.bf16.msra.mxu0 %v1177
    %1383 = vmatpush.bf16.msra.mxu0 %v1173
    %1384 = vmatpush.bf16.msra.mxu0 %v1169
    %1385 = vmatpush.bf16.msra.mxu0 %v1165
    %1386 = vmatpush.bf16.msra.mxu0 %v1161
    %1387 = vmatmul.bf16.gmra.mxu0 %v572
    %v1388 = vpop.f32.mrf.mxu0
    %v1389 = vadd.f32 %v1376, %v1388
    %v1390 = vpop.f32.mrf.mxu0
    %1391 = vdwg.mxu0
    %1392 = vmatpush.bf16.msra.mxu0 %v1221
    %1393 = vmatpush.bf16.msra.mxu0 %v1217
    %1394 = vmatpush.bf16.msra.mxu0 %v1213
    %1395 = vmatpush.bf16.msra.mxu0 %v1209
    %1396 = vmatpush.bf16.msra.mxu0 %v1205
    %1397 = vmatpush.bf16.msra.mxu0 %v1201
    %1398 = vmatpush.bf16.msra.mxu0 %v1197
    %1399 = vmatpush.bf16.msra.mxu0 %v1193
    %1400 = vmatmul.bf16.gmra.mxu0 %v573
    %v1401 = vpop.f32.mrf.mxu0
    %v1402 = vadd.f32 %v1389, %v1401
    %v1403 = vpop.f32.mrf.mxu0
    %1404 = vdwg.mxu0
    %1405 = vmatpush.bf16.msra.mxu0 %v1126
    %1406 = vmatpush.bf16.msra.mxu0 %v1122
    %1407 = vmatpush.bf16.msra.mxu0 %v1118
    %1408 = vmatpush.bf16.msra.mxu0 %v1114
    %1409 = vmatpush.bf16.msra.mxu0 %v1110
    %1410 = vmatpush.bf16.msra.mxu0 %v1106
    %1411 = vmatpush.bf16.msra.mxu0 %v1102
    %1412 = vmatpush.bf16.msra.mxu0 %v1098
    %1413 = vmatmul.bf16.gmra.mxu0 %v570
    %v1414 = vpop.f32.mrf.mxu0
    %v1415 = vadd.f32 %v706, %v1414
    %v1416 = vpop.f32.mrf.mxu0
    %1417 = vdwg.mxu0
    %1418 = vmatpush.bf16.msra.mxu0 %v1158
    %1419 = vmatpush.bf16.msra.mxu0 %v1154
    %1420 = vmatpush.bf16.msra.mxu0 %v1150
    %1421 = vmatpush.bf16.msra.mxu0 %v1146
    %1422 = vmatpush.bf16.msra.mxu0 %v1142
    %1423 = vmatpush.bf16.msra.mxu0 %v1138
    %1424 = vmatpush.bf16.msra.mxu0 %v1134
    %1425 = vmatpush.bf16.msra.mxu0 %v1130
    %1426 = vmatmul.bf16.gmra.mxu0 %v571
    %v1427 = vpop.f32.mrf.mxu0
    %v1428 = vadd.f32 %v1415, %v1427
    %v1429 = vpop.f32.mrf.mxu0
    %1430 = vdwg.mxu0
    %1431 = vmatpush.bf16.msra.mxu0 %v1190
    %1432 = vmatpush.bf16.msra.mxu0 %v1186
    %1433 = vmatpush.bf16.msra.mxu0 %v1182
    %1434 = vmatpush.bf16.msra.mxu0 %v1178
    %1435 = vmatpush.bf16.msra.mxu0 %v1174
    %1436 = vmatpush.bf16.msra.mxu0 %v1170
    %1437 = vmatpush.bf16.msra.mxu0 %v1166
    %1438 = vmatpush.bf16.msra.mxu0 %v1162
    %1439 = vmatmul.bf16.gmra.mxu0 %v572
    %v1440 = vpop.f32.mrf.mxu0
    %v1441 = vadd.f32 %v1428, %v1440
    %v1442 = vpop.f32.mrf.mxu0
    %1443 = vdwg.mxu0
    %1444 = vmatpush.bf16.msra.mxu0 %v1222
    %1445 = vmatpush.bf16.msra.mxu0 %v1218
    %1446 = vmatpush.bf16.msra.mxu0 %v1214
    %1447 = vmatpush.bf16.msra.mxu0 %v1210
    %1448 = vmatpush.bf16.msra.mxu0 %v1206
    %1449 = vmatpush.bf16.msra.mxu0 %v1202
    %1450 = vmatpush.bf16.msra.mxu0 %v1198
    %1451 = vmatpush.bf16.msra.mxu0 %v1194
    %1452 = vmatmul.bf16.gmra.mxu0 %v573
    %v1453 = vpop.f32.mrf.mxu0
    %v1454 = vadd.f32 %v1441, %v1453
    %v1455 = vpop.f32.mrf.mxu0
    %1456 = vdwg.mxu0
    %1457 = vmatpush.bf16.msra.mxu0 %v1127
    %1458 = vmatpush.bf16.msra.mxu0 %v1123
    %1459 = vmatpush.bf16.msra.mxu0 %v1119
    %1460 = vmatpush.bf16.msra.mxu0 %v1115
    %1461 = vmatpush.bf16.msra.mxu0 %v1111
    %1462 = vmatpush.bf16.msra.mxu0 %v1107
    %1463 = vmatpush.bf16.msra.mxu0 %v1103
    %1464 = vmatpush.bf16.msra.mxu0 %v1099
    %1465 = vmatmul.bf16.gmra.mxu0 %v570
    %v1466 = vpop.f32.mrf.mxu0
    %v1467 = vadd.f32 %v707, %v1466
    %v1468 = vpop.f32.mrf.mxu0
    %1469 = vdwg.mxu0
    %1470 = vmatpush.bf16.msra.mxu0 %v1159
    %1471 = vmatpush.bf16.msra.mxu0 %v1155
    %1472 = vmatpush.bf16.msra.mxu0 %v1151
    %1473 = vmatpush.bf16.msra.mxu0 %v1147
    %1474 = vmatpush.bf16.msra.mxu0 %v1143
    %1475 = vmatpush.bf16.msra.mxu0 %v1139
    %1476 = vmatpush.bf16.msra.mxu0 %v1135
    %1477 = vmatpush.bf16.msra.mxu0 %v1131
    %1478 = vmatmul.bf16.gmra.mxu0 %v571
    %v1479 = vpop.f32.mrf.mxu0
    %v1480 = vadd.f32 %v1467, %v1479
    %v1481 = vpop.f32.mrf.mxu0
    %1482 = vdwg.mxu0
    %1483 = vmatpush.bf16.msra.mxu0 %v1191
    %1484 = vmatpush.bf16.msra.mxu0 %v1187
    %1485 = vmatpush.bf16.msra.mxu0 %v1183
    %1486 = vmatpush.bf16.msra.mxu0 %v1179
    %1487 = vmatpush.bf16.msra.mxu0 %v1175
    %1488 = vmatpush.bf16.msra.mxu0 %v1171
    %1489 = vmatpush.bf16.msra.mxu0 %v1167
    %1490 = vmatpush.bf16.msra.mxu0 %v1163
    %1491 = vmatmul.bf16.gmra.mxu0 %v572
    %v1492 = vpop.f32.mrf.mxu0
    %v1493 = vadd.f32 %v1480, %v1492
    %v1494 = vpop.f32.mrf.mxu0
    %1495 = vdwg.mxu0
    %1496 = vmatpush.bf16.msra.mxu0 %v1223
    %1497 = vmatpush.bf16.msra.mxu0 %v1219
    %1498 = vmatpush.bf16.msra.mxu0 %v1215
    %1499 = vmatpush.bf16.msra.mxu0 %v1211
    %1500 = vmatpush.bf16.msra.mxu0 %v1207
    %1501 = vmatpush.bf16.msra.mxu0 %v1203
    %1502 = vmatpush.bf16.msra.mxu0 %v1199
    %1503 = vmatpush.bf16.msra.mxu0 %v1195
    %1504 = vmatmul.bf16.gmra.mxu0 %v573
    %v1505 = vpop.f32.mrf.mxu0
    %v1506 = vadd.f32 %v1493, %v1505
    %v1507 = vpop.f32.mrf.mxu0
    %1508 = vdwg.mxu0
    %1509 = vmatpush.bf16.msra.mxu0 %v1128
    %1510 = vmatpush.bf16.msra.mxu0 %v1124
    %1511 = vmatpush.bf16.msra.mxu0 %v1120
    %1512 = vmatpush.bf16.msra.mxu0 %v1116
    %1513 = vmatpush.bf16.msra.mxu0 %v1112
    %1514 = vmatpush.bf16.msra.mxu0 %v1108
    %1515 = vmatpush.bf16.msra.mxu0 %v1104
    %1516 = vmatpush.bf16.msra.mxu0 %v1100
    %1517 = vmatmul.bf16.gmra.mxu0 %v570
    %v1518 = vpop.f32.mrf.mxu0
    %v1519 = vadd.f32 %v708, %v1518
    %v1520 = vpop.f32.mrf.mxu0
    %1521 = vdwg.mxu0
    %1522 = vmatpush.bf16.msra.mxu0 %v1160
    %1523 = vmatpush.bf16.msra.mxu0 %v1156
    %1524 = vmatpush.bf16.msra.mxu0 %v1152
    %1525 = vmatpush.bf16.msra.mxu0 %v1148
    %1526 = vmatpush.bf16.msra.mxu0 %v1144
    %1527 = vmatpush.bf16.msra.mxu0 %v1140
    %1528 = vmatpush.bf16.msra.mxu0 %v1136
    %1529 = vmatpush.bf16.msra.mxu0 %v1132
    %1530 = vmatmul.bf16.gmra.mxu0 %v571
    %v1531 = vpop.f32.mrf.mxu0
    %v1532 = vadd.f32 %v1519, %v1531
    %v1533 = vpop.f32.mrf.mxu0
    %1534 = vdwg.mxu0
    %1535 = vmatpush.bf16.msra.mxu0 %v1192
    %1536 = vmatpush.bf16.msra.mxu0 %v1188
    %1537 = vmatpush.bf16.msra.mxu0 %v1184
    %1538 = vmatpush.bf16.msra.mxu0 %v1180
    %1539 = vmatpush.bf16.msra.mxu0 %v1176
    %1540 = vmatpush.bf16.msra.mxu0 %v1172
    %1541 = vmatpush.bf16.msra.mxu0 %v1168
    %1542 = vmatpush.bf16.msra.mxu0 %v1164
    %1543 = vmatmul.bf16.gmra.mxu0 %v572
    %v1544 = vpop.f32.mrf.mxu0
    %v1545 = vadd.f32 %v1532, %v1544
    %v1546 = vpop.f32.mrf.mxu0
    %1547 = vdwg.mxu0
    %1548 = vmatpush.bf16.msra.mxu0 %v1224
    %1549 = vmatpush.bf16.msra.mxu0 %v1220
    %1550 = vmatpush.bf16.msra.mxu0 %v1216
    %1551 = vmatpush.bf16.msra.mxu0 %v1212
    %1552 = vmatpush.bf16.msra.mxu0 %v1208
    %1553 = vmatpush.bf16.msra.mxu0 %v1204
    %1554 = vmatpush.bf16.msra.mxu0 %v1200
    %1555 = vmatpush.bf16.msra.mxu0 %v1196
    %1556 = vmatmul.bf16.gmra.mxu0 %v573
    %v1557 = vpop.f32.mrf.mxu0
    %v1558 = vadd.f32 %v1545, %v1557
    %v1559 = vpop.f32.mrf.mxu0
    %1560 = vdwg.mxu0
    %v1561 = vadd.f32 %v1402, %v1454
    %v1562 = vadd.f32 %v1561, %v1506
    %v1563 = vadd.f32 %v1562, %v1558
    %1564 = vadd.xlane.f32.xlu0 %v1563
    %v1565 = vpop.xlane.xlu0 %1564
    %v1566 = vmul.f32 %v1565, %v489
    %v1567 = vsub.f32 %v1402, %v1566
    %v1568 = vsub.f32 %v1454, %v1566
    %v1569 = vsub.f32 %v1506, %v1566
    %v1570 = vsub.f32 %v1558, %v1566
    %v1571 = vmul.f32 %v1567, %v1567
    %v1572 = vmul.f32 %v1568, %v1568
    %v1573 = vmul.f32 %v1569, %v1569
    %v1574 = vmul.f32 %v1570, %v1570
    %v1575 = vadd.f32 %v1571, %v1572
    %v1576 = vadd.f32 %v1575, %v1573
    %v1577 = vadd.f32 %v1576, %v1574
    %1578 = vadd.xlane.f32.xlu0 %v1577
    %v1579 = vpop.xlane.xlu0 %1578
    %v1580 = vmul.f32 %v1579, %v489
    %v1581 = vadd.f32 %v1580, 1e-05
    %v1582 = vrsqrt.pop %v1581
    %v1583 = vmul.f32 %v1582, %v1581
    %v1584 = vmul.f32 %v1583, %v1582
    %v1585 = vmul.f32 0.5, %v1584
    %v1586 = vsub.f32 1.5, %v1585
    %v1587 = vmul.f32 %v1582, %v1586
    %vm1588 = vweird.f32 %v1581
    %vm1589 = vweird.f32 %v1582
    %vm1590 = vmor %vm1588, %vm1589
    %v1591 = vsel %vm1590, %v1582, %v1587
    %v1592 = vmul.f32 %v1567, %v1591
    %v1593 = vmul.f32 %v1568, %v1591
    %v1594 = vmul.f32 %v1569, %v1591
    %v1595 = vmul.f32 %v1570, %v1591
    %s1596 = scalar_lea.vmem [#allocation3], 4
    %v1597 = vld [vmem:[%s1596] ss:$8 sm:$0xf]
    %v1599 = vperm.slane %v1597, 0
    %v1600 = vperm.slane %v1597, 1
    %v1601 = vperm.slane %v1597, 2
    %v1602 = vperm.slane %v1597, 3
    %v1607 = vmul.f32 %v1592, %v1599
    %v1608 = vmul.f32 %v1593, %v1600
    %v1609 = vmul.f32 %v1594, %v1601
    %v1610 = vmul.f32 %v1595, %v1602
    %s1611 = scalar_lea.vmem [#allocation3], 5
    %v1612 = vld [vmem:[%s1611] ss:$8 sm:$0xf]
    %v1614 = vperm.slane %v1612, 0
    %v1615 = vperm.slane %v1612, 1
    %v1616 = vperm.slane %v1612, 2
    %v1617 = vperm.slane %v1612, 3
    %v1622 = vadd.f32 %v1607, %v1614
    %v1623 = vadd.f32 %v1608, %v1615
    %v1624 = vadd.f32 %v1609, %v1616
    %v1625 = vadd.f32 %v1610, %v1617
    %v1626 = vmul.f32 %v1622, 0.5
    %v1627 = vmul.f32 %v1623, 0.5
    %v1628 = vmul.f32 %v1624, 0.5
    %v1629 = vmul.f32 %v1625, 0.5
    %v1630 = vtanh.pop %v1626
    %v1631 = vtanh.pop %v1627
    %v1632 = vtanh.pop %v1628
    %v1633 = vtanh.pop %v1629
    %v1634 = vmul.f32 %v1630, 0.5
    %v1635 = vmul.f32 %v1631, 0.5
    %v1636 = vmul.f32 %v1632, 0.5
    %v1637 = vmul.f32 %v1633, 0.5
    %v1638 = vadd.f32 %v1634, 0.5
    %v1639 = vadd.f32 %v1635, 0.5
    %v1640 = vadd.f32 %v1636, 0.5
    %v1641 = vadd.f32 %v1637, 0.5
    %v1642 = vmul.f32 %v1622, %v1638
    %v1643 = vmul.f32 %v1623, %v1639
    %v1644 = vmul.f32 %v1624, %v1640
    %v1645 = vmul.f32 %v1625, %v1641
    %v1646 = vadd.f32 %v566, %v1642
    %v1647 = vadd.f32 %v567, %v1643
    %v1648 = vadd.f32 %v568, %v1644
    %v1649 = vadd.f32 %v569, %v1645
    %v1650 = vpack.c.bf16 %v1646, %v1646
    %v1651 = vpack.c.bf16 %v1647, %v1647
    %v1652 = vpack.c.bf16 %v1648, %v1648
    %v1653 = vpack.c.bf16 %v1649, %v1649
    %v1654 = vld [vmem:[#allocation8] sm:$0xff]
    %v1655 = vld [vmem:[#allocation8 + $0x8] sm:$0xff]
    %v1656 = vld [vmem:[#allocation8 + $0x10] sm:$0xff]
    %v1657 = vld [vmem:[#allocation8 + $0x18] sm:$0xff]
    %v1658 = vld [vmem:[#allocation8 + $0x20] sm:$0xff]
    %v1659 = vld [vmem:[#allocation8 + $0x28] sm:$0xff]
    %v1660 = vld [vmem:[#allocation8 + $0x30] sm:$0xff]
    %v1661 = vld [vmem:[#allocation8 + $0x38] sm:$0xff]
    %v1662 = vld [vmem:[#allocation8 + $0x40] sm:$0xff]
    %v1663 = vld [vmem:[#allocation8 + $0x48] sm:$0xff]
    %v1664 = vld [vmem:[#allocation8 + $0x50] sm:$0xff]
    %v1665 = vld [vmem:[#allocation8 + $0x58] sm:$0xff]
    %v1666 = vld [vmem:[#allocation8 + $0x60] sm:$0xff]
    %v1667 = vld [vmem:[#allocation8 + $0x68] sm:$0xff]
    %v1668 = vld [vmem:[#allocation8 + $0x70] sm:$0xff]
    %v1669 = vld [vmem:[#allocation8 + $0x78] sm:$0xff]
    %v1670 = vld [vmem:[#allocation8 + $0x80] sm:$0xff]
    %v1671 = vld [vmem:[#allocation8 + $0x88] sm:$0xff]
    %v1672 = vld [vmem:[#allocation8 + $0x90] sm:$0xff]
    %v1673 = vld [vmem:[#allocation8 + $0x98] sm:$0xff]
    %v1674 = vld [vmem:[#allocation8 + $0xa0] sm:$0xff]
    %v1675 = vld [vmem:[#allocation8 + $0xa8] sm:$0xff]
    %v1676 = vld [vmem:[#allocation8 + $0xb0] sm:$0xff]
    %v1677 = vld [vmem:[#allocation8 + $0xb8] sm:$0xff]
    %v1678 = vld [vmem:[#allocation8 + $0xc0] sm:$0xff]
    %v1679 = vld [vmem:[#allocation8 + $0xc8] sm:$0xff]
    %v1680 = vld [vmem:[#allocation8 + $0xd0] sm:$0xff]
    %v1681 = vld [vmem:[#allocation8 + $0xd8] sm:$0xff]
    %v1682 = vld [vmem:[#allocation8 + $0xe0] sm:$0xff]
    %v1683 = vld [vmem:[#allocation8 + $0xe8] sm:$0xff]
    %v1684 = vld [vmem:[#allocation8 + $0xf0] sm:$0xff]
    %v1685 = vld [vmem:[#allocation8 + $0xf8] sm:$0xff]
    %v1686 = vld [vmem:[#allocation8 + $0x100] sm:$0xff]
    %v1687 = vld [vmem:[#allocation8 + $0x108] sm:$0xff]
    %v1688 = vld [vmem:[#allocation8 + $0x110] sm:$0xff]
    %v1689 = vld [vmem:[#allocation8 + $0x118] sm:$0xff]
    %v1690 = vld [vmem:[#allocation8 + $0x120] sm:$0xff]
    %v1691 = vld [vmem:[#allocation8 + $0x128] sm:$0xff]
    %v1692 = vld [vmem:[#allocation8 + $0x130] sm:$0xff]
    %v1693 = vld [vmem:[#allocation8 + $0x138] sm:$0xff]
    %v1694 = vld [vmem:[#allocation8 + $0x140] sm:$0xff]
    %v1695 = vld [vmem:[#allocation8 + $0x148] sm:$0xff]
    %v1696 = vld [vmem:[#allocation8 + $0x150] sm:$0xff]
    %v1697 = vld [vmem:[#allocation8 + $0x158] sm:$0xff]
    %v1698 = vld [vmem:[#allocation8 + $0x160] sm:$0xff]
    %v1699 = vld [vmem:[#allocation8 + $0x168] sm:$0xff]
    %v1700 = vld [vmem:[#allocation8 + $0x170] sm:$0xff]
    %v1701 = vld [vmem:[#allocation8 + $0x178] sm:$0xff]
    %v1702 = vld [vmem:[#allocation8 + $0x180] sm:$0xff]
    %v1703 = vld [vmem:[#allocation8 + $0x188] sm:$0xff]
    %v1704 = vld [vmem:[#allocation8 + $0x190] sm:$0xff]
    %v1705 = vld [vmem:[#allocation8 + $0x198] sm:$0xff]
    %v1706 = vld [vmem:[#allocation8 + $0x1a0] sm:$0xff]
    %v1707 = vld [vmem:[#allocation8 + $0x1a8] sm:$0xff]
    %v1708 = vld [vmem:[#allocation8 + $0x1b0] sm:$0xff]
    %v1709 = vld [vmem:[#allocation8 + $0x1b8] sm:$0xff]
    %v1710 = vld [vmem:[#allocation8 + $0x1c0] sm:$0xff]
    %v1711 = vld [vmem:[#allocation8 + $0x1c8] sm:$0xff]
    %v1712 = vld [vmem:[#allocation8 + $0x1d0] sm:$0xff]
    %v1713 = vld [vmem:[#allocation8 + $0x1d8] sm:$0xff]
    %v1714 = vld [vmem:[#allocation8 + $0x1e0] sm:$0xff]
    %v1715 = vld [vmem:[#allocation8 + $0x1e8] sm:$0xff]
    %v1716 = vld [vmem:[#allocation8 + $0x1f0] sm:$0xff]
    %v1717 = vld [vmem:[#allocation8 + $0x1f8] sm:$0xff]
    %s1718 = scalar_lea.vmem [#allocation3], 6
    %v1719 = vld [vmem:[%s1718] ss:$8 sm:$0x3]
    %v1721 = vperm.slane %v1719, 0
    %v1722 = vperm.slane %v1719, 1
    %v1789 = vunpack.c.l.b16 %v1654
    %v1790 = vunpack.c.h.b16 %v1654
    %v1791 = vunpack.c.l.b16 %v1655
    %v1792 = vunpack.c.h.b16 %v1655
    %v1793 = vunpack.c.l.b16 %v1656
    %v1794 = vunpack.c.h.b16 %v1656
    %v1795 = vunpack.c.l.b16 %v1657
    %v1796 = vunpack.c.h.b16 %v1657
    %v1797 = vunpack.c.l.b16 %v1658
    %v1798 = vunpack.c.h.b16 %v1658
    %v1799 = vunpack.c.l.b16 %v1659
    %v1800 = vunpack.c.h.b16 %v1659
    %v1801 = vunpack.c.l.b16 %v1660
    %v1802 = vunpack.c.h.b16 %v1660
    %v1803 = vunpack.c.l.b16 %v1661
    %v1804 = vunpack.c.h.b16 %v1661
    %v1805 = vunpack.c.l.b16 %v1662
    %v1806 = vunpack.c.h.b16 %v1662
    %v1807 = vunpack.c.l.b16 %v1663
    %v1808 = vunpack.c.h.b16 %v1663
    %v1809 = vunpack.c.l.b16 %v1664
    %v1810 = vunpack.c.h.b16 %v1664
    %v1811 = vunpack.c.l.b16 %v1665
    %v1812 = vunpack.c.h.b16 %v1665
    %v1813 = vunpack.c.l.b16 %v1666
    %v1814 = vunpack.c.h.b16 %v1666
    %v1815 = vunpack.c.l.b16 %v1667
    %v1816 = vunpack.c.h.b16 %v1667
    %v1817 = vunpack.c.l.b16 %v1668
    %v1818 = vunpack.c.h.b16 %v1668
    %v1819 = vunpack.c.l.b16 %v1669
    %v1820 = vunpack.c.h.b16 %v1669
    %v1821 = vunpack.c.l.b16 %v1670
    %v1822 = vunpack.c.h.b16 %v1670
    %v1823 = vunpack.c.l.b16 %v1671
    %v1824 = vunpack.c.h.b16 %v1671
    %v1825 = vunpack.c.l.b16 %v1672
    %v1826 = vunpack.c.h.b16 %v1672
    %v1827 = vunpack.c.l.b16 %v1673
    %v1828 = vunpack.c.h.b16 %v1673
    %v1829 = vunpack.c.l.b16 %v1674
    %v1830 = vunpack.c.h.b16 %v1674
    %v1831 = vunpack.c.l.b16 %v1675
    %v1832 = vunpack.c.h.b16 %v1675
    %v1833 = vunpack.c.l.b16 %v1676
    %v1834 = vunpack.c.h.b16 %v1676
    %v1835 = vunpack.c.l.b16 %v1677
    %v1836 = vunpack.c.h.b16 %v1677
    %v1837 = vunpack.c.l.b16 %v1678
    %v1838 = vunpack.c.h.b16 %v1678
    %v1839 = vunpack.c.l.b16 %v1679
    %v1840 = vunpack.c.h.b16 %v1679
    %v1841 = vunpack.c.l.b16 %v1680
    %v1842 = vunpack.c.h.b16 %v1680
    %v1843 = vunpack.c.l.b16 %v1681
    %v1844 = vunpack.c.h.b16 %v1681
    %v1845 = vunpack.c.l.b16 %v1682
    %v1846 = vunpack.c.h.b16 %v1682
    %v1847 = vunpack.c.l.b16 %v1683
    %v1848 = vunpack.c.h.b16 %v1683
    %v1849 = vunpack.c.l.b16 %v1684
    %v1850 = vunpack.c.h.b16 %v1684
    %v1851 = vunpack.c.l.b16 %v1685
    %v1852 = vunpack.c.h.b16 %v1685
    %v1853 = vunpack.c.l.b16 %v1686
    %v1854 = vunpack.c.h.b16 %v1686
    %v1855 = vunpack.c.l.b16 %v1687
    %v1856 = vunpack.c.h.b16 %v1687
    %v1857 = vunpack.c.l.b16 %v1688
    %v1858 = vunpack.c.h.b16 %v1688
    %v1859 = vunpack.c.l.b16 %v1689
    %v1860 = vunpack.c.h.b16 %v1689
    %v1861 = vunpack.c.l.b16 %v1690
    %v1862 = vunpack.c.h.b16 %v1690
    %v1863 = vunpack.c.l.b16 %v1691
    %v1864 = vunpack.c.h.b16 %v1691
    %v1865 = vunpack.c.l.b16 %v1692
    %v1866 = vunpack.c.h.b16 %v1692
    %v1867 = vunpack.c.l.b16 %v1693
    %v1868 = vunpack.c.h.b16 %v1693
    %v1869 = vunpack.c.l.b16 %v1694
    %v1870 = vunpack.c.h.b16 %v1694
    %v1871 = vunpack.c.l.b16 %v1695
    %v1872 = vunpack.c.h.b16 %v1695
    %v1873 = vunpack.c.l.b16 %v1696
    %v1874 = vunpack.c.h.b16 %v1696
    %v1875 = vunpack.c.l.b16 %v1697
    %v1876 = vunpack.c.h.b16 %v1697
    %v1877 = vunpack.c.l.b16 %v1698
    %v1878 = vunpack.c.h.b16 %v1698
    %v1879 = vunpack.c.l.b16 %v1699
    %v1880 = vunpack.c.h.b16 %v1699
    %v1881 = vunpack.c.l.b16 %v1700
    %v1882 = vunpack.c.h.b16 %v1700
    %v1883 = vunpack.c.l.b16 %v1701
    %v1884 = vunpack.c.h.b16 %v1701
    %v1885 = vunpack.c.l.b16 %v1702
    %v1886 = vunpack.c.h.b16 %v1702
    %v1887 = vunpack.c.l.b16 %v1703
    %v1888 = vunpack.c.h.b16 %v1703
    %v1889 = vunpack.c.l.b16 %v1704
    %v1890 = vunpack.c.h.b16 %v1704
    %v1891 = vunpack.c.l.b16 %v1705
    %v1892 = vunpack.c.h.b16 %v1705
    %v1893 = vunpack.c.l.b16 %v1706
    %v1894 = vunpack.c.h.b16 %v1706
    %v1895 = vunpack.c.l.b16 %v1707
    %v1896 = vunpack.c.h.b16 %v1707
    %v1897 = vunpack.c.l.b16 %v1708
    %v1898 = vunpack.c.h.b16 %v1708
    %v1899 = vunpack.c.l.b16 %v1709
    %v1900 = vunpack.c.h.b16 %v1709
    %v1901 = vunpack.c.l.b16 %v1710
    %v1902 = vunpack.c.h.b16 %v1710
    %v1903 = vunpack.c.l.b16 %v1711
    %v1904 = vunpack.c.h.b16 %v1711
    %v1905 = vunpack.c.l.b16 %v1712
    %v1906 = vunpack.c.h.b16 %v1712
    %v1907 = vunpack.c.l.b16 %v1713
    %v1908 = vunpack.c.h.b16 %v1713
    %v1909 = vunpack.c.l.b16 %v1714
    %v1910 = vunpack.c.h.b16 %v1714
    %v1911 = vunpack.c.l.b16 %v1715
    %v1912 = vunpack.c.h.b16 %v1715
    %v1913 = vunpack.c.l.b16 %v1716
    %v1914 = vunpack.c.h.b16 %v1716
    %v1915 = vunpack.c.l.b16 %v1717
    %v1916 = vunpack.c.h.b16 %v1717
    %v1917 = vpack.c.b16 %v1791, %v1789
    %v1918 = vpack.c.b16 %v1792, %v1790
    %v1919 = vpack.c.b16 %v1795, %v1793
    %v1920 = vpack.c.b16 %v1796, %v1794
    %v1921 = vpack.c.b16 %v1799, %v1797
    %v1922 = vpack.c.b16 %v1800, %v1798
    %v1923 = vpack.c.b16 %v1803, %v1801
    %v1924 = vpack.c.b16 %v1804, %v1802
    %v1925 = vpack.c.b16 %v1807, %v1805
    %v1926 = vpack.c.b16 %v1808, %v1806
    %v1927 = vpack.c.b16 %v1811, %v1809
    %v1928 = vpack.c.b16 %v1812, %v1810
    %v1929 = vpack.c.b16 %v1815, %v1813
    %v1930 = vpack.c.b16 %v1816, %v1814
    %v1931 = vpack.c.b16 %v1819, %v1817
    %v1932 = vpack.c.b16 %v1820, %v1818
    %v1933 = vpack.c.b16 %v1823, %v1821
    %v1934 = vpack.c.b16 %v1824, %v1822
    %v1935 = vpack.c.b16 %v1827, %v1825
    %v1936 = vpack.c.b16 %v1828, %v1826
    %v1937 = vpack.c.b16 %v1831, %v1829
    %v1938 = vpack.c.b16 %v1832, %v1830
    %v1939 = vpack.c.b16 %v1835, %v1833
    %v1940 = vpack.c.b16 %v1836, %v1834
    %v1941 = vpack.c.b16 %v1839, %v1837
    %v1942 = vpack.c.b16 %v1840, %v1838
    %v1943 = vpack.c.b16 %v1843, %v1841
    %v1944 = vpack.c.b16 %v1844, %v1842
    %v1945 = vpack.c.b16 %v1847, %v1845
    %v1946 = vpack.c.b16 %v1848, %v1846
    %v1947 = vpack.c.b16 %v1851, %v1849
    %v1948 = vpack.c.b16 %v1852, %v1850
    %v1949 = vpack.c.b16 %v1855, %v1853
    %v1950 = vpack.c.b16 %v1856, %v1854
    %v1951 = vpack.c.b16 %v1859, %v1857
    %v1952 = vpack.c.b16 %v1860, %v1858
    %v1953 = vpack.c.b16 %v1863, %v1861
    %v1954 = vpack.c.b16 %v1864, %v1862
    %v1955 = vpack.c.b16 %v1867, %v1865
    %v1956 = vpack.c.b16 %v1868, %v1866
    %v1957 = vpack.c.b16 %v1871, %v1869
    %v1958 = vpack.c.b16 %v1872, %v1870
    %v1959 = vpack.c.b16 %v1875, %v1873
    %v1960 = vpack.c.b16 %v1876, %v1874
    %v1961 = vpack.c.b16 %v1879, %v1877
    %v1962 = vpack.c.b16 %v1880, %v1878
    %v1963 = vpack.c.b16 %v1883, %v1881
    %v1964 = vpack.c.b16 %v1884, %v1882
    %v1965 = vpack.c.b16 %v1887, %v1885
    %v1966 = vpack.c.b16 %v1888, %v1886
    %v1967 = vpack.c.b16 %v1891, %v1889
    %v1968 = vpack.c.b16 %v1892, %v1890
    %v1969 = vpack.c.b16 %v1895, %v1893
    %v1970 = vpack.c.b16 %v1896, %v1894
    %v1971 = vpack.c.b16 %v1899, %v1897
    %v1972 = vpack.c.b16 %v1900, %v1898
    %v1973 = vpack.c.b16 %v1903, %v1901
    %v1974 = vpack.c.b16 %v1904, %v1902
    %v1975 = vpack.c.b16 %v1907, %v1905
    %v1976 = vpack.c.b16 %v1908, %v1906
    %v1977 = vpack.c.b16 %v1911, %v1909
    %v1978 = vpack.c.b16 %v1912, %v1910
    %v1979 = vpack.c.b16 %v1915, %v1913
    %v1980 = vpack.c.b16 %v1916, %v1914
    %2045 = vmatpush.bf16.msra.mxu0 %v1931
    %2046 = vmatpush.bf16.msra.mxu0 %v1929
    %2047 = vmatpush.bf16.msra.mxu0 %v1927
    %2048 = vmatpush.bf16.msra.mxu0 %v1925
    %2049 = vmatpush.bf16.msra.mxu0 %v1923
    %2050 = vmatpush.bf16.msra.mxu0 %v1921
    %2051 = vmatpush.bf16.msra.mxu0 %v1919
    %2052 = vmatpush.bf16.msra.mxu0 %v1917
    %2053 = vmatmul.bf16.gmra.mxu0 %v1650
    %v2054 = vpop.f32.mrf.mxu0
    %v2055 = vadd.f32 %v1721, %v2054
    %v2056 = vpop.f32.mrf.mxu0
    %2057 = vdwg.mxu0
    %2058 = vmatpush.bf16.msra.mxu0 %v1947
    %2059 = vmatpush.bf16.msra.mxu0 %v1945
    %2060 = vmatpush.bf16.msra.mxu0 %v1943
    %2061 = vmatpush.bf16.msra.mxu0 %v1941
    %2062 = vmatpush.bf16.msra.mxu0 %v1939
    %2063 = vmatpush.bf16.msra.mxu0 %v1937
    %2064 = vmatpush.bf16.msra.mxu0 %v1935
    %2065 = vmatpush.bf16.msra.mxu0 %v1933
    %2066 = vmatmul.bf16.gmra.mxu0 %v1651
    %v2067 = vpop.f32.mrf.mxu0
    %v2068 = vadd.f32 %v2055, %v2067
    %v2069 = vpop.f32.mrf.mxu0
    %2070 = vdwg.mxu0
    %2071 = vmatpush.bf16.msra.mxu0 %v1963
    %2072 = vmatpush.bf16.msra.mxu0 %v1961
    %2073 = vmatpush.bf16.msra.mxu0 %v1959
    %2074 = vmatpush.bf16.msra.mxu0 %v1957
    %2075 = vmatpush.bf16.msra.mxu0 %v1955
    %2076 = vmatpush.bf16.msra.mxu0 %v1953
    %2077 = vmatpush.bf16.msra.mxu0 %v1951
    %2078 = vmatpush.bf16.msra.mxu0 %v1949
    %2079 = vmatmul.bf16.gmra.mxu0 %v1652
    %v2080 = vpop.f32.mrf.mxu0
    %v2081 = vadd.f32 %v2068, %v2080
    %v2082 = vpop.f32.mrf.mxu0
    %2083 = vdwg.mxu0
    %2084 = vmatpush.bf16.msra.mxu0 %v1979
    %2085 = vmatpush.bf16.msra.mxu0 %v1977
    %2086 = vmatpush.bf16.msra.mxu0 %v1975
    %2087 = vmatpush.bf16.msra.mxu0 %v1973
    %2088 = vmatpush.bf16.msra.mxu0 %v1971
    %2089 = vmatpush.bf16.msra.mxu0 %v1969
    %2090 = vmatpush.bf16.msra.mxu0 %v1967
    %2091 = vmatpush.bf16.msra.mxu0 %v1965
    %2092 = vmatmul.bf16.gmra.mxu0 %v1653
    %v2093 = vpop.f32.mrf.mxu0
    %v2094 = vadd.f32 %v2081, %v2093
    %v2095 = vpop.f32.mrf.mxu0
    %2096 = vdwg.mxu0
    %2097 = vmatpush.bf16.msra.mxu0 %v1932
    %2098 = vmatpush.bf16.msra.mxu0 %v1930
    %2099 = vmatpush.bf16.msra.mxu0 %v1928
    %2100 = vmatpush.bf16.msra.mxu0 %v1926
    %2101 = vmatpush.bf16.msra.mxu0 %v1924
    %2102 = vmatpush.bf16.msra.mxu0 %v1922
    %2103 = vmatpush.bf16.msra.mxu0 %v1920
    %2104 = vmatpush.bf16.msra.mxu0 %v1918
    %2105 = vmatmul.bf16.gmra.mxu0 %v1650
    %v2106 = vpop.f32.mrf.mxu0
    %v2107 = vadd.f32 %v1722, %v2106
    %v2108 = vpop.f32.mrf.mxu0
    %2109 = vdwg.mxu0
    %2110 = vmatpush.bf16.msra.mxu0 %v1948
    %2111 = vmatpush.bf16.msra.mxu0 %v1946
    %2112 = vmatpush.bf16.msra.mxu0 %v1944
    %2113 = vmatpush.bf16.msra.mxu0 %v1942
    %2114 = vmatpush.bf16.msra.mxu0 %v1940
    %2115 = vmatpush.bf16.msra.mxu0 %v1938
    %2116 = vmatpush.bf16.msra.mxu0 %v1936
    %2117 = vmatpush.bf16.msra.mxu0 %v1934
    %2118 = vmatmul.bf16.gmra.mxu0 %v1651
    %v2119 = vpop.f32.mrf.mxu0
    %v2120 = vadd.f32 %v2107, %v2119
    %v2121 = vpop.f32.mrf.mxu0
    %2122 = vdwg.mxu0
    %2123 = vmatpush.bf16.msra.mxu0 %v1964
    %2124 = vmatpush.bf16.msra.mxu0 %v1962
    %2125 = vmatpush.bf16.msra.mxu0 %v1960
    %2126 = vmatpush.bf16.msra.mxu0 %v1958
    %2127 = vmatpush.bf16.msra.mxu0 %v1956
    %2128 = vmatpush.bf16.msra.mxu0 %v1954
    %2129 = vmatpush.bf16.msra.mxu0 %v1952
    %2130 = vmatpush.bf16.msra.mxu0 %v1950
    %2131 = vmatmul.bf16.gmra.mxu0 %v1652
    %v2132 = vpop.f32.mrf.mxu0
    %v2133 = vadd.f32 %v2120, %v2132
    %v2134 = vpop.f32.mrf.mxu0
    %2135 = vdwg.mxu0
    %2136 = vmatpush.bf16.msra.mxu0 %v1980
    %2137 = vmatpush.bf16.msra.mxu0 %v1978
    %2138 = vmatpush.bf16.msra.mxu0 %v1976
    %2139 = vmatpush.bf16.msra.mxu0 %v1974
    %2140 = vmatpush.bf16.msra.mxu0 %v1972
    %2141 = vmatpush.bf16.msra.mxu0 %v1970
    %2142 = vmatpush.bf16.msra.mxu0 %v1968
    %2143 = vmatpush.bf16.msra.mxu0 %v1966
    %2144 = vmatmul.bf16.gmra.mxu0 %v1653
    %v2145 = vpop.f32.mrf.mxu0
    %v2146 = vadd.f32 %v2133, %v2145
    %v2147 = vpop.f32.mrf.mxu0
    %2148 = vdwg.mxu0
    %v2149 = vadd.f32 %v2094, %v2146
    %2150 = vadd.xlane.f32.xlu0 %v2149
    %v2151 = vpop.xlane.xlu0 %2150
    %v2152 = vrcp.pop 256.0
    %v2153 = vmul.f32 256.0, %v2152
    %v2154 = vsub.f32 1.0, %v2153
    %v2155 = vmul.f32 %v2152, %v2154
    %v2156 = vadd.f32 %v2152, %v2155
    %vm2157 = vweird.f32 %v2152
    %v2158 = vsel %vm2157, %v2152, %v2156
    %v2159 = vmul.f32 %v2151, %v2158
    %v2160 = vsub.f32 %v2094, %v2159
    %v2161 = vsub.f32 %v2146, %v2159
    %v2162 = vmul.f32 %v2160, %v2160
    %v2163 = vmul.f32 %v2161, %v2161
    %v2164 = vadd.f32 %v2162, %v2163
    %2165 = vadd.xlane.f32.xlu0 %v2164
    %v2166 = vpop.xlane.xlu0 %2165
    %v2167 = vmul.f32 %v2166, %v2158
    %v2168 = vadd.f32 %v2167, 1e-05
    %v2169 = vrsqrt.pop %v2168
    %v2170 = vmul.f32 %v2169, %v2168
    %v2171 = vmul.f32 %v2170, %v2169
    %v2172 = vmul.f32 0.5, %v2171
    %v2173 = vsub.f32 1.5, %v2172
    %v2174 = vmul.f32 %v2169, %v2173
    %vm2175 = vweird.f32 %v2168
    %vm2176 = vweird.f32 %v2169
    %vm2177 = vmor %vm2175, %vm2176
    %v2178 = vsel %vm2177, %v2169, %v2174
    %v2179 = vmul.f32 %v2160, %v2178
    %v2180 = vmul.f32 %v2161, %v2178
    %s2181 = scalar_lea.vmem [#allocation3], 7
    %v2182 = vld [vmem:[%s2181] ss:$8 sm:$0x3]
    %v2184 = vperm.slane %v2182, 0
    %v2185 = vperm.slane %v2182, 1
    %v2188 = vmul.f32 %v2179, %v2184
    %v2189 = vmul.f32 %v2180, %v2185
    %s2190 = scalar_lea.vmem [#allocation3], 32
    %v2191 = vld [vmem:[%s2190] ss:$8 sm:$0x3]
    %v2193 = vperm.slane %v2191, 0
    %v2194 = vperm.slane %v2191, 1
    %v2197 = vadd.f32 %v2188, %v2193
    %v2198 = vadd.f32 %v2189, %v2194
    %v2199 = vmul.f32 %v2197, 0.5
    %v2200 = vmul.f32 %v2198, 0.5
    %v2201 = vtanh.pop %v2199
    %v2202 = vtanh.pop %v2200
    %v2203 = vmul.f32 %v2201, 0.5
    %v2204 = vmul.f32 %v2202, 0.5
    %v2205 = vadd.f32 %v2203, 0.5
    %v2206 = vadd.f32 %v2204, 0.5
    %v2207 = vmul.f32 %v2197, %v2205
    %v2208 = vmul.f32 %v2198, %v2206
    %v2209 = vpack.c.bf16 %v2207, %v2207
    %v2210 = vpack.c.bf16 %v2208, %v2208
    %v2211 = vld [vmem:[#allocation10] sm:$0xff]
    %v2212 = vld [vmem:[#allocation10 + $0x8] sm:$0xff]
    %v2213 = vld [vmem:[#allocation10 + $0x10] sm:$0xff]
    %v2214 = vld [vmem:[#allocation10 + $0x18] sm:$0xff]
    %v2215 = vld [vmem:[#allocation10 + $0x20] sm:$0xff]
    %v2216 = vld [vmem:[#allocation10 + $0x28] sm:$0xff]
    %v2217 = vld [vmem:[#allocation10 + $0x30] sm:$0xff]
    %v2218 = vld [vmem:[#allocation10 + $0x38] sm:$0xff]
    %v2219 = vld [vmem:[#allocation10 + $0x40] sm:$0xff]
    %v2220 = vld [vmem:[#allocation10 + $0x48] sm:$0xff]
    %v2221 = vld [vmem:[#allocation10 + $0x50] sm:$0xff]
    %v2222 = vld [vmem:[#allocation10 + $0x58] sm:$0xff]
    %v2223 = vld [vmem:[#allocation10 + $0x60] sm:$0xff]
    %v2224 = vld [vmem:[#allocation10 + $0x68] sm:$0xff]
    %v2225 = vld [vmem:[#allocation10 + $0x70] sm:$0xff]
    %v2226 = vld [vmem:[#allocation10 + $0x78] sm:$0xff]
    %v2227 = vld [vmem:[#allocation10 + $0x80] sm:$0xff]
    %v2228 = vld [vmem:[#allocation10 + $0x88] sm:$0xff]
    %v2229 = vld [vmem:[#allocation10 + $0x90] sm:$0xff]
    %v2230 = vld [vmem:[#allocation10 + $0x98] sm:$0xff]
    %v2231 = vld [vmem:[#allocation10 + $0xa0] sm:$0xff]
    %v2232 = vld [vmem:[#allocation10 + $0xa8] sm:$0xff]
    %v2233 = vld [vmem:[#allocation10 + $0xb0] sm:$0xff]
    %v2234 = vld [vmem:[#allocation10 + $0xb8] sm:$0xff]
    %v2235 = vld [vmem:[#allocation10 + $0xc0] sm:$0xff]
    %v2236 = vld [vmem:[#allocation10 + $0xc8] sm:$0xff]
    %v2237 = vld [vmem:[#allocation10 + $0xd0] sm:$0xff]
    %v2238 = vld [vmem:[#allocation10 + $0xd8] sm:$0xff]
    %v2239 = vld [vmem:[#allocation10 + $0xe0] sm:$0xff]
    %v2240 = vld [vmem:[#allocation10 + $0xe8] sm:$0xff]
    %v2241 = vld [vmem:[#allocation10 + $0xf0] sm:$0xff]
    %v2242 = vld [vmem:[#allocation10 + $0xf8] sm:$0xff]
    %s2243 = scalar_lea.vmem [#allocation3], 33
    %v2244 = vld [vmem:[%s2243] ss:$8 sm:$0x3]
    %v2246 = vperm.slane %v2244, 0
    %v2247 = vperm.slane %v2244, 1
    %v2282 = vunpack.c.l.b16 %v2211
    %v2283 = vunpack.c.h.b16 %v2211
    %v2284 = vunpack.c.l.b16 %v2212
    %v2285 = vunpack.c.h.b16 %v2212
    %v2286 = vunpack.c.l.b16 %v2213
    %v2287 = vunpack.c.h.b16 %v2213
    %v2288 = vunpack.c.l.b16 %v2214
    %v2289 = vunpack.c.h.b16 %v2214
    %v2290 = vunpack.c.l.b16 %v2215
    %v2291 = vunpack.c.h.b16 %v2215
    %v2292 = vunpack.c.l.b16 %v2216
    %v2293 = vunpack.c.h.b16 %v2216
    %v2294 = vunpack.c.l.b16 %v2217
    %v2295 = vunpack.c.h.b16 %v2217
    %v2296 = vunpack.c.l.b16 %v2218
    %v2297 = vunpack.c.h.b16 %v2218
    %v2298 = vunpack.c.l.b16 %v2219
    %v2299 = vunpack.c.h.b16 %v2219
    %v2300 = vunpack.c.l.b16 %v2220
    %v2301 = vunpack.c.h.b16 %v2220
    %v2302 = vunpack.c.l.b16 %v2221
    %v2303 = vunpack.c.h.b16 %v2221
    %v2304 = vunpack.c.l.b16 %v2222
    %v2305 = vunpack.c.h.b16 %v2222
    %v2306 = vunpack.c.l.b16 %v2223
    %v2307 = vunpack.c.h.b16 %v2223
    %v2308 = vunpack.c.l.b16 %v2224
    %v2309 = vunpack.c.h.b16 %v2224
    %v2310 = vunpack.c.l.b16 %v2225
    %v2311 = vunpack.c.h.b16 %v2225
    %v2312 = vunpack.c.l.b16 %v2226
    %v2313 = vunpack.c.h.b16 %v2226
    %v2314 = vunpack.c.l.b16 %v2227
    %v2315 = vunpack.c.h.b16 %v2227
    %v2316 = vunpack.c.l.b16 %v2228
    %v2317 = vunpack.c.h.b16 %v2228
    %v2318 = vunpack.c.l.b16 %v2229
    %v2319 = vunpack.c.h.b16 %v2229
    %v2320 = vunpack.c.l.b16 %v2230
    %v2321 = vunpack.c.h.b16 %v2230
    %v2322 = vunpack.c.l.b16 %v2231
    %v2323 = vunpack.c.h.b16 %v2231
    %v2324 = vunpack.c.l.b16 %v2232
    %v2325 = vunpack.c.h.b16 %v2232
    %v2326 = vunpack.c.l.b16 %v2233
    %v2327 = vunpack.c.h.b16 %v2233
    %v2328 = vunpack.c.l.b16 %v2234
    %v2329 = vunpack.c.h.b16 %v2234
    %v2330 = vunpack.c.l.b16 %v2235
    %v2331 = vunpack.c.h.b16 %v2235
    %v2332 = vunpack.c.l.b16 %v2236
    %v2333 = vunpack.c.h.b16 %v2236
    %v2334 = vunpack.c.l.b16 %v2237
    %v2335 = vunpack.c.h.b16 %v2237
    %v2336 = vunpack.c.l.b16 %v2238
    %v2337 = vunpack.c.h.b16 %v2238
    %v2338 = vunpack.c.l.b16 %v2239
    %v2339 = vunpack.c.h.b16 %v2239
    %v2340 = vunpack.c.l.b16 %v2240
    %v2341 = vunpack.c.h.b16 %v2240
    %v2342 = vunpack.c.l.b16 %v2241
    %v2343 = vunpack.c.h.b16 %v2241
    %v2344 = vunpack.c.l.b16 %v2242
    %v2345 = vunpack.c.h.b16 %v2242
    %v2346 = vpack.c.b16 %v2284, %v2282
    %v2347 = vpack.c.b16 %v2285, %v2283
    %v2348 = vpack.c.b16 %v2288, %v2286
    %v2349 = vpack.c.b16 %v2289, %v2287
    %v2350 = vpack.c.b16 %v2292, %v2290
    %v2351 = vpack.c.b16 %v2293, %v2291
    %v2352 = vpack.c.b16 %v2296, %v2294
    %v2353 = vpack.c.b16 %v2297, %v2295
    %v2354 = vpack.c.b16 %v2300, %v2298
    %v2355 = vpack.c.b16 %v2301, %v2299
    %v2356 = vpack.c.b16 %v2304, %v2302
    %v2357 = vpack.c.b16 %v2305, %v2303
    %v2358 = vpack.c.b16 %v2308, %v2306
    %v2359 = vpack.c.b16 %v2309, %v2307
    %v2360 = vpack.c.b16 %v2312, %v2310
    %v2361 = vpack.c.b16 %v2313, %v2311
    %v2362 = vpack.c.b16 %v2316, %v2314
    %v2363 = vpack.c.b16 %v2317, %v2315
    %v2364 = vpack.c.b16 %v2320, %v2318
    %v2365 = vpack.c.b16 %v2321, %v2319
    %v2366 = vpack.c.b16 %v2324, %v2322
    %v2367 = vpack.c.b16 %v2325, %v2323
    %v2368 = vpack.c.b16 %v2328, %v2326
    %v2369 = vpack.c.b16 %v2329, %v2327
    %v2370 = vpack.c.b16 %v2332, %v2330
    %v2371 = vpack.c.b16 %v2333, %v2331
    %v2372 = vpack.c.b16 %v2336, %v2334
    %v2373 = vpack.c.b16 %v2337, %v2335
    %v2374 = vpack.c.b16 %v2340, %v2338
    %v2375 = vpack.c.b16 %v2341, %v2339
    %v2376 = vpack.c.b16 %v2344, %v2342
    %v2377 = vpack.c.b16 %v2345, %v2343
    %2410 = vmatpush.bf16.msra.mxu0 %v2360
    %2411 = vmatpush.bf16.msra.mxu0 %v2358
    %2412 = vmatpush.bf16.msra.mxu0 %v2356
    %2413 = vmatpush.bf16.msra.mxu0 %v2354
    %2414 = vmatpush.bf16.msra.mxu0 %v2352
    %2415 = vmatpush.bf16.msra.mxu0 %v2350
    %2416 = vmatpush.bf16.msra.mxu0 %v2348
    %2417 = vmatpush.bf16.msra.mxu0 %v2346
    %2418 = vmatmul.bf16.gmra.mxu0 %v2209
    %v2419 = vpop.f32.mrf.mxu0
    %v2420 = vadd.f32 %v2246, %v2419
    %v2421 = vpop.f32.mrf.mxu0
    %2422 = vdwg.mxu0
    %2423 = vmatpush.bf16.msra.mxu0 %v2376
    %2424 = vmatpush.bf16.msra.mxu0 %v2374
    %2425 = vmatpush.bf16.msra.mxu0 %v2372
    %2426 = vmatpush.bf16.msra.mxu0 %v2370
    %2427 = vmatpush.bf16.msra.mxu0 %v2368
    %2428 = vmatpush.bf16.msra.mxu0 %v2366
    %2429 = vmatpush.bf16.msra.mxu0 %v2364
    %2430 = vmatpush.bf16.msra.mxu0 %v2362
    %2431 = vmatmul.bf16.gmra.mxu0 %v2210
    %v2432 = vpop.f32.mrf.mxu0
    %v2433 = vadd.f32 %v2420, %v2432
    %v2434 = vpop.f32.mrf.mxu0
    %2435 = vdwg.mxu0
    %2436 = vmatpush.bf16.msra.mxu0 %v2361
    %2437 = vmatpush.bf16.msra.mxu0 %v2359
    %2438 = vmatpush.bf16.msra.mxu0 %v2357
    %2439 = vmatpush.bf16.msra.mxu0 %v2355
    %2440 = vmatpush.bf16.msra.mxu0 %v2353
    %2441 = vmatpush.bf16.msra.mxu0 %v2351
    %2442 = vmatpush.bf16.msra.mxu0 %v2349
    %2443 = vmatpush.bf16.msra.mxu0 %v2347
    %2444 = vmatmul.bf16.gmra.mxu0 %v2209
    %v2445 = vpop.f32.mrf.mxu0
    %v2446 = vadd.f32 %v2247, %v2445
    %v2447 = vpop.f32.mrf.mxu0
    %2448 = vdwg.mxu0
    %2449 = vmatpush.bf16.msra.mxu0 %v2377
    %2450 = vmatpush.bf16.msra.mxu0 %v2375
    %2451 = vmatpush.bf16.msra.mxu0 %v2373
    %2452 = vmatpush.bf16.msra.mxu0 %v2371
    %2453 = vmatpush.bf16.msra.mxu0 %v2369
    %2454 = vmatpush.bf16.msra.mxu0 %v2367
    %2455 = vmatpush.bf16.msra.mxu0 %v2365
    %2456 = vmatpush.bf16.msra.mxu0 %v2363
    %2457 = vmatmul.bf16.gmra.mxu0 %v2210
    %v2458 = vpop.f32.mrf.mxu0
    %v2459 = vadd.f32 %v2446, %v2458
    %v2460 = vpop.f32.mrf.mxu0
    %2461 = vdwg.mxu0
    %v2462 = vadd.f32 %v2433, %v2459
    %2463 = vadd.xlane.f32.xlu0 %v2462
    %v2464 = vpop.xlane.xlu0 %2463
    %v2465 = vmul.f32 %v2464, %v2158
    %v2466 = vsub.f32 %v2433, %v2465
    %v2467 = vsub.f32 %v2459, %v2465
    %v2468 = vmul.f32 %v2466, %v2466
    %v2469 = vmul.f32 %v2467, %v2467
    %v2470 = vadd.f32 %v2468, %v2469
    %2471 = vadd.xlane.f32.xlu0 %v2470
    %v2472 = vpop.xlane.xlu0 %2471
    %v2473 = vmul.f32 %v2472, %v2158
    %v2474 = vadd.f32 %v2473, 1e-05
    %v2475 = vrsqrt.pop %v2474
    %v2476 = vmul.f32 %v2475, %v2474
    %v2477 = vmul.f32 %v2476, %v2475
    %v2478 = vmul.f32 0.5, %v2477
    %v2479 = vsub.f32 1.5, %v2478
    %v2480 = vmul.f32 %v2475, %v2479
    %vm2481 = vweird.f32 %v2474
    %vm2482 = vweird.f32 %v2475
    %vm2483 = vmor %vm2481, %vm2482
    %v2484 = vsel %vm2483, %v2475, %v2480
    %v2485 = vmul.f32 %v2466, %v2484
    %v2486 = vmul.f32 %v2467, %v2484
    %s2487 = scalar_lea.vmem [#allocation3], 34
    %v2488 = vld [vmem:[%s2487] ss:$8 sm:$0x3]
    %v2490 = vperm.slane %v2488, 0
    %v2491 = vperm.slane %v2488, 1
    %v2494 = vmul.f32 %v2485, %v2490
    %v2495 = vmul.f32 %v2486, %v2491
    %s2496 = scalar_lea.vmem [#allocation3], 35
    %v2497 = vld [vmem:[%s2496] ss:$8 sm:$0x3]
    %v2499 = vperm.slane %v2497, 0
    %v2500 = vperm.slane %v2497, 1
    %v2503 = vadd.f32 %v2494, %v2499
    %v2504 = vadd.f32 %v2495, %v2500
    %v2505 = vmul.f32 %v2503, 0.5
    %v2506 = vmul.f32 %v2504, 0.5
    %v2507 = vtanh.pop %v2505
    %v2508 = vtanh.pop %v2506
    %v2509 = vmul.f32 %v2507, 0.5
    %v2510 = vmul.f32 %v2508, 0.5
    %v2511 = vadd.f32 %v2509, 0.5
    %v2512 = vadd.f32 %v2510, 0.5
    %v2513 = vmul.f32 %v2503, %v2511
    %v2514 = vmul.f32 %v2504, %v2512
    %v2515 = vadd.f32 %v2207, %v2513
    %v2516 = vadd.f32 %v2208, %v2514
    %v2517 = vpack.c.bf16 %v2515, %v2515
    %v2518 = vpack.c.bf16 %v2516, %v2516
    %v2519 = vld [vmem:[#allocation11] sm:$0xff]
    %v2520 = vld [vmem:[#allocation11 + $0x8] sm:$0xff]
    %v2521 = vld [vmem:[#allocation11 + $0x10] sm:$0xff]
    %v2522 = vld [vmem:[#allocation11 + $0x18] sm:$0xff]
    %v2523 = vld [vmem:[#allocation11 + $0x20] sm:$0xff]
    %v2524 = vld [vmem:[#allocation11 + $0x28] sm:$0xff]
    %v2525 = vld [vmem:[#allocation11 + $0x30] sm:$0xff]
    %v2526 = vld [vmem:[#allocation11 + $0x38] sm:$0xff]
    %v2527 = vld [vmem:[#allocation11 + $0x40] sm:$0xff]
    %v2528 = vld [vmem:[#allocation11 + $0x48] sm:$0xff]
    %v2529 = vld [vmem:[#allocation11 + $0x50] sm:$0xff]
    %v2530 = vld [vmem:[#allocation11 + $0x58] sm:$0xff]
    %v2531 = vld [vmem:[#allocation11 + $0x60] sm:$0xff]
    %v2532 = vld [vmem:[#allocation11 + $0x68] sm:$0xff]
    %v2533 = vld [vmem:[#allocation11 + $0x70] sm:$0xff]
    %v2534 = vld [vmem:[#allocation11 + $0x78] sm:$0xff]
    %v2535 = vld [vmem:[#allocation11 + $0x80] sm:$0xff]
    %v2536 = vld [vmem:[#allocation11 + $0x88] sm:$0xff]
    %v2537 = vld [vmem:[#allocation11 + $0x90] sm:$0xff]
    %v2538 = vld [vmem:[#allocation11 + $0x98] sm:$0xff]
    %v2539 = vld [vmem:[#allocation11 + $0xa0] sm:$0xff]
    %v2540 = vld [vmem:[#allocation11 + $0xa8] sm:$0xff]
    %v2541 = vld [vmem:[#allocation11 + $0xb0] sm:$0xff]
    %v2542 = vld [vmem:[#allocation11 + $0xb8] sm:$0xff]
    %v2543 = vld [vmem:[#allocation11 + $0xc0] sm:$0xff]
    %v2544 = vld [vmem:[#allocation11 + $0xc8] sm:$0xff]
    %v2545 = vld [vmem:[#allocation11 + $0xd0] sm:$0xff]
    %v2546 = vld [vmem:[#allocation11 + $0xd8] sm:$0xff]
    %v2547 = vld [vmem:[#allocation11 + $0xe0] sm:$0xff]
    %v2548 = vld [vmem:[#allocation11 + $0xe8] sm:$0xff]
    %v2549 = vld [vmem:[#allocation11 + $0xf0] sm:$0xff]
    %v2550 = vld [vmem:[#allocation11 + $0xf8] sm:$0xff]
    %s2551 = scalar_lea.vmem [#allocation3], 36
    %v2552 = vld [vmem:[%s2551] ss:$8 sm:$0x3]
    %v2554 = vperm.slane %v2552, 0
    %v2555 = vperm.slane %v2552, 1
    %v2590 = vunpack.c.l.b16 %v2519
    %v2591 = vunpack.c.h.b16 %v2519
    %v2592 = vunpack.c.l.b16 %v2520
    %v2593 = vunpack.c.h.b16 %v2520
    %v2594 = vunpack.c.l.b16 %v2521
    %v2595 = vunpack.c.h.b16 %v2521
    %v2596 = vunpack.c.l.b16 %v2522
    %v2597 = vunpack.c.h.b16 %v2522
    %v2598 = vunpack.c.l.b16 %v2523
    %v2599 = vunpack.c.h.b16 %v2523
    %v2600 = vunpack.c.l.b16 %v2524
    %v2601 = vunpack.c.h.b16 %v2524
    %v2602 = vunpack.c.l.b16 %v2525
    %v2603 = vunpack.c.h.b16 %v2525
    %v2604 = vunpack.c.l.b16 %v2526
    %v2605 = vunpack.c.h.b16 %v2526
    %v2606 = vunpack.c.l.b16 %v2527
    %v2607 = vunpack.c.h.b16 %v2527
    %v2608 = vunpack.c.l.b16 %v2528
    %v2609 = vunpack.c.h.b16 %v2528
    %v2610 = vunpack.c.l.b16 %v2529
    %v2611 = vunpack.c.h.b16 %v2529
    %v2612 = vunpack.c.l.b16 %v2530
    %v2613 = vunpack.c.h.b16 %v2530
    %v2614 = vunpack.c.l.b16 %v2531
    %v2615 = vunpack.c.h.b16 %v2531
    %v2616 = vunpack.c.l.b16 %v2532
    %v2617 = vunpack.c.h.b16 %v2532
    %v2618 = vunpack.c.l.b16 %v2533
    %v2619 = vunpack.c.h.b16 %v2533
    %v2620 = vunpack.c.l.b16 %v2534
    %v2621 = vunpack.c.h.b16 %v2534
    %v2622 = vunpack.c.l.b16 %v2535
    %v2623 = vunpack.c.h.b16 %v2535
    %v2624 = vunpack.c.l.b16 %v2536
    %v2625 = vunpack.c.h.b16 %v2536
    %v2626 = vunpack.c.l.b16 %v2537
    %v2627 = vunpack.c.h.b16 %v2537
    %v2628 = vunpack.c.l.b16 %v2538
    %v2629 = vunpack.c.h.b16 %v2538
    %v2630 = vunpack.c.l.b16 %v2539
    %v2631 = vunpack.c.h.b16 %v2539
    %v2632 = vunpack.c.l.b16 %v2540
    %v2633 = vunpack.c.h.b16 %v2540
    %v2634 = vunpack.c.l.b16 %v2541
    %v2635 = vunpack.c.h.b16 %v2541
    %v2636 = vunpack.c.l.b16 %v2542
    %v2637 = vunpack.c.h.b16 %v2542
    %v2638 = vunpack.c.l.b16 %v2543
    %v2639 = vunpack.c.h.b16 %v2543
    %v2640 = vunpack.c.l.b16 %v2544
    %v2641 = vunpack.c.h.b16 %v2544
    %v2642 = vunpack.c.l.b16 %v2545
    %v2643 = vunpack.c.h.b16 %v2545
    %v2644 = vunpack.c.l.b16 %v2546
    %v2645 = vunpack.c.h.b16 %v2546
    %v2646 = vunpack.c.l.b16 %v2547
    %v2647 = vunpack.c.h.b16 %v2547
    %v2648 = vunpack.c.l.b16 %v2548
    %v2649 = vunpack.c.h.b16 %v2548
    %v2650 = vunpack.c.l.b16 %v2549
    %v2651 = vunpack.c.h.b16 %v2549
    %v2652 = vunpack.c.l.b16 %v2550
    %v2653 = vunpack.c.h.b16 %v2550
    %v2654 = vpack.c.b16 %v2592, %v2590
    %v2655 = vpack.c.b16 %v2593, %v2591
    %v2656 = vpack.c.b16 %v2596, %v2594
    %v2657 = vpack.c.b16 %v2597, %v2595
    %v2658 = vpack.c.b16 %v2600, %v2598
    %v2659 = vpack.c.b16 %v2601, %v2599
    %v2660 = vpack.c.b16 %v2604, %v2602
    %v2661 = vpack.c.b16 %v2605, %v2603
    %v2662 = vpack.c.b16 %v2608, %v2606
    %v2663 = vpack.c.b16 %v2609, %v2607
    %v2664 = vpack.c.b16 %v2612, %v2610
    %v2665 = vpack.c.b16 %v2613, %v2611
    %v2666 = vpack.c.b16 %v2616, %v2614
    %v2667 = vpack.c.b16 %v2617, %v2615
    %v2668 = vpack.c.b16 %v2620, %v2618
    %v2669 = vpack.c.b16 %v2621, %v2619
    %v2670 = vpack.c.b16 %v2624, %v2622
    %v2671 = vpack.c.b16 %v2625, %v2623
    %v2672 = vpack.c.b16 %v2628, %v2626
    %v2673 = vpack.c.b16 %v2629, %v2627
    %v2674 = vpack.c.b16 %v2632, %v2630
    %v2675 = vpack.c.b16 %v2633, %v2631
    %v2676 = vpack.c.b16 %v2636, %v2634
    %v2677 = vpack.c.b16 %v2637, %v2635
    %v2678 = vpack.c.b16 %v2640, %v2638
    %v2679 = vpack.c.b16 %v2641, %v2639
    %v2680 = vpack.c.b16 %v2644, %v2642
    %v2681 = vpack.c.b16 %v2645, %v2643
    %v2682 = vpack.c.b16 %v2648, %v2646
    %v2683 = vpack.c.b16 %v2649, %v2647
    %v2684 = vpack.c.b16 %v2652, %v2650
    %v2685 = vpack.c.b16 %v2653, %v2651
    %2718 = vmatpush.bf16.msra.mxu0 %v2668
    %2719 = vmatpush.bf16.msra.mxu0 %v2666
    %2720 = vmatpush.bf16.msra.mxu0 %v2664
    %2721 = vmatpush.bf16.msra.mxu0 %v2662
    %2722 = vmatpush.bf16.msra.mxu0 %v2660
    %2723 = vmatpush.bf16.msra.mxu0 %v2658
    %2724 = vmatpush.bf16.msra.mxu0 %v2656
    %2725 = vmatpush.bf16.msra.mxu0 %v2654
    %2726 = vmatmul.bf16.gmra.mxu0 %v2517
    %v2727 = vpop.f32.mrf.mxu0
    %v2728 = vadd.f32 %v2554, %v2727
    %v2729 = vpop.f32.mrf.mxu0
    %2730 = vdwg.mxu0
    %2731 = vmatpush.bf16.msra.mxu0 %v2684
    %2732 = vmatpush.bf16.msra.mxu0 %v2682
    %2733 = vmatpush.bf16.msra.mxu0 %v2680
    %2734 = vmatpush.bf16.msra.mxu0 %v2678
    %2735 = vmatpush.bf16.msra.mxu0 %v2676
    %2736 = vmatpush.bf16.msra.mxu0 %v2674
    %2737 = vmatpush.bf16.msra.mxu0 %v2672
    %2738 = vmatpush.bf16.msra.mxu0 %v2670
    %2739 = vmatmul.bf16.gmra.mxu0 %v2518
    %v2740 = vpop.f32.mrf.mxu0
    %v2741 = vadd.f32 %v2728, %v2740
    %v2742 = vpop.f32.mrf.mxu0
    %2743 = vdwg.mxu0
    %2744 = vmatpush.bf16.msra.mxu0 %v2669
    %2745 = vmatpush.bf16.msra.mxu0 %v2667
    %2746 = vmatpush.bf16.msra.mxu0 %v2665
    %2747 = vmatpush.bf16.msra.mxu0 %v2663
    %2748 = vmatpush.bf16.msra.mxu0 %v2661
    %2749 = vmatpush.bf16.msra.mxu0 %v2659
    %2750 = vmatpush.bf16.msra.mxu0 %v2657
    %2751 = vmatpush.bf16.msra.mxu0 %v2655
    %2752 = vmatmul.bf16.gmra.mxu0 %v2517
    %v2753 = vpop.f32.mrf.mxu0
    %v2754 = vadd.f32 %v2555, %v2753
    %v2755 = vpop.f32.mrf.mxu0
    %2756 = vdwg.mxu0
    %2757 = vmatpush.bf16.msra.mxu0 %v2685
    %2758 = vmatpush.bf16.msra.mxu0 %v2683
    %2759 = vmatpush.bf16.msra.mxu0 %v2681
    %2760 = vmatpush.bf16.msra.mxu0 %v2679
    %2761 = vmatpush.bf16.msra.mxu0 %v2677
    %2762 = vmatpush.bf16.msra.mxu0 %v2675
    %2763 = vmatpush.bf16.msra.mxu0 %v2673
    %2764 = vmatpush.bf16.msra.mxu0 %v2671
    %2765 = vmatmul.bf16.gmra.mxu0 %v2518
    %v2766 = vpop.f32.mrf.mxu0
    %v2767 = vadd.f32 %v2754, %v2766
    %v2768 = vpop.f32.mrf.mxu0
    %2769 = vdwg.mxu0
    %v2770 = vmul.f32 %v2767, 0.5
    %v2771 = vmul.f32 %v2770, 1.442695
    %v2772 = vpow.pop %v2771
    %v2773 = vunpack.c.l.bf16 %v222
    %v2774 = vmul.f32 %v2773, %v2772
    %v2775 = vstv %s223
    %v2776 = vmul.f32 %v2774, %v2775
    %v2777 = vadd.f32 %v2741, %v2776
    %v2778 = vpack.c.bf16 %v2777, %v2777
    %v2779 = vld [vmem:[#allocation13] sm:$0xff]
    %v2780 = vld [vmem:[#allocation13 + $0x8] sm:$0xff]
    %v2781 = vld [vmem:[#allocation13 + $0x10] sm:$0xff]
    %v2782 = vld [vmem:[#allocation13 + $0x18] sm:$0xff]
    %v2783 = vld [vmem:[#allocation13 + $0x20] sm:$0xff]
    %v2784 = vld [vmem:[#allocation13 + $0x28] sm:$0xff]
    %v2785 = vld [vmem:[#allocation13 + $0x30] sm:$0xff]
    %v2786 = vld [vmem:[#allocation13 + $0x38] sm:$0xff]
    %v2787 = vld [vmem:[#allocation13 + $0x40] sm:$0xff]
    %v2788 = vld [vmem:[#allocation13 + $0x48] sm:$0xff]
    %v2789 = vld [vmem:[#allocation13 + $0x50] sm:$0xff]
    %v2790 = vld [vmem:[#allocation13 + $0x58] sm:$0xff]
    %v2791 = vld [vmem:[#allocation13 + $0x60] sm:$0xff]
    %v2792 = vld [vmem:[#allocation13 + $0x68] sm:$0xff]
    %v2793 = vld [vmem:[#allocation13 + $0x70] sm:$0xff]
    %v2794 = vld [vmem:[#allocation13 + $0x78] sm:$0xff]
    %s2795 = scalar_lea.vmem [#allocation3], 37
    %v2796 = vld [vmem:[%s2795] ss:$8 sm:$0x3]
    %v2798 = vperm.slane %v2796, 0
    %v2799 = vperm.slane %v2796, 1
    %v2818 = vunpack.c.l.b16 %v2779
    %v2819 = vunpack.c.h.b16 %v2779
    %v2820 = vunpack.c.l.b16 %v2780
    %v2821 = vunpack.c.h.b16 %v2780
    %v2822 = vunpack.c.l.b16 %v2781
    %v2823 = vunpack.c.h.b16 %v2781
    %v2824 = vunpack.c.l.b16 %v2782
    %v2825 = vunpack.c.h.b16 %v2782
    %v2826 = vunpack.c.l.b16 %v2783
    %v2827 = vunpack.c.h.b16 %v2783
    %v2828 = vunpack.c.l.b16 %v2784
    %v2829 = vunpack.c.h.b16 %v2784
    %v2830 = vunpack.c.l.b16 %v2785
    %v2831 = vunpack.c.h.b16 %v2785
    %v2832 = vunpack.c.l.b16 %v2786
    %v2833 = vunpack.c.h.b16 %v2786
    %v2834 = vunpack.c.l.b16 %v2787
    %v2835 = vunpack.c.h.b16 %v2787
    %v2836 = vunpack.c.l.b16 %v2788
    %v2837 = vunpack.c.h.b16 %v2788
    %v2838 = vunpack.c.l.b16 %v2789
    %v2839 = vunpack.c.h.b16 %v2789
    %v2840 = vunpack.c.l.b16 %v2790
    %v2841 = vunpack.c.h.b16 %v2790
    %v2842 = vunpack.c.l.b16 %v2791
    %v2843 = vunpack.c.h.b16 %v2791
    %v2844 = vunpack.c.l.b16 %v2792
    %v2845 = vunpack.c.h.b16 %v2792
    %v2846 = vunpack.c.l.b16 %v2793
    %v2847 = vunpack.c.h.b16 %v2793
    %v2848 = vunpack.c.l.b16 %v2794
    %v2849 = vunpack.c.h.b16 %v2794
    %v2850 = vpack.c.b16 %v2820, %v2818
    %v2851 = vpack.c.b16 %v2821, %v2819
    %v2852 = vpack.c.b16 %v2824, %v2822
    %v2853 = vpack.c.b16 %v2825, %v2823
    %v2854 = vpack.c.b16 %v2828, %v2826
    %v2855 = vpack.c.b16 %v2829, %v2827
    %v2856 = vpack.c.b16 %v2832, %v2830
    %v2857 = vpack.c.b16 %v2833, %v2831
    %v2858 = vpack.c.b16 %v2836, %v2834
    %v2859 = vpack.c.b16 %v2837, %v2835
    %v2860 = vpack.c.b16 %v2840, %v2838
    %v2861 = vpack.c.b16 %v2841, %v2839
    %v2862 = vpack.c.b16 %v2844, %v2842
    %v2863 = vpack.c.b16 %v2845, %v2843
    %v2864 = vpack.c.b16 %v2848, %v2846
    %v2865 = vpack.c.b16 %v2849, %v2847
    %2882 = vmatpush.bf16.msra.mxu0 %v2864
    %2883 = vmatpush.bf16.msra.mxu0 %v2862
    %2884 = vmatpush.bf16.msra.mxu0 %v2860
    %2885 = vmatpush.bf16.msra.mxu0 %v2858
    %2886 = vmatpush.bf16.msra.mxu0 %v2856
    %2887 = vmatpush.bf16.msra.mxu0 %v2854
    %2888 = vmatpush.bf16.msra.mxu0 %v2852
    %2889 = vmatpush.bf16.msra.mxu0 %v2850
    %2890 = vmatmul.bf16.gmra.mxu0 %v2778
    %v2891 = vpop.f32.mrf.mxu0
    %v2892 = vadd.f32 %v2798, %v2891
    %v2893 = vpop.f32.mrf.mxu0
    %2894 = vdwg.mxu0
    %2895 = vmatpush.bf16.msra.mxu0 %v2865
    %2896 = vmatpush.bf16.msra.mxu0 %v2863
    %2897 = vmatpush.bf16.msra.mxu0 %v2861
    %2898 = vmatpush.bf16.msra.mxu0 %v2859
    %2899 = vmatpush.bf16.msra.mxu0 %v2857
    %2900 = vmatpush.bf16.msra.mxu0 %v2855
    %2901 = vmatpush.bf16.msra.mxu0 %v2853
    %2902 = vmatpush.bf16.msra.mxu0 %v2851
    %2903 = vmatmul.bf16.gmra.mxu0 %v2778
    %v2904 = vpop.f32.mrf.mxu0
    %v2905 = vadd.f32 %v2799, %v2904
    %v2906 = vpop.f32.mrf.mxu0
    %2907 = vdwg.mxu0
    %v2908 = vadd.f32 %v2892, %v2905
    %2909 = vadd.xlane.f32.xlu0 %v2908
    %v2910 = vpop.xlane.xlu0 %2909
    %v2911 = vmul.f32 %v2910, %v2158
    %v2912 = vsub.f32 %v2892, %v2911
    %v2913 = vsub.f32 %v2905, %v2911
    %v2914 = vmul.f32 %v2912, %v2912
    %v2915 = vmul.f32 %v2913, %v2913
    %v2916 = vadd.f32 %v2914, %v2915
    %2917 = vadd.xlane.f32.xlu0 %v2916
    %v2918 = vpop.xlane.xlu0 %2917
    %v2919 = vmul.f32 %v2918, %v2158
    %v2920 = vadd.f32 %v2919, 1e-05
    %v2921 = vrsqrt.pop %v2920
    %v2922 = vmul.f32 %v2921, %v2920
    %v2923 = vmul.f32 %v2922, %v2921
    %v2924 = vmul.f32 0.5, %v2923
    %v2925 = vsub.f32 1.5, %v2924
    %v2926 = vmul.f32 %v2921, %v2925
    %vm2927 = vweird.f32 %v2920
    %vm2928 = vweird.f32 %v2921
    %vm2929 = vmor %vm2927, %vm2928
    %v2930 = vsel %vm2929, %v2921, %v2926
    %v2931 = vmul.f32 %v2912, %v2930
    %v2932 = vmul.f32 %v2913, %v2930
    %s2933 = scalar_lea.vmem [#allocation3], 38
    %v2934 = vld [vmem:[%s2933] ss:$8 sm:$0x3]
    %v2936 = vperm.slane %v2934, 0
    %v2937 = vperm.slane %v2934, 1
    %v2940 = vmul.f32 %v2931, %v2936
    %v2941 = vmul.f32 %v2932, %v2937
    %s2942 = scalar_lea.vmem [#allocation3], 39
    %v2943 = vld [vmem:[%s2942] ss:$8 sm:$0x3]
    %v2945 = vperm.slane %v2943, 0
    %v2946 = vperm.slane %v2943, 1
    %v2949 = vadd.f32 %v2940, %v2945
    %v2950 = vadd.f32 %v2941, %v2946
    %v2951 = vmul.f32 %v2949, 0.5
    %v2952 = vmul.f32 %v2950, 0.5
    %v2953 = vtanh.pop %v2951
    %v2954 = vtanh.pop %v2952
    %v2955 = vmul.f32 %v2953, 0.5
    %v2956 = vmul.f32 %v2954, 0.5
    %v2957 = vadd.f32 %v2955, 0.5
    %v2958 = vadd.f32 %v2956, 0.5
    %v2959 = vmul.f32 %v2949, %v2957
    %v2960 = vmul.f32 %v2950, %v2958
    %v2961 = vpack.c.bf16 %v2959, %v2959
    %v2962 = vpack.c.bf16 %v2960, %v2960
    %v2963 = vld [vmem:[#allocation14] sm:$0xff]
    %v2964 = vld [vmem:[#allocation14 + $0x8] sm:$0xff]
    %v2965 = vld [vmem:[#allocation14 + $0x10] sm:$0xff]
    %v2966 = vld [vmem:[#allocation14 + $0x18] sm:$0xff]
    %v2967 = vld [vmem:[#allocation14 + $0x20] sm:$0xff]
    %v2968 = vld [vmem:[#allocation14 + $0x28] sm:$0xff]
    %v2969 = vld [vmem:[#allocation14 + $0x30] sm:$0xff]
    %v2970 = vld [vmem:[#allocation14 + $0x38] sm:$0xff]
    %v2971 = vld [vmem:[#allocation14 + $0x40] sm:$0xff]
    %v2972 = vld [vmem:[#allocation14 + $0x48] sm:$0xff]
    %v2973 = vld [vmem:[#allocation14 + $0x50] sm:$0xff]
    %v2974 = vld [vmem:[#allocation14 + $0x58] sm:$0xff]
    %v2975 = vld [vmem:[#allocation14 + $0x60] sm:$0xff]
    %v2976 = vld [vmem:[#allocation14 + $0x68] sm:$0xff]
    %v2977 = vld [vmem:[#allocation14 + $0x70] sm:$0xff]
    %v2978 = vld [vmem:[#allocation14 + $0x78] sm:$0xff]
    %v2979 = vld [vmem:[#allocation14 + $0x80] sm:$0xff]
    %v2980 = vld [vmem:[#allocation14 + $0x88] sm:$0xff]
    %v2981 = vld [vmem:[#allocation14 + $0x90] sm:$0xff]
    %v2982 = vld [vmem:[#allocation14 + $0x98] sm:$0xff]
    %v2983 = vld [vmem:[#allocation14 + $0xa0] sm:$0xff]
    %v2984 = vld [vmem:[#allocation14 + $0xa8] sm:$0xff]
    %v2985 = vld [vmem:[#allocation14 + $0xb0] sm:$0xff]
    %v2986 = vld [vmem:[#allocation14 + $0xb8] sm:$0xff]
    %v2987 = vld [vmem:[#allocation14 + $0xc0] sm:$0xff]
    %v2988 = vld [vmem:[#allocation14 + $0xc8] sm:$0xff]
    %v2989 = vld [vmem:[#allocation14 + $0xd0] sm:$0xff]
    %v2990 = vld [vmem:[#allocation14 + $0xd8] sm:$0xff]
    %v2991 = vld [vmem:[#allocation14 + $0xe0] sm:$0xff]
    %v2992 = vld [vmem:[#allocation14 + $0xe8] sm:$0xff]
    %v2993 = vld [vmem:[#allocation14 + $0xf0] sm:$0xff]
    %v2994 = vld [vmem:[#allocation14 + $0xf8] sm:$0xff]
    %s2995 = scalar_lea.vmem [#allocation3], 64
    %v2996 = vld [vmem:[%s2995] ss:$8 sm:$0x3]
    %v2998 = vperm.slane %v2996, 0
    %v2999 = vperm.slane %v2996, 1
    %v3034 = vunpack.c.l.b16 %v2963
    %v3035 = vunpack.c.h.b16 %v2963
    %v3036 = vunpack.c.l.b16 %v2964
    %v3037 = vunpack.c.h.b16 %v2964
    %v3038 = vunpack.c.l.b16 %v2965
    %v3039 = vunpack.c.h.b16 %v2965
    %v3040 = vunpack.c.l.b16 %v2966
    %v3041 = vunpack.c.h.b16 %v2966
    %v3042 = vunpack.c.l.b16 %v2967
    %v3043 = vunpack.c.h.b16 %v2967
    %v3044 = vunpack.c.l.b16 %v2968
    %v3045 = vunpack.c.h.b16 %v2968
    %v3046 = vunpack.c.l.b16 %v2969
    %v3047 = vunpack.c.h.b16 %v2969
    %v3048 = vunpack.c.l.b16 %v2970
    %v3049 = vunpack.c.h.b16 %v2970
    %v3050 = vunpack.c.l.b16 %v2971
    %v3051 = vunpack.c.h.b16 %v2971
    %v3052 = vunpack.c.l.b16 %v2972
    %v3053 = vunpack.c.h.b16 %v2972
    %v3054 = vunpack.c.l.b16 %v2973
    %v3055 = vunpack.c.h.b16 %v2973
    %v3056 = vunpack.c.l.b16 %v2974
    %v3057 = vunpack.c.h.b16 %v2974
    %v3058 = vunpack.c.l.b16 %v2975
    %v3059 = vunpack.c.h.b16 %v2975
    %v3060 = vunpack.c.l.b16 %v2976
    %v3061 = vunpack.c.h.b16 %v2976
    %v3062 = vunpack.c.l.b16 %v2977
    %v3063 = vunpack.c.h.b16 %v2977
    %v3064 = vunpack.c.l.b16 %v2978
    %v3065 = vunpack.c.h.b16 %v2978
    %v3066 = vunpack.c.l.b16 %v2979
    %v3067 = vunpack.c.h.b16 %v2979
    %v3068 = vunpack.c.l.b16 %v2980
    %v3069 = vunpack.c.h.b16 %v2980
    %v3070 = vunpack.c.l.b16 %v2981
    %v3071 = vunpack.c.h.b16 %v2981
    %v3072 = vunpack.c.l.b16 %v2982
    %v3073 = vunpack.c.h.b16 %v2982
    %v3074 = vunpack.c.l.b16 %v2983
    %v3075 = vunpack.c.h.b16 %v2983
    %v3076 = vunpack.c.l.b16 %v2984
    %v3077 = vunpack.c.h.b16 %v2984
    %v3078 = vunpack.c.l.b16 %v2985
    %v3079 = vunpack.c.h.b16 %v2985
    %v3080 = vunpack.c.l.b16 %v2986
    %v3081 = vunpack.c.h.b16 %v2986
    %v3082 = vunpack.c.l.b16 %v2987
    %v3083 = vunpack.c.h.b16 %v2987
    %v3084 = vunpack.c.l.b16 %v2988
    %v3085 = vunpack.c.h.b16 %v2988
    %v3086 = vunpack.c.l.b16 %v2989
    %v3087 = vunpack.c.h.b16 %v2989
    %v3088 = vunpack.c.l.b16 %v2990
    %v3089 = vunpack.c.h.b16 %v2990
    %v3090 = vunpack.c.l.b16 %v2991
    %v3091 = vunpack.c.h.b16 %v2991
    %v3092 = vunpack.c.l.b16 %v2992
    %v3093 = vunpack.c.h.b16 %v2992
    %v3094 = vunpack.c.l.b16 %v2993
    %v3095 = vunpack.c.h.b16 %v2993
    %v3096 = vunpack.c.l.b16 %v2994
    %v3097 = vunpack.c.h.b16 %v2994
    %v3098 = vpack.c.b16 %v3036, %v3034
    %v3099 = vpack.c.b16 %v3037, %v3035
    %v3100 = vpack.c.b16 %v3040, %v3038
    %v3101 = vpack.c.b16 %v3041, %v3039
    %v3102 = vpack.c.b16 %v3044, %v3042
    %v3103 = vpack.c.b16 %v3045, %v3043
    %v3104 = vpack.c.b16 %v3048, %v3046
    %v3105 = vpack.c.b16 %v3049, %v3047
    %v3106 = vpack.c.b16 %v3052, %v3050
    %v3107 = vpack.c.b16 %v3053, %v3051
    %v3108 = vpack.c.b16 %v3056, %v3054
    %v3109 = vpack.c.b16 %v3057, %v3055
    %v3110 = vpack.c.b16 %v3060, %v3058
    %v3111 = vpack.c.b16 %v3061, %v3059
    %v3112 = vpack.c.b16 %v3064, %v3062
    %v3113 = vpack.c.b16 %v3065, %v3063
    %v3114 = vpack.c.b16 %v3068, %v3066
    %v3115 = vpack.c.b16 %v3069, %v3067
    %v3116 = vpack.c.b16 %v3072, %v3070
    %v3117 = vpack.c.b16 %v3073, %v3071
    %v3118 = vpack.c.b16 %v3076, %v3074
    %v3119 = vpack.c.b16 %v3077, %v3075
    %v3120 = vpack.c.b16 %v3080, %v3078
    %v3121 = vpack.c.b16 %v3081, %v3079
    %v3122 = vpack.c.b16 %v3084, %v3082
    %v3123 = vpack.c.b16 %v3085, %v3083
    %v3124 = vpack.c.b16 %v3088, %v3086
    %v3125 = vpack.c.b16 %v3089, %v3087
    %v3126 = vpack.c.b16 %v3092, %v3090
    %v3127 = vpack.c.b16 %v3093, %v3091
    %v3128 = vpack.c.b16 %v3096, %v3094
    %v3129 = vpack.c.b16 %v3097, %v3095
    %3162 = vmatpush.bf16.msra.mxu0 %v3112
    %3163 = vmatpush.bf16.msra.mxu0 %v3110
    %3164 = vmatpush.bf16.msra.mxu0 %v3108
    %3165 = vmatpush.bf16.msra.mxu0 %v3106
    %3166 = vmatpush.bf16.msra.mxu0 %v3104
    %3167 = vmatpush.bf16.msra.mxu0 %v3102
    %3168 = vmatpush.bf16.msra.mxu0 %v3100
    %3169 = vmatpush.bf16.msra.mxu0 %v3098
    %3170 = vmatmul.bf16.gmra.mxu0 %v2961
    %v3171 = vpop.f32.mrf.mxu0
    %v3172 = vadd.f32 %v2998, %v3171
    %v3173 = vpop.f32.mrf.mxu0
    %3174 = vdwg.mxu0
    %3175 = vmatpush.bf16.msra.mxu0 %v3128
    %3176 = vmatpush.bf16.msra.mxu0 %v3126
    %3177 = vmatpush.bf16.msra.mxu0 %v3124
    %3178 = vmatpush.bf16.msra.mxu0 %v3122
    %3179 = vmatpush.bf16.msra.mxu0 %v3120
    %3180 = vmatpush.bf16.msra.mxu0 %v3118
    %3181 = vmatpush.bf16.msra.mxu0 %v3116
    %3182 = vmatpush.bf16.msra.mxu0 %v3114
    %3183 = vmatmul.bf16.gmra.mxu0 %v2962
    %v3184 = vpop.f32.mrf.mxu0
    %v3185 = vadd.f32 %v3172, %v3184
    %v3186 = vpop.f32.mrf.mxu0
    %3187 = vdwg.mxu0
    %3188 = vmatpush.bf16.msra.mxu0 %v3113
    %3189 = vmatpush.bf16.msra.mxu0 %v3111
    %3190 = vmatpush.bf16.msra.mxu0 %v3109
    %3191 = vmatpush.bf16.msra.mxu0 %v3107
    %3192 = vmatpush.bf16.msra.mxu0 %v3105
    %3193 = vmatpush.bf16.msra.mxu0 %v3103
    %3194 = vmatpush.bf16.msra.mxu0 %v3101
    %3195 = vmatpush.bf16.msra.mxu0 %v3099
    %3196 = vmatmul.bf16.gmra.mxu0 %v2961
    %v3197 = vpop.f32.mrf.mxu0
    %v3198 = vadd.f32 %v2999, %v3197
    %v3199 = vpop.f32.mrf.mxu0
    %3200 = vdwg.mxu0
    %3201 = vmatpush.bf16.msra.mxu0 %v3129
    %3202 = vmatpush.bf16.msra.mxu0 %v3127
    %3203 = vmatpush.bf16.msra.mxu0 %v3125
    %3204 = vmatpush.bf16.msra.mxu0 %v3123
    %3205 = vmatpush.bf16.msra.mxu0 %v3121
    %3206 = vmatpush.bf16.msra.mxu0 %v3119
    %3207 = vmatpush.bf16.msra.mxu0 %v3117
    %3208 = vmatpush.bf16.msra.mxu0 %v3115
    %3209 = vmatmul.bf16.gmra.mxu0 %v2962
    %v3210 = vpop.f32.mrf.mxu0
    %v3211 = vadd.f32 %v3198, %v3210
    %v3212 = vpop.f32.mrf.mxu0
    %3213 = vdwg.mxu0
    %v3214 = vadd.f32 %v3185, %v3211
    %3215 = vadd.xlane.f32.xlu0 %v3214
    %v3216 = vpop.xlane.xlu0 %3215
    %v3217 = vmul.f32 %v3216, %v2158
    %v3218 = vsub.f32 %v3185, %v3217
    %v3219 = vsub.f32 %v3211, %v3217
    %v3220 = vmul.f32 %v3218, %v3218
    %v3221 = vmul.f32 %v3219, %v3219
    %v3222 = vadd.f32 %v3220, %v3221
    %3223 = vadd.xlane.f32.xlu0 %v3222
    %v3224 = vpop.xlane.xlu0 %3223
    %v3225 = vmul.f32 %v3224, %v2158
    %v3226 = vadd.f32 %v3225, 1e-05
    %v3227 = vrsqrt.pop %v3226
    %v3228 = vmul.f32 %v3227, %v3226
    %v3229 = vmul.f32 %v3228, %v3227
    %v3230 = vmul.f32 0.5, %v3229
    %v3231 = vsub.f32 1.5, %v3230
    %v3232 = vmul.f32 %v3227, %v3231
    %vm3233 = vweird.f32 %v3226
    %vm3234 = vweird.f32 %v3227
    %vm3235 = vmor %vm3233, %vm3234
    %v3236 = vsel %vm3235, %v3227, %v3232
    %v3237 = vmul.f32 %v3218, %v3236
    %v3238 = vmul.f32 %v3219, %v3236
    %s3239 = scalar_lea.vmem [#allocation3], 65
    %v3240 = vld [vmem:[%s3239] ss:$8 sm:$0x3]
    %v3242 = vperm.slane %v3240, 0
    %v3243 = vperm.slane %v3240, 1
    %v3246 = vmul.f32 %v3237, %v3242
    %v3247 = vmul.f32 %v3238, %v3243
    %s3248 = scalar_lea.vmem [#allocation3], 66
    %v3249 = vld [vmem:[%s3248] ss:$8 sm:$0x3]
    %v3251 = vperm.slane %v3249, 0
    %v3252 = vperm.slane %v3249, 1
    %v3255 = vadd.f32 %v3246, %v3251
    %v3256 = vadd.f32 %v3247, %v3252
    %v3257 = vmul.f32 %v3255, 0.5
    %v3258 = vmul.f32 %v3256, 0.5
    %v3259 = vtanh.pop %v3257
    %v3260 = vtanh.pop %v3258
    %v3261 = vmul.f32 %v3259, 0.5
    %v3262 = vmul.f32 %v3260, 0.5
    %v3263 = vadd.f32 %v3261, 0.5
    %v3264 = vadd.f32 %v3262, 0.5
    %v3265 = vmul.f32 %v3255, %v3263
    %v3266 = vmul.f32 %v3256, %v3264
    %v3267 = vadd.f32 %v2959, %v3265
    %v3268 = vadd.f32 %v2960, %v3266
    %v3269 = vpack.c.bf16 %v3267, %v3267
    %v3270 = vpack.c.bf16 %v3268, %v3268
    %v3271 = vld [vmem:[#allocation16] sm:$0xff]
    %v3272 = vld [vmem:[#allocation16 + $0x8] sm:$0xff]
    %v3273 = vld [vmem:[#allocation16 + $0x10] sm:$0xff]
    %v3274 = vld [vmem:[#allocation16 + $0x18] sm:$0xff]
    %v3275 = vld [vmem:[#allocation16 + $0x20] sm:$0xff]
    %v3276 = vld [vmem:[#allocation16 + $0x28] sm:$0xff]
    %v3277 = vld [vmem:[#allocation16 + $0x30] sm:$0xff]
    %v3278 = vld [vmem:[#allocation16 + $0x38] sm:$0xff]
    %v3279 = vld [vmem:[#allocation16 + $0x40] sm:$0xff]
    %v3280 = vld [vmem:[#allocation16 + $0x48] sm:$0xff]
    %v3281 = vld [vmem:[#allocation16 + $0x50] sm:$0xff]
    %v3282 = vld [vmem:[#allocation16 + $0x58] sm:$0xff]
    %v3283 = vld [vmem:[#allocation16 + $0x60] sm:$0xff]
    %v3284 = vld [vmem:[#allocation16 + $0x68] sm:$0xff]
    %v3285 = vld [vmem:[#allocation16 + $0x70] sm:$0xff]
    %v3286 = vld [vmem:[#allocation16 + $0x78] sm:$0xff]
    %v3287 = vld [vmem:[#allocation16 + $0x80] sm:$0xff]
    %v3288 = vld [vmem:[#allocation16 + $0x88] sm:$0xff]
    %v3289 = vld [vmem:[#allocation16 + $0x90] sm:$0xff]
    %v3290 = vld [vmem:[#allocation16 + $0x98] sm:$0xff]
    %v3291 = vld [vmem:[#allocation16 + $0xa0] sm:$0xff]
    %v3292 = vld [vmem:[#allocation16 + $0xa8] sm:$0xff]
    %v3293 = vld [vmem:[#allocation16 + $0xb0] sm:$0xff]
    %v3294 = vld [vmem:[#allocation16 + $0xb8] sm:$0xff]
    %v3295 = vld [vmem:[#allocation16 + $0xc0] sm:$0xff]
    %v3296 = vld [vmem:[#allocation16 + $0xc8] sm:$0xff]
    %v3297 = vld [vmem:[#allocation16 + $0xd0] sm:$0xff]
    %v3298 = vld [vmem:[#allocation16 + $0xd8] sm:$0xff]
    %v3299 = vld [vmem:[#allocation16 + $0xe0] sm:$0xff]
    %v3300 = vld [vmem:[#allocation16 + $0xe8] sm:$0xff]
    %v3301 = vld [vmem:[#allocation16 + $0xf0] sm:$0xff]
    %v3302 = vld [vmem:[#allocation16 + $0xf8] sm:$0xff]
    %v3303 = vld [vmem:[#allocation16 + $0x100] sm:$0xff]
    %v3304 = vld [vmem:[#allocation16 + $0x108] sm:$0xff]
    %v3305 = vld [vmem:[#allocation16 + $0x110] sm:$0xff]
    %v3306 = vld [vmem:[#allocation16 + $0x118] sm:$0xff]
    %v3307 = vld [vmem:[#allocation16 + $0x120] sm:$0xff]
    %v3308 = vld [vmem:[#allocation16 + $0x128] sm:$0xff]
    %v3309 = vld [vmem:[#allocation16 + $0x130] sm:$0xff]
    %v3310 = vld [vmem:[#allocation16 + $0x138] sm:$0xff]
    %v3311 = vld [vmem:[#allocation16 + $0x140] sm:$0xff]
    %v3312 = vld [vmem:[#allocation16 + $0x148] sm:$0xff]
    %v3313 = vld [vmem:[#allocation16 + $0x150] sm:$0xff]
    %v3314 = vld [vmem:[#allocation16 + $0x158] sm:$0xff]
    %v3315 = vld [vmem:[#allocation16 + $0x160] sm:$0xff]
    %v3316 = vld [vmem:[#allocation16 + $0x168] sm:$0xff]
    %v3317 = vld [vmem:[#allocation16 + $0x170] sm:$0xff]
    %v3318 = vld [vmem:[#allocation16 + $0x178] sm:$0xff]
    %v3319 = vld [vmem:[#allocation16 + $0x180] sm:$0xff]
    %v3320 = vld [vmem:[#allocation16 + $0x188] sm:$0xff]
    %v3321 = vld [vmem:[#allocation16 + $0x190] sm:$0xff]
    %v3322 = vld [vmem:[#allocation16 + $0x198] sm:$0xff]
    %v3323 = vld [vmem:[#allocation16 + $0x1a0] sm:$0xff]
    %v3324 = vld [vmem:[#allocation16 + $0x1a8] sm:$0xff]
    %v3325 = vld [vmem:[#allocation16 + $0x1b0] sm:$0xff]
    %v3326 = vld [vmem:[#allocation16 + $0x1b8] sm:$0xff]
    %v3327 = vld [vmem:[#allocation16 + $0x1c0] sm:$0xff]
    %v3328 = vld [vmem:[#allocation16 + $0x1c8] sm:$0xff]
    %v3329 = vld [vmem:[#allocation16 + $0x1d0] sm:$0xff]
    %v3330 = vld [vmem:[#allocation16 + $0x1d8] sm:$0xff]
    %v3331 = vld [vmem:[#allocation16 + $0x1e0] sm:$0xff]
    %v3332 = vld [vmem:[#allocation16 + $0x1e8] sm:$0xff]
    %v3333 = vld [vmem:[#allocation16 + $0x1f0] sm:$0xff]
    %v3334 = vld [vmem:[#allocation16 + $0x1f8] sm:$0xff]
    %s3335 = scalar_lea.vmem [#allocation3], 67
    %v3336 = vld [vmem:[%s3335] ss:$8 sm:$0xf]
    %v3338 = vperm.slane %v3336, 0
    %v3339 = vperm.slane %v3336, 1
    %v3340 = vperm.slane %v3336, 2
    %v3341 = vperm.slane %v3336, 3
    %v3410 = vunpack.c.l.b16 %v3271
    %v3411 = vunpack.c.h.b16 %v3271
    %v3412 = vunpack.c.l.b16 %v3272
    %v3413 = vunpack.c.h.b16 %v3272
    %v3414 = vunpack.c.l.b16 %v3273
    %v3415 = vunpack.c.h.b16 %v3273
    %v3416 = vunpack.c.l.b16 %v3274
    %v3417 = vunpack.c.h.b16 %v3274
    %v3418 = vunpack.c.l.b16 %v3275
    %v3419 = vunpack.c.h.b16 %v3275
    %v3420 = vunpack.c.l.b16 %v3276
    %v3421 = vunpack.c.h.b16 %v3276
    %v3422 = vunpack.c.l.b16 %v3277
    %v3423 = vunpack.c.h.b16 %v3277
    %v3424 = vunpack.c.l.b16 %v3278
    %v3425 = vunpack.c.h.b16 %v3278
    %v3426 = vunpack.c.l.b16 %v3279
    %v3427 = vunpack.c.h.b16 %v3279
    %v3428 = vunpack.c.l.b16 %v3280
    %v3429 = vunpack.c.h.b16 %v3280
    %v3430 = vunpack.c.l.b16 %v3281
    %v3431 = vunpack.c.h.b16 %v3281
    %v3432 = vunpack.c.l.b16 %v3282
    %v3433 = vunpack.c.h.b16 %v3282
    %v3434 = vunpack.c.l.b16 %v3283
    %v3435 = vunpack.c.h.b16 %v3283
    %v3436 = vunpack.c.l.b16 %v3284
    %v3437 = vunpack.c.h.b16 %v3284
    %v3438 = vunpack.c.l.b16 %v3285
    %v3439 = vunpack.c.h.b16 %v3285
    %v3440 = vunpack.c.l.b16 %v3286
    %v3441 = vunpack.c.h.b16 %v3286
    %v3442 = vunpack.c.l.b16 %v3287
    %v3443 = vunpack.c.h.b16 %v3287
    %v3444 = vunpack.c.l.b16 %v3288
    %v3445 = vunpack.c.h.b16 %v3288
    %v3446 = vunpack.c.l.b16 %v3289
    %v3447 = vunpack.c.h.b16 %v3289
    %v3448 = vunpack.c.l.b16 %v3290
    %v3449 = vunpack.c.h.b16 %v3290
    %v3450 = vunpack.c.l.b16 %v3291
    %v3451 = vunpack.c.h.b16 %v3291
    %v3452 = vunpack.c.l.b16 %v3292
    %v3453 = vunpack.c.h.b16 %v3292
    %v3454 = vunpack.c.l.b16 %v3293
    %v3455 = vunpack.c.h.b16 %v3293
    %v3456 = vunpack.c.l.b16 %v3294
    %v3457 = vunpack.c.h.b16 %v3294
    %v3458 = vunpack.c.l.b16 %v3295
    %v3459 = vunpack.c.h.b16 %v3295
    %v3460 = vunpack.c.l.b16 %v3296
    %v3461 = vunpack.c.h.b16 %v3296
    %v3462 = vunpack.c.l.b16 %v3297
    %v3463 = vunpack.c.h.b16 %v3297
    %v3464 = vunpack.c.l.b16 %v3298
    %v3465 = vunpack.c.h.b16 %v3298
    %v3466 = vunpack.c.l.b16 %v3299
    %v3467 = vunpack.c.h.b16 %v3299
    %v3468 = vunpack.c.l.b16 %v3300
    %v3469 = vunpack.c.h.b16 %v3300
    %v3470 = vunpack.c.l.b16 %v3301
    %v3471 = vunpack.c.h.b16 %v3301
    %v3472 = vunpack.c.l.b16 %v3302
    %v3473 = vunpack.c.h.b16 %v3302
    %v3474 = vunpack.c.l.b16 %v3303
    %v3475 = vunpack.c.h.b16 %v3303
    %v3476 = vunpack.c.l.b16 %v3304
    %v3477 = vunpack.c.h.b16 %v3304
    %v3478 = vunpack.c.l.b16 %v3305
    %v3479 = vunpack.c.h.b16 %v3305
    %v3480 = vunpack.c.l.b16 %v3306
    %v3481 = vunpack.c.h.b16 %v3306
    %v3482 = vunpack.c.l.b16 %v3307
    %v3483 = vunpack.c.h.b16 %v3307
    %v3484 = vunpack.c.l.b16 %v3308
    %v3485 = vunpack.c.h.b16 %v3308
    %v3486 = vunpack.c.l.b16 %v3309
    %v3487 = vunpack.c.h.b16 %v3309
    %v3488 = vunpack.c.l.b16 %v3310
    %v3489 = vunpack.c.h.b16 %v3310
    %v3490 = vunpack.c.l.b16 %v3311
    %v3491 = vunpack.c.h.b16 %v3311
    %v3492 = vunpack.c.l.b16 %v3312
    %v3493 = vunpack.c.h.b16 %v3312
    %v3494 = vunpack.c.l.b16 %v3313
    %v3495 = vunpack.c.h.b16 %v3313
    %v3496 = vunpack.c.l.b16 %v3314
    %v3497 = vunpack.c.h.b16 %v3314
    %v3498 = vunpack.c.l.b16 %v3315
    %v3499 = vunpack.c.h.b16 %v3315
    %v3500 = vunpack.c.l.b16 %v3316
    %v3501 = vunpack.c.h.b16 %v3316
    %v3502 = vunpack.c.l.b16 %v3317
    %v3503 = vunpack.c.h.b16 %v3317
    %v3504 = vunpack.c.l.b16 %v3318
    %v3505 = vunpack.c.h.b16 %v3318
    %v3506 = vunpack.c.l.b16 %v3319
    %v3507 = vunpack.c.h.b16 %v3319
    %v3508 = vunpack.c.l.b16 %v3320
    %v3509 = vunpack.c.h.b16 %v3320
    %v3510 = vunpack.c.l.b16 %v3321
    %v3511 = vunpack.c.h.b16 %v3321
    %v3512 = vunpack.c.l.b16 %v3322
    %v3513 = vunpack.c.h.b16 %v3322
    %v3514 = vunpack.c.l.b16 %v3323
    %v3515 = vunpack.c.h.b16 %v3323
    %v3516 = vunpack.c.l.b16 %v3324
    %v3517 = vunpack.c.h.b16 %v3324
    %v3518 = vunpack.c.l.b16 %v3325
    %v3519 = vunpack.c.h.b16 %v3325
    %v3520 = vunpack.c.l.b16 %v3326
    %v3521 = vunpack.c.h.b16 %v3326
    %v3522 = vunpack.c.l.b16 %v3327
    %v3523 = vunpack.c.h.b16 %v3327
    %v3524 = vunpack.c.l.b16 %v3328
    %v3525 = vunpack.c.h.b16 %v3328
    %v3526 = vunpack.c.l.b16 %v3329
    %v3527 = vunpack.c.h.b16 %v3329
    %v3528 = vunpack.c.l.b16 %v3330
    %v3529 = vunpack.c.h.b16 %v3330
    %v3530 = vunpack.c.l.b16 %v3331
    %v3531 = vunpack.c.h.b16 %v3331
    %v3532 = vunpack.c.l.b16 %v3332
    %v3533 = vunpack.c.h.b16 %v3332
    %v3534 = vunpack.c.l.b16 %v3333
    %v3535 = vunpack.c.h.b16 %v3333
    %v3536 = vunpack.c.l.b16 %v3334
    %v3537 = vunpack.c.h.b16 %v3334
    %v3538 = vpack.c.b16 %v3414, %v3410
    %v3539 = vpack.c.b16 %v3415, %v3411
    %v3540 = vpack.c.b16 %v3416, %v3412
    %v3541 = vpack.c.b16 %v3417, %v3413
    %v3542 = vpack.c.b16 %v3422, %v3418
    %v3543 = vpack.c.b16 %v3423, %v3419
    %v3544 = vpack.c.b16 %v3424, %v3420
    %v3545 = vpack.c.b16 %v3425, %v3421
    %v3546 = vpack.c.b16 %v3430, %v3426
    %v3547 = vpack.c.b16 %v3431, %v3427
    %v3548 = vpack.c.b16 %v3432, %v3428
    %v3549 = vpack.c.b16 %v3433, %v3429
    %v3550 = vpack.c.b16 %v3438, %v3434
    %v3551 = vpack.c.b16 %v3439, %v3435
    %v3552 = vpack.c.b16 %v3440, %v3436
    %v3553 = vpack.c.b16 %v3441, %v3437
    %v3554 = vpack.c.b16 %v3446, %v3442
    %v3555 = vpack.c.b16 %v3447, %v3443
    %v3556 = vpack.c.b16 %v3448, %v3444
    %v3557 = vpack.c.b16 %v3449, %v3445
    %v3558 = vpack.c.b16 %v3454, %v3450
    %v3559 = vpack.c.b16 %v3455, %v3451
    %v3560 = vpack.c.b16 %v3456, %v3452
    %v3561 = vpack.c.b16 %v3457, %v3453
    %v3562 = vpack.c.b16 %v3462, %v3458
    %v3563 = vpack.c.b16 %v3463, %v3459
    %v3564 = vpack.c.b16 %v3464, %v3460
    %v3565 = vpack.c.b16 %v3465, %v3461
    %v3566 = vpack.c.b16 %v3470, %v3466
    %v3567 = vpack.c.b16 %v3471, %v3467
    %v3568 = vpack.c.b16 %v3472, %v3468
    %v3569 = vpack.c.b16 %v3473, %v3469
    %v3570 = vpack.c.b16 %v3478, %v3474
    %v3571 = vpack.c.b16 %v3479, %v3475
    %v3572 = vpack.c.b16 %v3480, %v3476
    %v3573 = vpack.c.b16 %v3481, %v3477
    %v3574 = vpack.c.b16 %v3486, %v3482
    %v3575 = vpack.c.b16 %v3487, %v3483
    %v3576 = vpack.c.b16 %v3488, %v3484
    %v3577 = vpack.c.b16 %v3489, %v3485
    %v3578 = vpack.c.b16 %v3494, %v3490
    %v3579 = vpack.c.b16 %v3495, %v3491
    %v3580 = vpack.c.b16 %v3496, %v3492
    %v3581 = vpack.c.b16 %v3497, %v3493
    %v3582 = vpack.c.b16 %v3502, %v3498
    %v3583 = vpack.c.b16 %v3503, %v3499
    %v3584 = vpack.c.b16 %v3504, %v3500
    %v3585 = vpack.c.b16 %v3505, %v3501
    %v3586 = vpack.c.b16 %v3510, %v3506
    %v3587 = vpack.c.b16 %v3511, %v3507
    %v3588 = vpack.c.b16 %v3512, %v3508
    %v3589 = vpack.c.b16 %v3513, %v3509
    %v3590 = vpack.c.b16 %v3518, %v3514
    %v3591 = vpack.c.b16 %v3519, %v3515
    %v3592 = vpack.c.b16 %v3520, %v3516
    %v3593 = vpack.c.b16 %v3521, %v3517
    %v3594 = vpack.c.b16 %v3526, %v3522
    %v3595 = vpack.c.b16 %v3527, %v3523
    %v3596 = vpack.c.b16 %v3528, %v3524
    %v3597 = vpack.c.b16 %v3529, %v3525
    %v3598 = vpack.c.b16 %v3534, %v3530
    %v3599 = vpack.c.b16 %v3535, %v3531
    %v3600 = vpack.c.b16 %v3536, %v3532
    %v3601 = vpack.c.b16 %v3537, %v3533
    %3666 = vmatpush.bf16.msra.mxu0 %v3566
    %3667 = vmatpush.bf16.msra.mxu0 %v3562
    %3668 = vmatpush.bf16.msra.mxu0 %v3558
    %3669 = vmatpush.bf16.msra.mxu0 %v3554
    %3670 = vmatpush.bf16.msra.mxu0 %v3550
    %3671 = vmatpush.bf16.msra.mxu0 %v3546
    %3672 = vmatpush.bf16.msra.mxu0 %v3542
    %3673 = vmatpush.bf16.msra.mxu0 %v3538
    %3674 = vmatmul.bf16.gmra.mxu0 %v3269
    %v3675 = vpop.f32.mrf.mxu0
    %v3676 = vadd.f32 %v3338, %v3675
    %v3677 = vpop.f32.mrf.mxu0
    %3678 = vdwg.mxu0
    %3679 = vmatpush.bf16.msra.mxu0 %v3598
    %3680 = vmatpush.bf16.msra.mxu0 %v3594
    %3681 = vmatpush.bf16.msra.mxu0 %v3590
    %3682 = vmatpush.bf16.msra.mxu0 %v3586
    %3683 = vmatpush.bf16.msra.mxu0 %v3582
    %3684 = vmatpush.bf16.msra.mxu0 %v3578
    %3685 = vmatpush.bf16.msra.mxu0 %v3574
    %3686 = vmatpush.bf16.msra.mxu0 %v3570
    %3687 = vmatmul.bf16.gmra.mxu0 %v3270
    %v3688 = vpop.f32.mrf.mxu0
    %v3689 = vadd.f32 %v3676, %v3688
    %v3690 = vpop.f32.mrf.mxu0
    %3691 = vdwg.mxu0
    %3692 = vmatpush.bf16.msra.mxu0 %v3567
    %3693 = vmatpush.bf16.msra.mxu0 %v3563
    %3694 = vmatpush.bf16.msra.mxu0 %v3559
    %3695 = vmatpush.bf16.msra.mxu0 %v3555
    %3696 = vmatpush.bf16.msra.mxu0 %v3551
    %3697 = vmatpush.bf16.msra.mxu0 %v3547
    %3698 = vmatpush.bf16.msra.mxu0 %v3543
    %3699 = vmatpush.bf16.msra.mxu0 %v3539
    %3700 = vmatmul.bf16.gmra.mxu0 %v3269
    %v3701 = vpop.f32.mrf.mxu0
    %v3702 = vadd.f32 %v3339, %v3701
    %v3703 = vpop.f32.mrf.mxu0
    %3704 = vdwg.mxu0
    %3705 = vmatpush.bf16.msra.mxu0 %v3599
    %3706 = vmatpush.bf16.msra.mxu0 %v3595
    %3707 = vmatpush.bf16.msra.mxu0 %v3591
    %3708 = vmatpush.bf16.msra.mxu0 %v3587
    %3709 = vmatpush.bf16.msra.mxu0 %v3583
    %3710 = vmatpush.bf16.msra.mxu0 %v3579
    %3711 = vmatpush.bf16.msra.mxu0 %v3575
    %3712 = vmatpush.bf16.msra.mxu0 %v3571
    %3713 = vmatmul.bf16.gmra.mxu0 %v3270
    %v3714 = vpop.f32.mrf.mxu0
    %v3715 = vadd.f32 %v3702, %v3714
    %v3716 = vpop.f32.mrf.mxu0
    %3717 = vdwg.mxu0
    %3718 = vmatpush.bf16.msra.mxu0 %v3568
    %3719 = vmatpush.bf16.msra.mxu0 %v3564
    %3720 = vmatpush.bf16.msra.mxu0 %v3560
    %3721 = vmatpush.bf16.msra.mxu0 %v3556
    %3722 = vmatpush.bf16.msra.mxu0 %v3552
    %3723 = vmatpush.bf16.msra.mxu0 %v3548
    %3724 = vmatpush.bf16.msra.mxu0 %v3544
    %3725 = vmatpush.bf16.msra.mxu0 %v3540
    %3726 = vmatmul.bf16.gmra.mxu0 %v3269
    %v3727 = vpop.f32.mrf.mxu0
    %v3728 = vadd.f32 %v3340, %v3727
    %v3729 = vpop.f32.mrf.mxu0
    %3730 = vdwg.mxu0
    %3731 = vmatpush.bf16.msra.mxu0 %v3600
    %3732 = vmatpush.bf16.msra.mxu0 %v3596
    %3733 = vmatpush.bf16.msra.mxu0 %v3592
    %3734 = vmatpush.bf16.msra.mxu0 %v3588
    %3735 = vmatpush.bf16.msra.mxu0 %v3584
    %3736 = vmatpush.bf16.msra.mxu0 %v3580
    %3737 = vmatpush.bf16.msra.mxu0 %v3576
    %3738 = vmatpush.bf16.msra.mxu0 %v3572
    %3739 = vmatmul.bf16.gmra.mxu0 %v3270
    %v3740 = vpop.f32.mrf.mxu0
    %v3741 = vadd.f32 %v3728, %v3740
    %v3742 = vpop.f32.mrf.mxu0
    %3743 = vdwg.mxu0
    %3744 = vmatpush.bf16.msra.mxu0 %v3569
    %3745 = vmatpush.bf16.msra.mxu0 %v3565
    %3746 = vmatpush.bf16.msra.mxu0 %v3561
    %3747 = vmatpush.bf16.msra.mxu0 %v3557
    %3748 = vmatpush.bf16.msra.mxu0 %v3553
    %3749 = vmatpush.bf16.msra.mxu0 %v3549
    %3750 = vmatpush.bf16.msra.mxu0 %v3545
    %3751 = vmatpush.bf16.msra.mxu0 %v3541
    %3752 = vmatmul.bf16.gmra.mxu0 %v3269
    %v3753 = vpop.f32.mrf.mxu0
    %v3754 = vadd.f32 %v3341, %v3753
    %v3755 = vpop.f32.mrf.mxu0
    %3756 = vdwg.mxu0
    %3757 = vmatpush.bf16.msra.mxu0 %v3601
    %3758 = vmatpush.bf16.msra.mxu0 %v3597
    %3759 = vmatpush.bf16.msra.mxu0 %v3593
    %3760 = vmatpush.bf16.msra.mxu0 %v3589
    %3761 = vmatpush.bf16.msra.mxu0 %v3585
    %3762 = vmatpush.bf16.msra.mxu0 %v3581
    %3763 = vmatpush.bf16.msra.mxu0 %v3577
    %3764 = vmatpush.bf16.msra.mxu0 %v3573
    %3765 = vmatmul.bf16.gmra.mxu0 %v3270
    %v3766 = vpop.f32.mrf.mxu0
    %v3767 = vadd.f32 %v3754, %v3766
    %v3768 = vpop.f32.mrf.mxu0
    %3769 = vdwg.mxu0
    %v3770 = vadd.f32 %v3689, %v3715
    %v3771 = vadd.f32 %v3770, %v3741
    %v3772 = vadd.f32 %v3771, %v3767
    %3773 = vadd.xlane.f32.xlu0 %v3772
    %v3774 = vpop.xlane.xlu0 %3773
    %v3775 = vmul.f32 %v3774, %v489
    %v3776 = vsub.f32 %v3689, %v3775
    %v3777 = vsub.f32 %v3715, %v3775
    %v3778 = vsub.f32 %v3741, %v3775
    %v3779 = vsub.f32 %v3767, %v3775
    %v3780 = vmul.f32 %v3776, %v3776
    %v3781 = vmul.f32 %v3777, %v3777
    %v3782 = vmul.f32 %v3778, %v3778
    %v3783 = vmul.f32 %v3779, %v3779
    %v3784 = vadd.f32 %v3780, %v3781
    %v3785 = vadd.f32 %v3784, %v3782
    %v3786 = vadd.f32 %v3785, %v3783
    %3787 = vadd.xlane.f32.xlu0 %v3786
    %v3788 = vpop.xlane.xlu0 %3787
    %v3789 = vmul.f32 %v3788, %v489
    %v3790 = vadd.f32 %v3789, 1e-05
    %v3791 = vrsqrt.pop %v3790
    %v3792 = vmul.f32 %v3791, %v3790
    %v3793 = vmul.f32 %v3792, %v3791
    %v3794 = vmul.f32 0.5, %v3793
    %v3795 = vsub.f32 1.5, %v3794
    %v3796 = vmul.f32 %v3791, %v3795
    %vm3797 = vweird.f32 %v3790
    %vm3798 = vweird.f32 %v3791
    %vm3799 = vmor %vm3797, %vm3798
    %v3800 = vsel %vm3799, %v3791, %v3796
    %v3801 = vmul.f32 %v3776, %v3800
    %v3802 = vmul.f32 %v3777, %v3800
    %v3803 = vmul.f32 %v3778, %v3800
    %v3804 = vmul.f32 %v3779, %v3800
    %s3805 = scalar_lea.vmem [#allocation3], 68
    %v3806 = vld [vmem:[%s3805] ss:$8 sm:$0xf]
    %v3808 = vperm.slane %v3806, 0
    %v3809 = vperm.slane %v3806, 1
    %v3810 = vperm.slane %v3806, 2
    %v3811 = vperm.slane %v3806, 3
    %v3816 = vmul.f32 %v3801, %v3808
    %v3817 = vmul.f32 %v3802, %v3809
    %v3818 = vmul.f32 %v3803, %v3810
    %v3819 = vmul.f32 %v3804, %v3811
    %s3820 = scalar_lea.vmem [#allocation3], 69
    %v3821 = vld [vmem:[%s3820] ss:$8 sm:$0xf]
    %v3823 = vperm.slane %v3821, 0
    %v3824 = vperm.slane %v3821, 1
    %v3825 = vperm.slane %v3821, 2
    %v3826 = vperm.slane %v3821, 3
    %v3831 = vadd.f32 %v3816, %v3823
    %v3832 = vadd.f32 %v3817, %v3824
    %v3833 = vadd.f32 %v3818, %v3825
    %v3834 = vadd.f32 %v3819, %v3826
    %v3835 = vmul.f32 %v3831, 0.5
    %v3836 = vmul.f32 %v3832, 0.5
    %v3837 = vmul.f32 %v3833, 0.5
    %v3838 = vmul.f32 %v3834, 0.5
    %v3839 = vtanh.pop %v3835
    %v3840 = vtanh.pop %v3836
    %v3841 = vtanh.pop %v3837
    %v3842 = vtanh.pop %v3838
    %v3843 = vmul.f32 %v3839, 0.5
    %v3844 = vmul.f32 %v3840, 0.5
    %v3845 = vmul.f32 %v3841, 0.5
    %v3846 = vmul.f32 %v3842, 0.5
    %v3847 = vadd.f32 %v3843, 0.5
    %v3848 = vadd.f32 %v3844, 0.5
    %v3849 = vadd.f32 %v3845, 0.5
    %v3850 = vadd.f32 %v3846, 0.5
    %v3851 = vmul.f32 %v3831, %v3847
    %v3852 = vmul.f32 %v3832, %v3848
    %v3853 = vmul.f32 %v3833, %v3849
    %v3854 = vmul.f32 %v3834, %v3850
    %v3855 = vpack.c.bf16 %v3851, %v3851
    %v3856 = vpack.c.bf16 %v3852, %v3852
    %v3857 = vpack.c.bf16 %v3853, %v3853
    %v3858 = vpack.c.bf16 %v3854, %v3854
    %v3859 = vld [vmem:[#allocation17] sm:$0xff]
    %v3860 = vld [vmem:[#allocation17 + $0x8] sm:$0xff]
    %v3861 = vld [vmem:[#allocation17 + $0x10] sm:$0xff]
    %v3862 = vld [vmem:[#allocation17 + $0x18] sm:$0xff]
    %v3863 = vld [vmem:[#allocation17 + $0x20] sm:$0xff]
    %v3864 = vld [vmem:[#allocation17 + $0x28] sm:$0xff]
    %v3865 = vld [vmem:[#allocation17 + $0x30] sm:$0xff]
    %v3866 = vld [vmem:[#allocation17 + $0x38] sm:$0xff]
    %v3867 = vld [vmem:[#allocation17 + $0x40] sm:$0xff]
    %v3868 = vld [vmem:[#allocation17 + $0x48] sm:$0xff]
    %v3869 = vld [vmem:[#allocation17 + $0x50] sm:$0xff]
    %v3870 = vld [vmem:[#allocation17 + $0x58] sm:$0xff]
    %v3871 = vld [vmem:[#allocation17 + $0x60] sm:$0xff]
    %v3872 = vld [vmem:[#allocation17 + $0x68] sm:$0xff]
    %v3873 = vld [vmem:[#allocation17 + $0x70] sm:$0xff]
    %v3874 = vld [vmem:[#allocation17 + $0x78] sm:$0xff]
    %v3875 = vld [vmem:[#allocation17 + $0x80] sm:$0xff]
    %v3876 = vld [vmem:[#allocation17 + $0x88] sm:$0xff]
    %v3877 = vld [vmem:[#allocation17 + $0x90] sm:$0xff]
    %v3878 = vld [vmem:[#allocation17 + $0x98] sm:$0xff]
    %v3879 = vld [vmem:[#allocation17 + $0xa0] sm:$0xff]
    %v3880 = vld [vmem:[#allocation17 + $0xa8] sm:$0xff]
    %v3881 = vld [vmem:[#allocation17 + $0xb0] sm:$0xff]
    %v3882 = vld [vmem:[#allocation17 + $0xb8] sm:$0xff]
    %v3883 = vld [vmem:[#allocation17 + $0xc0] sm:$0xff]
    %v3884 = vld [vmem:[#allocation17 + $0xc8] sm:$0xff]
    %v3885 = vld [vmem:[#allocation17 + $0xd0] sm:$0xff]
    %v3886 = vld [vmem:[#allocation17 + $0xd8] sm:$0xff]
    %v3887 = vld [vmem:[#allocation17 + $0xe0] sm:$0xff]
    %v3888 = vld [vmem:[#allocation17 + $0xe8] sm:$0xff]
    %v3889 = vld [vmem:[#allocation17 + $0xf0] sm:$0xff]
    %v3890 = vld [vmem:[#allocation17 + $0xf8] sm:$0xff]
    %v3891 = vld [vmem:[#allocation17 + $0x100] sm:$0xff]
    %v3892 = vld [vmem:[#allocation17 + $0x108] sm:$0xff]
    %v3893 = vld [vmem:[#allocation17 + $0x110] sm:$0xff]
    %v3894 = vld [vmem:[#allocation17 + $0x118] sm:$0xff]
    %v3895 = vld [vmem:[#allocation17 + $0x120] sm:$0xff]
    %v3896 = vld [vmem:[#allocation17 + $0x128] sm:$0xff]
    %v3897 = vld [vmem:[#allocation17 + $0x130] sm:$0xff]
    %v3898 = vld [vmem:[#allocation17 + $0x138] sm:$0xff]
    %v3899 = vld [vmem:[#allocation17 + $0x140] sm:$0xff]
    %v3900 = vld [vmem:[#allocation17 + $0x148] sm:$0xff]
    %v3901 = vld [vmem:[#allocation17 + $0x150] sm:$0xff]
    %v3902 = vld [vmem:[#allocation17 + $0x158] sm:$0xff]
    %v3903 = vld [vmem:[#allocation17 + $0x160] sm:$0xff]
    %v3904 = vld [vmem:[#allocation17 + $0x168] sm:$0xff]
    %v3905 = vld [vmem:[#allocation17 + $0x170] sm:$0xff]
    %v3906 = vld [vmem:[#allocation17 + $0x178] sm:$0xff]
    %v3907 = vld [vmem:[#allocation17 + $0x180] sm:$0xff]
    %v3908 = vld [vmem:[#allocation17 + $0x188] sm:$0xff]
    %v3909 = vld [vmem:[#allocation17 + $0x190] sm:$0xff]
    %v3910 = vld [vmem:[#allocation17 + $0x198] sm:$0xff]
    %v3911 = vld [vmem:[#allocation17 + $0x1a0] sm:$0xff]
    %v3912 = vld [vmem:[#allocation17 + $0x1a8] sm:$0xff]
    %v3913 = vld [vmem:[#allocation17 + $0x1b0] sm:$0xff]
    %v3914 = vld [vmem:[#allocation17 + $0x1b8] sm:$0xff]
    %v3915 = vld [vmem:[#allocation17 + $0x1c0] sm:$0xff]
    %v3916 = vld [vmem:[#allocation17 + $0x1c8] sm:$0xff]
    %v3917 = vld [vmem:[#allocation17 + $0x1d0] sm:$0xff]
    %v3918 = vld [vmem:[#allocation17 + $0x1d8] sm:$0xff]
    %v3919 = vld [vmem:[#allocation17 + $0x1e0] sm:$0xff]
    %v3920 = vld [vmem:[#allocation17 + $0x1e8] sm:$0xff]
    %v3921 = vld [vmem:[#allocation17 + $0x1f0] sm:$0xff]
    %v3922 = vld [vmem:[#allocation17 + $0x1f8] sm:$0xff]
    %v3923 = vld [vmem:[#allocation17 + $0x200] sm:$0xff]
    %v3924 = vld [vmem:[#allocation17 + $0x208] sm:$0xff]
    %v3925 = vld [vmem:[#allocation17 + $0x210] sm:$0xff]
    %v3926 = vld [vmem:[#allocation17 + $0x218] sm:$0xff]
    %v3927 = vld [vmem:[#allocation17 + $0x220] sm:$0xff]
    %v3928 = vld [vmem:[#allocation17 + $0x228] sm:$0xff]
    %v3929 = vld [vmem:[#allocation17 + $0x230] sm:$0xff]
    %v3930 = vld [vmem:[#allocation17 + $0x238] sm:$0xff]
    %v3931 = vld [vmem:[#allocation17 + $0x240] sm:$0xff]
    %v3932 = vld [vmem:[#allocation17 + $0x248] sm:$0xff]
    %v3933 = vld [vmem:[#allocation17 + $0x250] sm:$0xff]
    %v3934 = vld [vmem:[#allocation17 + $0x258] sm:$0xff]
    %v3935 = vld [vmem:[#allocation17 + $0x260] sm:$0xff]
    %v3936 = vld [vmem:[#allocation17 + $0x268] sm:$0xff]
    %v3937 = vld [vmem:[#allocation17 + $0x270] sm:$0xff]
    %v3938 = vld [vmem:[#allocation17 + $0x278] sm:$0xff]
    %v3939 = vld [vmem:[#allocation17 + $0x280] sm:$0xff]
    %v3940 = vld [vmem:[#allocation17 + $0x288] sm:$0xff]
    %v3941 = vld [vmem:[#allocation17 + $0x290] sm:$0xff]
    %v3942 = vld [vmem:[#allocation17 + $0x298] sm:$0xff]
    %v3943 = vld [vmem:[#allocation17 + $0x2a0] sm:$0xff]
    %v3944 = vld [vmem:[#allocation17 + $0x2a8] sm:$0xff]
    %v3945 = vld [vmem:[#allocation17 + $0x2b0] sm:$0xff]
    %v3946 = vld [vmem:[#allocation17 + $0x2b8] sm:$0xff]
    %v3947 = vld [vmem:[#allocation17 + $0x2c0] sm:$0xff]
    %v3948 = vld [vmem:[#allocation17 + $0x2c8] sm:$0xff]
    %v3949 = vld [vmem:[#allocation17 + $0x2d0] sm:$0xff]
    %v3950 = vld [vmem:[#allocation17 + $0x2d8] sm:$0xff]
    %v3951 = vld [vmem:[#allocation17 + $0x2e0] sm:$0xff]
    %v3952 = vld [vmem:[#allocation17 + $0x2e8] sm:$0xff]
    %v3953 = vld [vmem:[#allocation17 + $0x2f0] sm:$0xff]
    %v3954 = vld [vmem:[#allocation17 + $0x2f8] sm:$0xff]
    %v3955 = vld [vmem:[#allocation17 + $0x300] sm:$0xff]
    %v3956 = vld [vmem:[#allocation17 + $0x308] sm:$0xff]
    %v3957 = vld [vmem:[#allocation17 + $0x310] sm:$0xff]
    %v3958 = vld [vmem:[#allocation17 + $0x318] sm:$0xff]
    %v3959 = vld [vmem:[#allocation17 + $0x320] sm:$0xff]
    %v3960 = vld [vmem:[#allocation17 + $0x328] sm:$0xff]
    %v3961 = vld [vmem:[#allocation17 + $0x330] sm:$0xff]
    %v3962 = vld [vmem:[#allocation17 + $0x338] sm:$0xff]
    %v3963 = vld [vmem:[#allocation17 + $0x340] sm:$0xff]
    %v3964 = vld [vmem:[#allocation17 + $0x348] sm:$0xff]
    %v3965 = vld [vmem:[#allocation17 + $0x350] sm:$0xff]
    %v3966 = vld [vmem:[#allocation17 + $0x358] sm:$0xff]
    %v3967 = vld [vmem:[#allocation17 + $0x360] sm:$0xff]
    %v3968 = vld [vmem:[#allocation17 + $0x368] sm:$0xff]
    %v3969 = vld [vmem:[#allocation17 + $0x370] sm:$0xff]
    %v3970 = vld [vmem:[#allocation17 + $0x378] sm:$0xff]
    %v3971 = vld [vmem:[#allocation17 + $0x380] sm:$0xff]
    %v3972 = vld [vmem:[#allocation17 + $0x388] sm:$0xff]
    %v3973 = vld [vmem:[#allocation17 + $0x390] sm:$0xff]
    %v3974 = vld [vmem:[#allocation17 + $0x398] sm:$0xff]
    %v3975 = vld [vmem:[#allocation17 + $0x3a0] sm:$0xff]
    %v3976 = vld [vmem:[#allocation17 + $0x3a8] sm:$0xff]
    %v3977 = vld [vmem:[#allocation17 + $0x3b0] sm:$0xff]
    %v3978 = vld [vmem:[#allocation17 + $0x3b8] sm:$0xff]
    %v3979 = vld [vmem:[#allocation17 + $0x3c0] sm:$0xff]
    %v3980 = vld [vmem:[#allocation17 + $0x3c8] sm:$0xff]
    %v3981 = vld [vmem:[#allocation17 + $0x3d0] sm:$0xff]
    %v3982 = vld [vmem:[#allocation17 + $0x3d8] sm:$0xff]
    %v3983 = vld [vmem:[#allocation17 + $0x3e0] sm:$0xff]
    %v3984 = vld [vmem:[#allocation17 + $0x3e8] sm:$0xff]
    %v3985 = vld [vmem:[#allocation17 + $0x3f0] sm:$0xff]
    %v3986 = vld [vmem:[#allocation17 + $0x3f8] sm:$0xff]
    %s3987 = scalar_lea.vmem [#allocation3], 70
    %v3988 = vld [vmem:[%s3987] ss:$8 sm:$0xf]
    %v3990 = vperm.slane %v3988, 0
    %v3991 = vperm.slane %v3988, 1
    %v3992 = vperm.slane %v3988, 2
    %v3993 = vperm.slane %v3988, 3
    %v4126 = vunpack.c.l.b16 %v3859
    %v4127 = vunpack.c.h.b16 %v3859
    %v4128 = vunpack.c.l.b16 %v3860
    %v4129 = vunpack.c.h.b16 %v3860
    %v4130 = vunpack.c.l.b16 %v3861
    %v4131 = vunpack.c.h.b16 %v3861
    %v4132 = vunpack.c.l.b16 %v3862
    %v4133 = vunpack.c.h.b16 %v3862
    %v4134 = vunpack.c.l.b16 %v3863
    %v4135 = vunpack.c.h.b16 %v3863
    %v4136 = vunpack.c.l.b16 %v3864
    %v4137 = vunpack.c.h.b16 %v3864
    %v4138 = vunpack.c.l.b16 %v3865
    %v4139 = vunpack.c.h.b16 %v3865
    %v4140 = vunpack.c.l.b16 %v3866
    %v4141 = vunpack.c.h.b16 %v3866
    %v4142 = vunpack.c.l.b16 %v3867
    %v4143 = vunpack.c.h.b16 %v3867
    %v4144 = vunpack.c.l.b16 %v3868
    %v4145 = vunpack.c.h.b16 %v3868
    %v4146 = vunpack.c.l.b16 %v3869
    %v4147 = vunpack.c.h.b16 %v3869
    %v4148 = vunpack.c.l.b16 %v3870
    %v4149 = vunpack.c.h.b16 %v3870
    %v4150 = vunpack.c.l.b16 %v3871
    %v4151 = vunpack.c.h.b16 %v3871
    %v4152 = vunpack.c.l.b16 %v3872
    %v4153 = vunpack.c.h.b16 %v3872
    %v4154 = vunpack.c.l.b16 %v3873
    %v4155 = vunpack.c.h.b16 %v3873
    %v4156 = vunpack.c.l.b16 %v3874
    %v4157 = vunpack.c.h.b16 %v3874
    %v4158 = vunpack.c.l.b16 %v3875
    %v4159 = vunpack.c.h.b16 %v3875
    %v4160 = vunpack.c.l.b16 %v3876
    %v4161 = vunpack.c.h.b16 %v3876
    %v4162 = vunpack.c.l.b16 %v3877
    %v4163 = vunpack.c.h.b16 %v3877
    %v4164 = vunpack.c.l.b16 %v3878
    %v4165 = vunpack.c.h.b16 %v3878
    %v4166 = vunpack.c.l.b16 %v3879
    %v4167 = vunpack.c.h.b16 %v3879
    %v4168 = vunpack.c.l.b16 %v3880
    %v4169 = vunpack.c.h.b16 %v3880
    %v4170 = vunpack.c.l.b16 %v3881
    %v4171 = vunpack.c.h.b16 %v3881
    %v4172 = vunpack.c.l.b16 %v3882
    %v4173 = vunpack.c.h.b16 %v3882
    %v4174 = vunpack.c.l.b16 %v3883
    %v4175 = vunpack.c.h.b16 %v3883
    %v4176 = vunpack.c.l.b16 %v3884
    %v4177 = vunpack.c.h.b16 %v3884
    %v4178 = vunpack.c.l.b16 %v3885
    %v4179 = vunpack.c.h.b16 %v3885
    %v4180 = vunpack.c.l.b16 %v3886
    %v4181 = vunpack.c.h.b16 %v3886
    %v4182 = vunpack.c.l.b16 %v3887
    %v4183 = vunpack.c.h.b16 %v3887
    %v4184 = vunpack.c.l.b16 %v3888
    %v4185 = vunpack.c.h.b16 %v3888
    %v4186 = vunpack.c.l.b16 %v3889
    %v4187 = vunpack.c.h.b16 %v3889
    %v4188 = vunpack.c.l.b16 %v3890
    %v4189 = vunpack.c.h.b16 %v3890
    %v4190 = vunpack.c.l.b16 %v3891
    %v4191 = vunpack.c.h.b16 %v3891
    %v4192 = vunpack.c.l.b16 %v3892
    %v4193 = vunpack.c.h.b16 %v3892
    %v4194 = vunpack.c.l.b16 %v3893
    %v4195 = vunpack.c.h.b16 %v3893
    %v4196 = vunpack.c.l.b16 %v3894
    %v4197 = vunpack.c.h.b16 %v3894
    %v4198 = vunpack.c.l.b16 %v3895
    %v4199 = vunpack.c.h.b16 %v3895
    %v4200 = vunpack.c.l.b16 %v3896
    %v4201 = vunpack.c.h.b16 %v3896
    %v4202 = vunpack.c.l.b16 %v3897
    %v4203 = vunpack.c.h.b16 %v3897
    %v4204 = vunpack.c.l.b16 %v3898
    %v4205 = vunpack.c.h.b16 %v3898
    %v4206 = vunpack.c.l.b16 %v3899
    %v4207 = vunpack.c.h.b16 %v3899
    %v4208 = vunpack.c.l.b16 %v3900
    %v4209 = vunpack.c.h.b16 %v3900
    %v4210 = vunpack.c.l.b16 %v3901
    %v4211 = vunpack.c.h.b16 %v3901
    %v4212 = vunpack.c.l.b16 %v3902
    %v4213 = vunpack.c.h.b16 %v3902
    %v4214 = vunpack.c.l.b16 %v3903
    %v4215 = vunpack.c.h.b16 %v3903
    %v4216 = vunpack.c.l.b16 %v3904
    %v4217 = vunpack.c.h.b16 %v3904
    %v4218 = vunpack.c.l.b16 %v3905
    %v4219 = vunpack.c.h.b16 %v3905
    %v4220 = vunpack.c.l.b16 %v3906
    %v4221 = vunpack.c.h.b16 %v3906
    %v4222 = vunpack.c.l.b16 %v3907
    %v4223 = vunpack.c.h.b16 %v3907
    %v4224 = vunpack.c.l.b16 %v3908
    %v4225 = vunpack.c.h.b16 %v3908
    %v4226 = vunpack.c.l.b16 %v3909
    %v4227 = vunpack.c.h.b16 %v3909
    %v4228 = vunpack.c.l.b16 %v3910
    %v4229 = vunpack.c.h.b16 %v3910
    %v4230 = vunpack.c.l.b16 %v3911
    %v4231 = vunpack.c.h.b16 %v3911
    %v4232 = vunpack.c.l.b16 %v3912
    %v4233 = vunpack.c.h.b16 %v3912
    %v4234 = vunpack.c.l.b16 %v3913
    %v4235 = vunpack.c.h.b16 %v3913
    %v4236 = vunpack.c.l.b16 %v3914
    %v4237 = vunpack.c.h.b16 %v3914
    %v4238 = vunpack.c.l.b16 %v3915
    %v4239 = vunpack.c.h.b16 %v3915
    %v4240 = vunpack.c.l.b16 %v3916
    %v4241 = vunpack.c.h.b16 %v3916
    %v4242 = vunpack.c.l.b16 %v3917
    %v4243 = vunpack.c.h.b16 %v3917
    %v4244 = vunpack.c.l.b16 %v3918
    %v4245 = vunpack.c.h.b16 %v3918
    %v4246 = vunpack.c.l.b16 %v3919
    %v4247 = vunpack.c.h.b16 %v3919
    %v4248 = vunpack.c.l.b16 %v3920
    %v4249 = vunpack.c.h.b16 %v3920
    %v4250 = vunpack.c.l.b16 %v3921
    %v4251 = vunpack.c.h.b16 %v3921
    %v4252 = vunpack.c.l.b16 %v3922
    %v4253 = vunpack.c.h.b16 %v3922
    %v4254 = vunpack.c.l.b16 %v3923
    %v4255 = vunpack.c.h.b16 %v3923
    %v4256 = vunpack.c.l.b16 %v3924
    %v4257 = vunpack.c.h.b16 %v3924
    %v4258 = vunpack.c.l.b16 %v3925
    %v4259 = vunpack.c.h.b16 %v3925
    %v4260 = vunpack.c.l.b16 %v3926
    %v4261 = vunpack.c.h.b16 %v3926
    %v4262 = vunpack.c.l.b16 %v3927
    %v4263 = vunpack.c.h.b16 %v3927
    %v4264 = vunpack.c.l.b16 %v3928
    %v4265 = vunpack.c.h.b16 %v3928
    %v4266 = vunpack.c.l.b16 %v3929
    %v4267 = vunpack.c.h.b16 %v3929
    %v4268 = vunpack.c.l.b16 %v3930
    %v4269 = vunpack.c.h.b16 %v3930
    %v4270 = vunpack.c.l.b16 %v3931
    %v4271 = vunpack.c.h.b16 %v3931
    %v4272 = vunpack.c.l.b16 %v3932
    %v4273 = vunpack.c.h.b16 %v3932
    %v4274 = vunpack.c.l.b16 %v3933
    %v4275 = vunpack.c.h.b16 %v3933
    %v4276 = vunpack.c.l.b16 %v3934
    %v4277 = vunpack.c.h.b16 %v3934
    %v4278 = vunpack.c.l.b16 %v3935
    %v4279 = vunpack.c.h.b16 %v3935
    %v4280 = vunpack.c.l.b16 %v3936
    %v4281 = vunpack.c.h.b16 %v3936
    %v4282 = vunpack.c.l.b16 %v3937
    %v4283 = vunpack.c.h.b16 %v3937
    %v4284 = vunpack.c.l.b16 %v3938
    %v4285 = vunpack.c.h.b16 %v3938
    %v4286 = vunpack.c.l.b16 %v3939
    %v4287 = vunpack.c.h.b16 %v3939
    %v4288 = vunpack.c.l.b16 %v3940
    %v4289 = vunpack.c.h.b16 %v3940
    %v4290 = vunpack.c.l.b16 %v3941
    %v4291 = vunpack.c.h.b16 %v3941
    %v4292 = vunpack.c.l.b16 %v3942
    %v4293 = vunpack.c.h.b16 %v3942
    %v4294 = vunpack.c.l.b16 %v3943
    %v4295 = vunpack.c.h.b16 %v3943
    %v4296 = vunpack.c.l.b16 %v3944
    %v4297 = vunpack.c.h.b16 %v3944
    %v4298 = vunpack.c.l.b16 %v3945
    %v4299 = vunpack.c.h.b16 %v3945
    %v4300 = vunpack.c.l.b16 %v3946
    %v4301 = vunpack.c.h.b16 %v3946
    %v4302 = vunpack.c.l.b16 %v3947
    %v4303 = vunpack.c.h.b16 %v3947
    %v4304 = vunpack.c.l.b16 %v3948
    %v4305 = vunpack.c.h.b16 %v3948
    %v4306 = vunpack.c.l.b16 %v3949
    %v4307 = vunpack.c.h.b16 %v3949
    %v4308 = vunpack.c.l.b16 %v3950
    %v4309 = vunpack.c.h.b16 %v3950
    %v4310 = vunpack.c.l.b16 %v3951
    %v4311 = vunpack.c.h.b16 %v3951
    %v4312 = vunpack.c.l.b16 %v3952
    %v4313 = vunpack.c.h.b16 %v3952
    %v4314 = vunpack.c.l.b16 %v3953
    %v4315 = vunpack.c.h.b16 %v3953
    %v4316 = vunpack.c.l.b16 %v3954
    %v4317 = vunpack.c.h.b16 %v3954
    %v4318 = vunpack.c.l.b16 %v3955
    %v4319 = vunpack.c.h.b16 %v3955
    %v4320 = vunpack.c.l.b16 %v3956
    %v4321 = vunpack.c.h.b16 %v3956
    %v4322 = vunpack.c.l.b16 %v3957
    %v4323 = vunpack.c.h.b16 %v3957
    %v4324 = vunpack.c.l.b16 %v3958
    %v4325 = vunpack.c.h.b16 %v3958
    %v4326 = vunpack.c.l.b16 %v3959
    %v4327 = vunpack.c.h.b16 %v3959
    %v4328 = vunpack.c.l.b16 %v3960
    %v4329 = vunpack.c.h.b16 %v3960
    %v4330 = vunpack.c.l.b16 %v3961
    %v4331 = vunpack.c.h.b16 %v3961
    %v4332 = vunpack.c.l.b16 %v3962
    %v4333 = vunpack.c.h.b16 %v3962
    %v4334 = vunpack.c.l.b16 %v3963
    %v4335 = vunpack.c.h.b16 %v3963
    %v4336 = vunpack.c.l.b16 %v3964
    %v4337 = vunpack.c.h.b16 %v3964
    %v4338 = vunpack.c.l.b16 %v3965
    %v4339 = vunpack.c.h.b16 %v3965
    %v4340 = vunpack.c.l.b16 %v3966
    %v4341 = vunpack.c.h.b16 %v3966
    %v4342 = vunpack.c.l.b16 %v3967
    %v4343 = vunpack.c.h.b16 %v3967
    %v4344 = vunpack.c.l.b16 %v3968
    %v4345 = vunpack.c.h.b16 %v3968
    %v4346 = vunpack.c.l.b16 %v3969
    %v4347 = vunpack.c.h.b16 %v3969
    %v4348 = vunpack.c.l.b16 %v3970
    %v4349 = vunpack.c.h.b16 %v3970
    %v4350 = vunpack.c.l.b16 %v3971
    %v4351 = vunpack.c.h.b16 %v3971
    %v4352 = vunpack.c.l.b16 %v3972
    %v4353 = vunpack.c.h.b16 %v3972
    %v4354 = vunpack.c.l.b16 %v3973
    %v4355 = vunpack.c.h.b16 %v3973
    %v4356 = vunpack.c.l.b16 %v3974
    %v4357 = vunpack.c.h.b16 %v3974
    %v4358 = vunpack.c.l.b16 %v3975
    %v4359 = vunpack.c.h.b16 %v3975
    %v4360 = vunpack.c.l.b16 %v3976
    %v4361 = vunpack.c.h.b16 %v3976
    %v4362 = vunpack.c.l.b16 %v3977
    %v4363 = vunpack.c.h.b16 %v3977
    %v4364 = vunpack.c.l.b16 %v3978
    %v4365 = vunpack.c.h.b16 %v3978
    %v4366 = vunpack.c.l.b16 %v3979
    %v4367 = vunpack.c.h.b16 %v3979
    %v4368 = vunpack.c.l.b16 %v3980
    %v4369 = vunpack.c.h.b16 %v3980
    %v4370 = vunpack.c.l.b16 %v3981
    %v4371 = vunpack.c.h.b16 %v3981
    %v4372 = vunpack.c.l.b16 %v3982
    %v4373 = vunpack.c.h.b16 %v3982
    %v4374 = vunpack.c.l.b16 %v3983
    %v4375 = vunpack.c.h.b16 %v3983
    %v4376 = vunpack.c.l.b16 %v3984
    %v4377 = vunpack.c.h.b16 %v3984
    %v4378 = vunpack.c.l.b16 %v3985
    %v4379 = vunpack.c.h.b16 %v3985
    %v4380 = vunpack.c.l.b16 %v3986
    %v4381 = vunpack.c.h.b16 %v3986
    %v4382 = vpack.c.b16 %v4130, %v4126
    %v4383 = vpack.c.b16 %v4131, %v4127
    %v4384 = vpack.c.b16 %v4132, %v4128
    %v4385 = vpack.c.b16 %v4133, %v4129
    %v4386 = vpack.c.b16 %v4138, %v4134
    %v4387 = vpack.c.b16 %v4139, %v4135
    %v4388 = vpack.c.b16 %v4140, %v4136
    %v4389 = vpack.c.b16 %v4141, %v4137
    %v4390 = vpack.c.b16 %v4146, %v4142
    %v4391 = vpack.c.b16 %v4147, %v4143
    %v4392 = vpack.c.b16 %v4148, %v4144
    %v4393 = vpack.c.b16 %v4149, %v4145
    %v4394 = vpack.c.b16 %v4154, %v4150
    %v4395 = vpack.c.b16 %v4155, %v4151
    %v4396 = vpack.c.b16 %v4156, %v4152
    %v4397 = vpack.c.b16 %v4157, %v4153
    %v4398 = vpack.c.b16 %v4162, %v4158
    %v4399 = vpack.c.b16 %v4163, %v4159
    %v4400 = vpack.c.b16 %v4164, %v4160
    %v4401 = vpack.c.b16 %v4165, %v4161
    %v4402 = vpack.c.b16 %v4170, %v4166
    %v4403 = vpack.c.b16 %v4171, %v4167
    %v4404 = vpack.c.b16 %v4172, %v4168
    %v4405 = vpack.c.b16 %v4173, %v4169
    %v4406 = vpack.c.b16 %v4178, %v4174
    %v4407 = vpack.c.b16 %v4179, %v4175
    %v4408 = vpack.c.b16 %v4180, %v4176
    %v4409 = vpack.c.b16 %v4181, %v4177
    %v4410 = vpack.c.b16 %v4186, %v4182
    %v4411 = vpack.c.b16 %v4187, %v4183
    %v4412 = vpack.c.b16 %v4188, %v4184
    %v4413 = vpack.c.b16 %v4189, %v4185
    %v4414 = vpack.c.b16 %v4194, %v4190
    %v4415 = vpack.c.b16 %v4195, %v4191
    %v4416 = vpack.c.b16 %v4196, %v4192
    %v4417 = vpack.c.b16 %v4197, %v4193
    %v4418 = vpack.c.b16 %v4202, %v4198
    %v4419 = vpack.c.b16 %v4203, %v4199
    %v4420 = vpack.c.b16 %v4204, %v4200
    %v4421 = vpack.c.b16 %v4205, %v4201
    %v4422 = vpack.c.b16 %v4210, %v4206
    %v4423 = vpack.c.b16 %v4211, %v4207
    %v4424 = vpack.c.b16 %v4212, %v4208
    %v4425 = vpack.c.b16 %v4213, %v4209
    %v4426 = vpack.c.b16 %v4218, %v4214
    %v4427 = vpack.c.b16 %v4219, %v4215
    %v4428 = vpack.c.b16 %v4220, %v4216
    %v4429 = vpack.c.b16 %v4221, %v4217
    %v4430 = vpack.c.b16 %v4226, %v4222
    %v4431 = vpack.c.b16 %v4227, %v4223
    %v4432 = vpack.c.b16 %v4228, %v4224
    %v4433 = vpack.c.b16 %v4229, %v4225
    %v4434 = vpack.c.b16 %v4234, %v4230
    %v4435 = vpack.c.b16 %v4235, %v4231
    %v4436 = vpack.c.b16 %v4236, %v4232
    %v4437 = vpack.c.b16 %v4237, %v4233
    %v4438 = vpack.c.b16 %v4242, %v4238
    %v4439 = vpack.c.b16 %v4243, %v4239
    %v4440 = vpack.c.b16 %v4244, %v4240
    %v4441 = vpack.c.b16 %v4245, %v4241
    %v4442 = vpack.c.b16 %v4250, %v4246
    %v4443 = vpack.c.b16 %v4251, %v4247
    %v4444 = vpack.c.b16 %v4252, %v4248
    %v4445 = vpack.c.b16 %v4253, %v4249
    %v4446 = vpack.c.b16 %v4258, %v4254
    %v4447 = vpack.c.b16 %v4259, %v4255
    %v4448 = vpack.c.b16 %v4260, %v4256
    %v4449 = vpack.c.b16 %v4261, %v4257
    %v4450 = vpack.c.b16 %v4266, %v4262
    %v4451 = vpack.c.b16 %v4267, %v4263
    %v4452 = vpack.c.b16 %v4268, %v4264
    %v4453 = vpack.c.b16 %v4269, %v4265
    %v4454 = vpack.c.b16 %v4274, %v4270
    %v4455 = vpack.c.b16 %v4275, %v4271
    %v4456 = vpack.c.b16 %v4276, %v4272
    %v4457 = vpack.c.b16 %v4277, %v4273
    %v4458 = vpack.c.b16 %v4282, %v4278
    %v4459 = vpack.c.b16 %v4283, %v4279
    %v4460 = vpack.c.b16 %v4284, %v4280
    %v4461 = vpack.c.b16 %v4285, %v4281
    %v4462 = vpack.c.b16 %v4290, %v4286
    %v4463 = vpack.c.b16 %v4291, %v4287
    %v4464 = vpack.c.b16 %v4292, %v4288
    %v4465 = vpack.c.b16 %v4293, %v4289
    %v4466 = vpack.c.b16 %v4298, %v4294
    %v4467 = vpack.c.b16 %v4299, %v4295
    %v4468 = vpack.c.b16 %v4300, %v4296
    %v4469 = vpack.c.b16 %v4301, %v4297
    %v4470 = vpack.c.b16 %v4306, %v4302
    %v4471 = vpack.c.b16 %v4307, %v4303
    %v4472 = vpack.c.b16 %v4308, %v4304
    %v4473 = vpack.c.b16 %v4309, %v4305
    %v4474 = vpack.c.b16 %v4314, %v4310
    %v4475 = vpack.c.b16 %v4315, %v4311
    %v4476 = vpack.c.b16 %v4316, %v4312
    %v4477 = vpack.c.b16 %v4317, %v4313
    %v4478 = vpack.c.b16 %v4322, %v4318
    %v4479 = vpack.c.b16 %v4323, %v4319
    %v4480 = vpack.c.b16 %v4324, %v4320
    %v4481 = vpack.c.b16 %v4325, %v4321
    %v4482 = vpack.c.b16 %v4330, %v4326
    %v4483 = vpack.c.b16 %v4331, %v4327
    %v4484 = vpack.c.b16 %v4332, %v4328
    %v4485 = vpack.c.b16 %v4333, %v4329
    %v4486 = vpack.c.b16 %v4338, %v4334
    %v4487 = vpack.c.b16 %v4339, %v4335
    %v4488 = vpack.c.b16 %v4340, %v4336
    %v4489 = vpack.c.b16 %v4341, %v4337
    %v4490 = vpack.c.b16 %v4346, %v4342
    %v4491 = vpack.c.b16 %v4347, %v4343
    %v4492 = vpack.c.b16 %v4348, %v4344
    %v4493 = vpack.c.b16 %v4349, %v4345
    %v4494 = vpack.c.b16 %v4354, %v4350
    %v4495 = vpack.c.b16 %v4355, %v4351
    %v4496 = vpack.c.b16 %v4356, %v4352
    %v4497 = vpack.c.b16 %v4357, %v4353
    %v4498 = vpack.c.b16 %v4362, %v4358
    %v4499 = vpack.c.b16 %v4363, %v4359
    %v4500 = vpack.c.b16 %v4364, %v4360
    %v4501 = vpack.c.b16 %v4365, %v4361
    %v4502 = vpack.c.b16 %v4370, %v4366
    %v4503 = vpack.c.b16 %v4371, %v4367
    %v4504 = vpack.c.b16 %v4372, %v4368
    %v4505 = vpack.c.b16 %v4373, %v4369
    %v4506 = vpack.c.b16 %v4378, %v4374
    %v4507 = vpack.c.b16 %v4379, %v4375
    %v4508 = vpack.c.b16 %v4380, %v4376
    %v4509 = vpack.c.b16 %v4381, %v4377
    %4638 = vmatpush.bf16.msra.mxu0 %v4410
    %4639 = vmatpush.bf16.msra.mxu0 %v4406
    %4640 = vmatpush.bf16.msra.mxu0 %v4402
    %4641 = vmatpush.bf16.msra.mxu0 %v4398
    %4642 = vmatpush.bf16.msra.mxu0 %v4394
    %4643 = vmatpush.bf16.msra.mxu0 %v4390
    %4644 = vmatpush.bf16.msra.mxu0 %v4386
    %4645 = vmatpush.bf16.msra.mxu0 %v4382
    %4646 = vmatmul.bf16.gmra.mxu0 %v3855
    %v4647 = vpop.f32.mrf.mxu0
    %v4648 = vadd.f32 %v3990, %v4647
    %v4649 = vpop.f32.mrf.mxu0
    %4650 = vdwg.mxu0
    %4651 = vmatpush.bf16.msra.mxu0 %v4442
    %4652 = vmatpush.bf16.msra.mxu0 %v4438
    %4653 = vmatpush.bf16.msra.mxu0 %v4434
    %4654 = vmatpush.bf16.msra.mxu0 %v4430
    %4655 = vmatpush.bf16.msra.mxu0 %v4426
    %4656 = vmatpush.bf16.msra.mxu0 %v4422
    %4657 = vmatpush.bf16.msra.mxu0 %v4418
    %4658 = vmatpush.bf16.msra.mxu0 %v4414
    %4659 = vmatmul.bf16.gmra.mxu0 %v3856
    %v4660 = vpop.f32.mrf.mxu0
    %v4661 = vadd.f32 %v4648, %v4660
    %v4662 = vpop.f32.mrf.mxu0
    %4663 = vdwg.mxu0
    %4664 = vmatpush.bf16.msra.mxu0 %v4474
    %4665 = vmatpush.bf16.msra.mxu0 %v4470
    %4666 = vmatpush.bf16.msra.mxu0 %v4466
    %4667 = vmatpush.bf16.msra.mxu0 %v4462
    %4668 = vmatpush.bf16.msra.mxu0 %v4458
    %4669 = vmatpush.bf16.msra.mxu0 %v4454
    %4670 = vmatpush.bf16.msra.mxu0 %v4450
    %4671 = vmatpush.bf16.msra.mxu0 %v4446
    %4672 = vmatmul.bf16.gmra.mxu0 %v3857
    %v4673 = vpop.f32.mrf.mxu0
    %v4674 = vadd.f32 %v4661, %v4673
    %v4675 = vpop.f32.mrf.mxu0
    %4676 = vdwg.mxu0
    %4677 = vmatpush.bf16.msra.mxu0 %v4506
    %4678 = vmatpush.bf16.msra.mxu0 %v4502
    %4679 = vmatpush.bf16.msra.mxu0 %v4498
    %4680 = vmatpush.bf16.msra.mxu0 %v4494
    %4681 = vmatpush.bf16.msra.mxu0 %v4490
    %4682 = vmatpush.bf16.msra.mxu0 %v4486
    %4683 = vmatpush.bf16.msra.mxu0 %v4482
    %4684 = vmatpush.bf16.msra.mxu0 %v4478
    %4685 = vmatmul.bf16.gmra.mxu0 %v3858
    %v4686 = vpop.f32.mrf.mxu0
    %v4687 = vadd.f32 %v4674, %v4686
    %v4688 = vpop.f32.mrf.mxu0
    %4689 = vdwg.mxu0
    %4690 = vmatpush.bf16.msra.mxu0 %v4411
    %4691 = vmatpush.bf16.msra.mxu0 %v4407
    %4692 = vmatpush.bf16.msra.mxu0 %v4403
    %4693 = vmatpush.bf16.msra.mxu0 %v4399
    %4694 = vmatpush.bf16.msra.mxu0 %v4395
    %4695 = vmatpush.bf16.msra.mxu0 %v4391
    %4696 = vmatpush.bf16.msra.mxu0 %v4387
    %4697 = vmatpush.bf16.msra.mxu0 %v4383
    %4698 = vmatmul.bf16.gmra.mxu0 %v3855
    %v4699 = vpop.f32.mrf.mxu0
    %v4700 = vadd.f32 %v3991, %v4699
    %v4701 = vpop.f32.mrf.mxu0
    %4702 = vdwg.mxu0
    %4703 = vmatpush.bf16.msra.mxu0 %v4443
    %4704 = vmatpush.bf16.msra.mxu0 %v4439
    %4705 = vmatpush.bf16.msra.mxu0 %v4435
    %4706 = vmatpush.bf16.msra.mxu0 %v4431
    %4707 = vmatpush.bf16.msra.mxu0 %v4427
    %4708 = vmatpush.bf16.msra.mxu0 %v4423
    %4709 = vmatpush.bf16.msra.mxu0 %v4419
    %4710 = vmatpush.bf16.msra.mxu0 %v4415
    %4711 = vmatmul.bf16.gmra.mxu0 %v3856
    %v4712 = vpop.f32.mrf.mxu0
    %v4713 = vadd.f32 %v4700, %v4712
    %v4714 = vpop.f32.mrf.mxu0
    %4715 = vdwg.mxu0
    %4716 = vmatpush.bf16.msra.mxu0 %v4475
    %4717 = vmatpush.bf16.msra.mxu0 %v4471
    %4718 = vmatpush.bf16.msra.mxu0 %v4467
    %4719 = vmatpush.bf16.msra.mxu0 %v4463
    %4720 = vmatpush.bf16.msra.mxu0 %v4459
    %4721 = vmatpush.bf16.msra.mxu0 %v4455
    %4722 = vmatpush.bf16.msra.mxu0 %v4451
    %4723 = vmatpush.bf16.msra.mxu0 %v4447
    %4724 = vmatmul.bf16.gmra.mxu0 %v3857
    %v4725 = vpop.f32.mrf.mxu0
    %v4726 = vadd.f32 %v4713, %v4725
    %v4727 = vpop.f32.mrf.mxu0
    %4728 = vdwg.mxu0
    %4729 = vmatpush.bf16.msra.mxu0 %v4507
    %4730 = vmatpush.bf16.msra.mxu0 %v4503
    %4731 = vmatpush.bf16.msra.mxu0 %v4499
    %4732 = vmatpush.bf16.msra.mxu0 %v4495
    %4733 = vmatpush.bf16.msra.mxu0 %v4491
    %4734 = vmatpush.bf16.msra.mxu0 %v4487
    %4735 = vmatpush.bf16.msra.mxu0 %v4483
    %4736 = vmatpush.bf16.msra.mxu0 %v4479
    %4737 = vmatmul.bf16.gmra.mxu0 %v3858
    %v4738 = vpop.f32.mrf.mxu0
    %v4739 = vadd.f32 %v4726, %v4738
    %v4740 = vpop.f32.mrf.mxu0
    %4741 = vdwg.mxu0
    %4742 = vmatpush.bf16.msra.mxu0 %v4412
    %4743 = vmatpush.bf16.msra.mxu0 %v4408
    %4744 = vmatpush.bf16.msra.mxu0 %v4404
    %4745 = vmatpush.bf16.msra.mxu0 %v4400
    %4746 = vmatpush.bf16.msra.mxu0 %v4396
    %4747 = vmatpush.bf16.msra.mxu0 %v4392
    %4748 = vmatpush.bf16.msra.mxu0 %v4388
    %4749 = vmatpush.bf16.msra.mxu0 %v4384
    %4750 = vmatmul.bf16.gmra.mxu0 %v3855
    %v4751 = vpop.f32.mrf.mxu0
    %v4752 = vadd.f32 %v3992, %v4751
    %v4753 = vpop.f32.mrf.mxu0
    %4754 = vdwg.mxu0
    %4755 = vmatpush.bf16.msra.mxu0 %v4444
    %4756 = vmatpush.bf16.msra.mxu0 %v4440
    %4757 = vmatpush.bf16.msra.mxu0 %v4436
    %4758 = vmatpush.bf16.msra.mxu0 %v4432
    %4759 = vmatpush.bf16.msra.mxu0 %v4428
    %4760 = vmatpush.bf16.msra.mxu0 %v4424
    %4761 = vmatpush.bf16.msra.mxu0 %v4420
    %4762 = vmatpush.bf16.msra.mxu0 %v4416
    %4763 = vmatmul.bf16.gmra.mxu0 %v3856
    %v4764 = vpop.f32.mrf.mxu0
    %v4765 = vadd.f32 %v4752, %v4764
    %v4766 = vpop.f32.mrf.mxu0
    %4767 = vdwg.mxu0
    %4768 = vmatpush.bf16.msra.mxu0 %v4476
    %4769 = vmatpush.bf16.msra.mxu0 %v4472
    %4770 = vmatpush.bf16.msra.mxu0 %v4468
    %4771 = vmatpush.bf16.msra.mxu0 %v4464
    %4772 = vmatpush.bf16.msra.mxu0 %v4460
    %4773 = vmatpush.bf16.msra.mxu0 %v4456
    %4774 = vmatpush.bf16.msra.mxu0 %v4452
    %4775 = vmatpush.bf16.msra.mxu0 %v4448
    %4776 = vmatmul.bf16.gmra.mxu0 %v3857
    %v4777 = vpop.f32.mrf.mxu0
    %v4778 = vadd.f32 %v4765, %v4777
    %v4779 = vpop.f32.mrf.mxu0
    %4780 = vdwg.mxu0
    %4781 = vmatpush.bf16.msra.mxu0 %v4508
    %4782 = vmatpush.bf16.msra.mxu0 %v4504
    %4783 = vmatpush.bf16.msra.mxu0 %v4500
    %4784 = vmatpush.bf16.msra.mxu0 %v4496
    %4785 = vmatpush.bf16.msra.mxu0 %v4492
    %4786 = vmatpush.bf16.msra.mxu0 %v4488
    %4787 = vmatpush.bf16.msra.mxu0 %v4484
    %4788 = vmatpush.bf16.msra.mxu0 %v4480
    %4789 = vmatmul.bf16.gmra.mxu0 %v3858
    %v4790 = vpop.f32.mrf.mxu0
    %v4791 = vadd.f32 %v4778, %v4790
    %v4792 = vpop.f32.mrf.mxu0
    %4793 = vdwg.mxu0
    %4794 = vmatpush.bf16.msra.mxu0 %v4413
    %4795 = vmatpush.bf16.msra.mxu0 %v4409
    %4796 = vmatpush.bf16.msra.mxu0 %v4405
    %4797 = vmatpush.bf16.msra.mxu0 %v4401
    %4798 = vmatpush.bf16.msra.mxu0 %v4397
    %4799 = vmatpush.bf16.msra.mxu0 %v4393
    %4800 = vmatpush.bf16.msra.mxu0 %v4389
    %4801 = vmatpush.bf16.msra.mxu0 %v4385
    %4802 = vmatmul.bf16.gmra.mxu0 %v3855
    %v4803 = vpop.f32.mrf.mxu0
    %v4804 = vadd.f32 %v3993, %v4803
    %v4805 = vpop.f32.mrf.mxu0
    %4806 = vdwg.mxu0
    %4807 = vmatpush.bf16.msra.mxu0 %v4445
    %4808 = vmatpush.bf16.msra.mxu0 %v4441
    %4809 = vmatpush.bf16.msra.mxu0 %v4437
    %4810 = vmatpush.bf16.msra.mxu0 %v4433
    %4811 = vmatpush.bf16.msra.mxu0 %v4429
    %4812 = vmatpush.bf16.msra.mxu0 %v4425
    %4813 = vmatpush.bf16.msra.mxu0 %v4421
    %4814 = vmatpush.bf16.msra.mxu0 %v4417
    %4815 = vmatmul.bf16.gmra.mxu0 %v3856
    %v4816 = vpop.f32.mrf.mxu0
    %v4817 = vadd.f32 %v4804, %v4816
    %v4818 = vpop.f32.mrf.mxu0
    %4819 = vdwg.mxu0
    %4820 = vmatpush.bf16.msra.mxu0 %v4477
    %4821 = vmatpush.bf16.msra.mxu0 %v4473
    %4822 = vmatpush.bf16.msra.mxu0 %v4469
    %4823 = vmatpush.bf16.msra.mxu0 %v4465
    %4824 = vmatpush.bf16.msra.mxu0 %v4461
    %4825 = vmatpush.bf16.msra.mxu0 %v4457
    %4826 = vmatpush.bf16.msra.mxu0 %v4453
    %4827 = vmatpush.bf16.msra.mxu0 %v4449
    %4828 = vmatmul.bf16.gmra.mxu0 %v3857
    %v4829 = vpop.f32.mrf.mxu0
    %v4830 = vadd.f32 %v4817, %v4829
    %v4831 = vpop.f32.mrf.mxu0
    %4832 = vdwg.mxu0
    %4833 = vmatpush.bf16.msra.mxu0 %v4509
    %4834 = vmatpush.bf16.msra.mxu0 %v4505
    %4835 = vmatpush.bf16.msra.mxu0 %v4501
    %4836 = vmatpush.bf16.msra.mxu0 %v4497
    %4837 = vmatpush.bf16.msra.mxu0 %v4493
    %4838 = vmatpush.bf16.msra.mxu0 %v4489
    %4839 = vmatpush.bf16.msra.mxu0 %v4485
    %4840 = vmatpush.bf16.msra.mxu0 %v4481
    %4841 = vmatmul.bf16.gmra.mxu0 %v3858
    %v4842 = vpop.f32.mrf.mxu0
    %v4843 = vadd.f32 %v4830, %v4842
    %v4844 = vpop.f32.mrf.mxu0
    %4845 = vdwg.mxu0
    %v4846 = vadd.f32 %v4687, %v4739
    %v4847 = vadd.f32 %v4846, %v4791
    %v4848 = vadd.f32 %v4847, %v4843
    %4849 = vadd.xlane.f32.xlu0 %v4848
    %v4850 = vpop.xlane.xlu0 %4849
    %v4851 = vmul.f32 %v4850, %v489
    %v4852 = vsub.f32 %v4687, %v4851
    %v4853 = vsub.f32 %v4739, %v4851
    %v4854 = vsub.f32 %v4791, %v4851
    %v4855 = vsub.f32 %v4843, %v4851
    %v4856 = vmul.f32 %v4852, %v4852
    %v4857 = vmul.f32 %v4853, %v4853
    %v4858 = vmul.f32 %v4854, %v4854
    %v4859 = vmul.f32 %v4855, %v4855
    %v4860 = vadd.f32 %v4856, %v4857
    %v4861 = vadd.f32 %v4860, %v4858
    %v4862 = vadd.f32 %v4861, %v4859
    %4863 = vadd.xlane.f32.xlu0 %v4862
    %v4864 = vpop.xlane.xlu0 %4863
    %v4865 = vmul.f32 %v4864, %v489
    %v4866 = vadd.f32 %v4865, 1e-05
    %v4867 = vrsqrt.pop %v4866
    %v4868 = vmul.f32 %v4867, %v4866
    %v4869 = vmul.f32 %v4868, %v4867
    %v4870 = vmul.f32 0.5, %v4869
    %v4871 = vsub.f32 1.5, %v4870
    %v4872 = vmul.f32 %v4867, %v4871
    %vm4873 = vweird.f32 %v4866
    %vm4874 = vweird.f32 %v4867
    %vm4875 = vmor %vm4873, %vm4874
    %v4876 = vsel %vm4875, %v4867, %v4872
    %v4877 = vmul.f32 %v4852, %v4876
    %v4878 = vmul.f32 %v4853, %v4876
    %v4879 = vmul.f32 %v4854, %v4876
    %v4880 = vmul.f32 %v4855, %v4876
    %s4881 = scalar_lea.vmem [#allocation3], 71
    %v4882 = vld [vmem:[%s4881] ss:$8 sm:$0xf]
    %v4884 = vperm.slane %v4882, 0
    %v4885 = vperm.slane %v4882, 1
    %v4886 = vperm.slane %v4882, 2
    %v4887 = vperm.slane %v4882, 3
    %v4892 = vmul.f32 %v4877, %v4884
    %v4893 = vmul.f32 %v4878, %v4885
    %v4894 = vmul.f32 %v4879, %v4886
    %v4895 = vmul.f32 %v4880, %v4887
    %s4896 = scalar_lea.vmem [#allocation3], 96
    %v4897 = vld [vmem:[%s4896] ss:$8 sm:$0xf]
    %v4899 = vperm.slane %v4897, 0
    %v4900 = vperm.slane %v4897, 1
    %v4901 = vperm.slane %v4897, 2
    %v4902 = vperm.slane %v4897, 3
    %v4907 = vadd.f32 %v4892, %v4899
    %v4908 = vadd.f32 %v4893, %v4900
    %v4909 = vadd.f32 %v4894, %v4901
    %v4910 = vadd.f32 %v4895, %v4902
    %v4911 = vmul.f32 %v4907, 0.5
    %v4912 = vmul.f32 %v4908, 0.5
    %v4913 = vmul.f32 %v4909, 0.5
    %v4914 = vmul.f32 %v4910, 0.5
    %v4915 = vtanh.pop %v4911
    %v4916 = vtanh.pop %v4912
    %v4917 = vtanh.pop %v4913
    %v4918 = vtanh.pop %v4914
    %v4919 = vmul.f32 %v4915, 0.5
    %v4920 = vmul.f32 %v4916, 0.5
    %v4921 = vmul.f32 %v4917, 0.5
    %v4922 = vmul.f32 %v4918, 0.5
    %v4923 = vadd.f32 %v4919, 0.5
    %v4924 = vadd.f32 %v4920, 0.5
    %v4925 = vadd.f32 %v4921, 0.5
    %v4926 = vadd.f32 %v4922, 0.5
    %v4927 = vmul.f32 %v4907, %v4923
    %v4928 = vmul.f32 %v4908, %v4924
    %v4929 = vmul.f32 %v4909, %v4925
    %v4930 = vmul.f32 %v4910, %v4926
    %v4931 = vadd.f32 %v3851, %v4927
    %v4932 = vadd.f32 %v3852, %v4928
    %v4933 = vadd.f32 %v3853, %v4929
    %v4934 = vadd.f32 %v3854, %v4930
    %v4935 = vpack.c.bf16 %v4931, %v4931
    %v4936 = vpack.c.bf16 %v4932, %v4932
    %v4937 = vpack.c.bf16 %v4933, %v4933
    %v4938 = vpack.c.bf16 %v4934, %v4934
    %v4939 = vld [vmem:[#allocation19] sm:$0xf]
    %v4940 = vld [vmem:[#allocation19 + $0x4] sm:$0xf]
    %v4941 = vld [vmem:[#allocation19 + $0x8] sm:$0xf]
    %v4942 = vld [vmem:[#allocation19 + $0xc] sm:$0xf]
    %v4943 = vld [vmem:[#allocation19 + $0x10] sm:$0xf]
    %v4944 = vld [vmem:[#allocation19 + $0x14] sm:$0xf]
    %v4945 = vld [vmem:[#allocation19 + $0x18] sm:$0xf]
    %v4946 = vld [vmem:[#allocation19 + $0x1c] sm:$0xf]
    %v4947 = vld [vmem:[#allocation19 + $0x20] sm:$0xf]
    %v4948 = vld [vmem:[#allocation19 + $0x24] sm:$0xf]
    %v4949 = vld [vmem:[#allocation19 + $0x28] sm:$0xf]
    %v4950 = vld [vmem:[#allocation19 + $0x2c] sm:$0xf]
    %v4951 = vld [vmem:[#allocation19 + $0x30] sm:$0xf]
    %v4952 = vld [vmem:[#allocation19 + $0x34] sm:$0xf]
    %v4953 = vld [vmem:[#allocation19 + $0x38] sm:$0xf]
    %v4954 = vld [vmem:[#allocation19 + $0x3c] sm:$0xf]
    %v4955 = vld [vmem:[#allocation19 + $0x40] sm:$0xf]
    %v4956 = vld [vmem:[#allocation19 + $0x44] sm:$0xf]
    %v4957 = vld [vmem:[#allocation19 + $0x48] sm:$0xf]
    %v4958 = vld [vmem:[#allocation19 + $0x4c] sm:$0xf]
    %v4959 = vld [vmem:[#allocation19 + $0x50] sm:$0xf]
    %v4960 = vld [vmem:[#allocation19 + $0x54] sm:$0xf]
    %v4961 = vld [vmem:[#allocation19 + $0x58] sm:$0xf]
    %v4962 = vld [vmem:[#allocation19 + $0x5c] sm:$0xf]
    %v4963 = vld [vmem:[#allocation19 + $0x60] sm:$0xf]
    %v4964 = vld [vmem:[#allocation19 + $0x64] sm:$0xf]
    %v4965 = vld [vmem:[#allocation19 + $0x68] sm:$0xf]
    %v4966 = vld [vmem:[#allocation19 + $0x6c] sm:$0xf]
    %v4967 = vld [vmem:[#allocation19 + $0x70] sm:$0xf]
    %v4968 = vld [vmem:[#allocation19 + $0x74] sm:$0xf]
    %v4969 = vld [vmem:[#allocation19 + $0x78] sm:$0xf]
    %v4970 = vld [vmem:[#allocation19 + $0x7c] sm:$0xf]
    %v4971 = vld [vmem:[#allocation19 + $0x80] sm:$0xf]
    %v4972 = vld [vmem:[#allocation19 + $0x84] sm:$0xf]
    %v4973 = vld [vmem:[#allocation19 + $0x88] sm:$0xf]
    %v4974 = vld [vmem:[#allocation19 + $0x8c] sm:$0xf]
    %v4975 = vld [vmem:[#allocation19 + $0x90] sm:$0xf]
    %v4976 = vld [vmem:[#allocation19 + $0x94] sm:$0xf]
    %v4977 = vld [vmem:[#allocation19 + $0x98] sm:$0xf]
    %v4978 = vld [vmem:[#allocation19 + $0x9c] sm:$0xf]
    %v4979 = vld [vmem:[#allocation19 + $0xa0] sm:$0xf]
    %v4980 = vld [vmem:[#allocation19 + $0xa4] sm:$0xf]
    %v4981 = vld [vmem:[#allocation19 + $0xa8] sm:$0xf]
    %v4982 = vld [vmem:[#allocation19 + $0xac] sm:$0xf]
    %v4983 = vld [vmem:[#allocation19 + $0xb0] sm:$0xf]
    %v4984 = vld [vmem:[#allocation19 + $0xb4] sm:$0xf]
    %v4985 = vld [vmem:[#allocation19 + $0xb8] sm:$0xf]
    %v4986 = vld [vmem:[#allocation19 + $0xbc] sm:$0xf]
    %v4987 = vld [vmem:[#allocation19 + $0xc0] sm:$0xf]
    %v4988 = vld [vmem:[#allocation19 + $0xc4] sm:$0xf]
    %v4989 = vld [vmem:[#allocation19 + $0xc8] sm:$0xf]
    %v4990 = vld [vmem:[#allocation19 + $0xcc] sm:$0xf]
    %v4991 = vld [vmem:[#allocation19 + $0xd0] sm:$0xf]
    %v4992 = vld [vmem:[#allocation19 + $0xd4] sm:$0xf]
    %v4993 = vld [vmem:[#allocation19 + $0xd8] sm:$0xf]
    %v4994 = vld [vmem:[#allocation19 + $0xdc] sm:$0xf]
    %v4995 = vld [vmem:[#allocation19 + $0xe0] sm:$0xf]
    %v4996 = vld [vmem:[#allocation19 + $0xe4] sm:$0xf]
    %v4997 = vld [vmem:[#allocation19 + $0xe8] sm:$0xf]
    %v4998 = vld [vmem:[#allocation19 + $0xec] sm:$0xf]
    %v4999 = vld [vmem:[#allocation19 + $0xf0] sm:$0xf]
    %v5000 = vld [vmem:[#allocation19 + $0xf4] sm:$0xf]
    %v5001 = vld [vmem:[#allocation19 + $0xf8] sm:$0xf]
    %v5002 = vld [vmem:[#allocation19 + $0xfc] sm:$0xf]
    %v5003 = vld [vmem:[#allocation3 + $0x61] ss:$0 sm:$0xff]
    %v5068 = vunpack.c.l.b16 %v4939
    %v5069 = vunpack.c.l.b16 %v4940
    %v5070 = vunpack.c.l.b16 %v4941
    %v5071 = vunpack.c.l.b16 %v4942
    %v5072 = vunpack.c.l.b16 %v4943
    %v5073 = vunpack.c.l.b16 %v4944
    %v5074 = vunpack.c.l.b16 %v4945
    %v5075 = vunpack.c.l.b16 %v4946
    %v5076 = vunpack.c.l.b16 %v4947
    %v5077 = vunpack.c.l.b16 %v4948
    %v5078 = vunpack.c.l.b16 %v4949
    %v5079 = vunpack.c.l.b16 %v4950
    %v5080 = vunpack.c.l.b16 %v4951
    %v5081 = vunpack.c.l.b16 %v4952
    %v5082 = vunpack.c.l.b16 %v4953
    %v5083 = vunpack.c.l.b16 %v4954
    %v5084 = vunpack.c.l.b16 %v4955
    %v5085 = vunpack.c.l.b16 %v4956
    %v5086 = vunpack.c.l.b16 %v4957
    %v5087 = vunpack.c.l.b16 %v4958
    %v5088 = vunpack.c.l.b16 %v4959
    %v5089 = vunpack.c.l.b16 %v4960
    %v5090 = vunpack.c.l.b16 %v4961
    %v5091 = vunpack.c.l.b16 %v4962
    %v5092 = vunpack.c.l.b16 %v4963
    %v5093 = vunpack.c.l.b16 %v4964
    %v5094 = vunpack.c.l.b16 %v4965
    %v5095 = vunpack.c.l.b16 %v4966
    %v5096 = vunpack.c.l.b16 %v4967
    %v5097 = vunpack.c.l.b16 %v4968
    %v5098 = vunpack.c.l.b16 %v4969
    %v5099 = vunpack.c.l.b16 %v4970
    %v5100 = vunpack.c.l.b16 %v4971
    %v5101 = vunpack.c.l.b16 %v4972
    %v5102 = vunpack.c.l.b16 %v4973
    %v5103 = vunpack.c.l.b16 %v4974
    %v5104 = vunpack.c.l.b16 %v4975
    %v5105 = vunpack.c.l.b16 %v4976
    %v5106 = vunpack.c.l.b16 %v4977
    %v5107 = vunpack.c.l.b16 %v4978
    %v5108 = vunpack.c.l.b16 %v4979
    %v5109 = vunpack.c.l.b16 %v4980
    %v5110 = vunpack.c.l.b16 %v4981
    %v5111 = vunpack.c.l.b16 %v4982
    %v5112 = vunpack.c.l.b16 %v4983
    %v5113 = vunpack.c.l.b16 %v4984
    %v5114 = vunpack.c.l.b16 %v4985
    %v5115 = vunpack.c.l.b16 %v4986
    %v5116 = vunpack.c.l.b16 %v4987
    %v5117 = vunpack.c.l.b16 %v4988
    %v5118 = vunpack.c.l.b16 %v4989
    %v5119 = vunpack.c.l.b16 %v4990
    %v5120 = vunpack.c.l.b16 %v4991
    %v5121 = vunpack.c.l.b16 %v4992
    %v5122 = vunpack.c.l.b16 %v4993
    %v5123 = vunpack.c.l.b16 %v4994
    %v5124 = vunpack.c.l.b16 %v4995
    %v5125 = vunpack.c.l.b16 %v4996
    %v5126 = vunpack.c.l.b16 %v4997
    %v5127 = vunpack.c.l.b16 %v4998
    %v5128 = vunpack.c.l.b16 %v4999
    %v5129 = vunpack.c.l.b16 %v5000
    %v5130 = vunpack.c.l.b16 %v5001
    %v5131 = vunpack.c.l.b16 %v5002
    %v5132 = vpack.c.b16 %v5069, %v5068
    %v5133 = vpack.c.b16 %v5071, %v5070
    %v5134 = vpack.c.b16 %v5073, %v5072
    %v5135 = vpack.c.b16 %v5075, %v5074
    %v5136 = vpack.c.b16 %v5077, %v5076
    %v5137 = vpack.c.b16 %v5079, %v5078
    %v5138 = vpack.c.b16 %v5081, %v5080
    %v5139 = vpack.c.b16 %v5083, %v5082
    %v5140 = vpack.c.b16 %v5085, %v5084
    %v5141 = vpack.c.b16 %v5087, %v5086
    %v5142 = vpack.c.b16 %v5089, %v5088
    %v5143 = vpack.c.b16 %v5091, %v5090
    %v5144 = vpack.c.b16 %v5093, %v5092
    %v5145 = vpack.c.b16 %v5095, %v5094
    %v5146 = vpack.c.b16 %v5097, %v5096
    %v5147 = vpack.c.b16 %v5099, %v5098
    %v5148 = vpack.c.b16 %v5101, %v5100
    %v5149 = vpack.c.b16 %v5103, %v5102
    %v5150 = vpack.c.b16 %v5105, %v5104
    %v5151 = vpack.c.b16 %v5107, %v5106
    %v5152 = vpack.c.b16 %v5109, %v5108
    %v5153 = vpack.c.b16 %v5111, %v5110
    %v5154 = vpack.c.b16 %v5113, %v5112
    %v5155 = vpack.c.b16 %v5115, %v5114
    %v5156 = vpack.c.b16 %v5117, %v5116
    %v5157 = vpack.c.b16 %v5119, %v5118
    %v5158 = vpack.c.b16 %v5121, %v5120
    %v5159 = vpack.c.b16 %v5123, %v5122
    %v5160 = vpack.c.b16 %v5125, %v5124
    %v5161 = vpack.c.b16 %v5127, %v5126
    %v5162 = vpack.c.b16 %v5129, %v5128
    %v5163 = vpack.c.b16 %v5131, %v5130
    %5196 = vmatpush.bf16.msra.mxu0 %v5139
    %5197 = vmatpush.bf16.msra.mxu0 %v5138
    %5198 = vmatpush.bf16.msra.mxu0 %v5137
    %5199 = vmatpush.bf16.msra.mxu0 %v5136
    %5200 = vmatpush.bf16.msra.mxu0 %v5135
    %5201 = vmatpush.bf16.msra.mxu0 %v5134
    %5202 = vmatpush.bf16.msra.mxu0 %v5133
    %5203 = vmatpush.bf16.msra.mxu0 %v5132
    %5204 = vmatmul.bf16.gmra.mxu0 %v4935
    %v5205 = vpop.f32.mrf.mxu0
    %v5206 = vadd.f32 %v5003, %v5205
    %v5207 = vpop.f32.mrf.mxu0
    %5208 = vdwg.mxu0
    %5209 = vmatpush.bf16.msra.mxu0 %v5147
    %5210 = vmatpush.bf16.msra.mxu0 %v5146
    %5211 = vmatpush.bf16.msra.mxu0 %v5145
    %5212 = vmatpush.bf16.msra.mxu0 %v5144
    %5213 = vmatpush.bf16.msra.mxu0 %v5143
    %5214 = vmatpush.bf16.msra.mxu0 %v5142
    %5215 = vmatpush.bf16.msra.mxu0 %v5141
    %5216 = vmatpush.bf16.msra.mxu0 %v5140
    %5217 = vmatmul.bf16.gmra.mxu0 %v4936
    %v5218 = vpop.f32.mrf.mxu0
    %v5219 = vadd.f32 %v5206, %v5218
    %v5220 = vpop.f32.mrf.mxu0
    %5221 = vdwg.mxu0
    %5222 = vmatpush.bf16.msra.mxu0 %v5155
    %5223 = vmatpush.bf16.msra.mxu0 %v5154
    %5224 = vmatpush.bf16.msra.mxu0 %v5153
    %5225 = vmatpush.bf16.msra.mxu0 %v5152
    %5226 = vmatpush.bf16.msra.mxu0 %v5151
    %5227 = vmatpush.bf16.msra.mxu0 %v5150
    %5228 = vmatpush.bf16.msra.mxu0 %v5149
    %5229 = vmatpush.bf16.msra.mxu0 %v5148
    %5230 = vmatmul.bf16.gmra.mxu0 %v4937
    %v5231 = vpop.f32.mrf.mxu0
    %v5232 = vadd.f32 %v5219, %v5231
    %v5233 = vpop.f32.mrf.mxu0
    %5234 = vdwg.mxu0
    %5235 = vmatpush.bf16.msra.mxu0 %v5163
    %5236 = vmatpush.bf16.msra.mxu0 %v5162
    %5237 = vmatpush.bf16.msra.mxu0 %v5161
    %5238 = vmatpush.bf16.msra.mxu0 %v5160
    %5239 = vmatpush.bf16.msra.mxu0 %v5159
    %5240 = vmatpush.bf16.msra.mxu0 %v5158
    %5241 = vmatpush.bf16.msra.mxu0 %v5157
    %5242 = vmatpush.bf16.msra.mxu0 %v5156
    %5243 = vmatmul.bf16.gmra.mxu0 %v4938
    %v5244 = vpop.f32.mrf.mxu0
    %v5245 = vadd.f32 %v5232, %v5244
    %v5246 = vpop.f32.mrf.mxu0
    %5247 = vdwg.mxu0
    %v5248 = vmul.f32 %v5245, 0.5
    %v5249 = vtanh.pop %v5248
    %v5250 = vmul.f32 %v5249, 0.5
    %v5251 = vadd.f32 %v5250, 0.5
    %5252 = vst [vmem:[%s14] sm:$0xff] %v5251
    %5253 = vst [vmem:[%s15] sm:$0xff] %v2741
    %5254 = vst [vmem:[%s15 + $0x8] sm:$0xff] %v2767
    // Predicated region
    $region102: #{vae_forward.1} parent=1 // pred_check
      _
    $region103: #{vae_forward.1} parent=1 // pred_check_branch
      %5256 = sbr.rel (0) target = $region105
    $region104: #{vae_forward.1} parent=1 // pred_region
      _
    $region105: #{vae_forward.1} parent=1 // pred_fallthru
      _
    // Predicated region
    $region106: #{vae_forward.1} parent=1 // pred_check
      _
    $region107: #{vae_forward.1} parent=1 // pred_check_branch
      %5258 = sbr.rel (0) target = $region109
    $region108: #{vae_forward.1} parent=1 // pred_region
      _
    $region109: #{vae_forward.1} parent=1 // pred_fallthru
      _
    // Predicated region
    $region110: #{vae_forward.1} parent=1 // pred_check
      _
    $region111: #{vae_forward.1} parent=1 // pred_check_branch
      %5260 = sbr.rel (0) target = $region113
    $region112: #{vae_forward.1} parent=1 // pred_region
      _
    $region113: #{vae_forward.1} parent=1 // pred_fallthru
      _
    // Predicated region
    $region114: #{vae_forward.1} parent=1 // pred_check
      _
    $region115: #{vae_forward.1} parent=1 // pred_check_branch
      %5262 = sbr.rel (0) target = $region117
    $region116: #{vae_forward.1} parent=1 // pred_region
      _
    $region117: #{vae_forward.1} parent=1 // pred_fallthru
      _
    %5263 = vsyncpa [#allocation4], 1
    %5264 = vsyncpa [#allocation6], 1
    %5265 = vsyncpa [#allocation9], 1
    %5266 = vsyncpa [#allocation12], 1
    %5267 = vsyncpa [#allocation15], 1
    %5268 = vsyncpa [#allocation18], 1

</llo_original>
